<compile_context>
chip_gen: v5e
topology: v5e:2x2
jax: 0.10.0
libtpu: 0.0.40
codegen_flags: <defaults>
</compile_context>

<pallas_src>
import jax
import jax.numpy as jnp
from jax import lax
from jax.experimental import pallas as pl
from jax.experimental.pallas import tpu as pltpu

_LANE = 128
_EPS = 1e-5


def _round_up(x, m):
    return ((x + m - 1) // m) * m


def _pick_vmem_limit():
    """Generation-aware scoped-VMEM limit (leave headroom on 64 MiB v7x parts)."""
    cap = None
    try:
        cap = getattr(pltpu.get_tpu_info(), "vmem_capacity_bytes", None)
    except Exception:
        cap = None
    if cap is not None and cap > 96 * 1024 * 1024:
        return 64 * 1024 * 1024       # 128 MiB parts (v5e / v6e)
    return 40 * 1024 * 1024           # 64 MiB parts (v7x) or unknown


_VMEM_LIMIT = _pick_vmem_limit()


# --------------------------------------------------------------------------- kernels


def _conv_stats_body(x_ref, w_ref, scale_ref, shift_ref, y_ref, sum_ref, ssq_ref):
    """One image: optional fused (BN + ReLU) prologue on the input, 3x3 valid conv as a
    SINGLE bf16 matmul (taps folded into K = 9*Cin), bf16 output tile, and f32 per-channel
    sum / sum-of-squares accumulated across the inner ('arbitrary') grid axis."""
    j = pl.program_id(1)
    _, h, w, cin = x_ref.shape
    ho, wo = h - 2, w - 2

    x = x_ref[0]                                            # (H, W, Cin)
    if scale_ref is not None:
        # Previous layer's BatchNorm + ReLU, folded into a single FMA + max (f32 math).
        sc = scale_ref[...].reshape(1, 1, cin)
        sh = shift_ref[...].reshape(1, 1, cin)
        x = jnp.maximum(x.astype(jnp.float32) * sc + sh, jnp.float32(0.0))

    # Cast to bf16 exactly once.  For lane-aligned channels cast the activation tile up
    # front; for tiny lane-sparse Cin (conv1) do the single cast on the assembled patch.
    if cin % _LANE == 0:
        x = x.astype(jnp.bfloat16)

    taps = [x[ky:ky + ho, kx:kx + wo, :] for ky in range(3) for kx in range(3)]
    patch = jnp.concatenate(taps, axis=-1).reshape(ho * wo, 9 * cin)
    patch = patch.astype(jnp.bfloat16)

    # One MXU matmul with K = 9*Cin (f32 accumulation) — no per-tap VALU accumulation.
    y = jnp.dot(patch, w_ref[...], preferred_element_type=jnp.float32)

    y_ref[0] = y.astype(y_ref.dtype)                        # lane-dense bf16 intermediate

    @pl.when(j == 0)
    def _():
        sum_ref[...] = jnp.zeros_like(sum_ref)
        ssq_ref[...] = jnp.zeros_like(ssq_ref)

    sum_ref[0] += jnp.sum(y, axis=0, keepdims=True)
    ssq_ref[0] += jnp.sum(y * y, axis=0, keepdims=True)


def _make_conv_stats_kernel(with_prologue):
    if with_prologue:
        def kernel(x_ref, w_ref, scale_ref, shift_ref, y_ref, sum_ref, ssq_ref):
            _conv_stats_body(x_ref, w_ref, scale_ref, shift_ref, y_ref, sum_ref, ssq_ref)
    else:
        def kernel(x_ref, w_ref, y_ref, sum_ref, ssq_ref):
            _conv_stats_body(x_ref, w_ref, None, None, y_ref, sum_ref, ssq_ref)
    return kernel


def _affine_relu_kernel(y_ref, scale_ref, shift_ref, o_ref):
    """Fused BatchNorm (pre-folded scale/shift) + ReLU + channel de-pad on one image."""
    out_ch = o_ref.shape[-1]
    y = y_ref[0].astype(jnp.float32)
    r = jnp.maximum(y * scale_ref[...] + shift_ref[...], jnp.float32(0.0))
    o_ref[0] = r[:, :out_ch]


# --------------------------------------------------------------------- pallas_call wrappers


def _conv_stats_call(x_nhwc, w_k, scale=None, shift=None):
    """Conv (+ optional input BN/ReLU prologue) + per-channel sum / sumsq partials."""
    n, h, w, cin = x_nhwc.shape
    kdim, coutp = w_k.shape
    ho, wo = h - 2, w - 2

    # Leading "parallel" axis (2-way when possible): on v7x each TensorCore takes half the
    # batch and accumulates its own partial-stats row; the rows are reduced in the wrapper.
    g = 2 if (n >= 2 and n % 2 == 0) else 1
    npc = n // g

    with_prologue = scale is not None
    kernel = _make_conv_stats_kernel(with_prologue)

    in_specs = [
        pl.BlockSpec((1, h, w, cin), lambda i, j: (i * npc + j, 0, 0, 0)),   # per-image tile
        pl.BlockSpec((kdim, coutp), lambda i, j: (0, 0)),                    # VMEM-resident W
    ]
    args = [x_nhwc, w_k]
    if with_prologue:
        in_specs += [pl.BlockSpec((1, cin), lambda i, j: (0, 0)),
                     pl.BlockSpec((1, cin), lambda i, j: (0, 0))]
        args += [scale, shift]

    return pl.pallas_call(
        kernel,
        out_shape=(jax.ShapeDtypeStruct((n, ho * wo, coutp), jnp.bfloat16),  # bf16 intermediate
                   jax.ShapeDtypeStruct((g, 1, coutp), jnp.float32),         # partial sums
                   jax.ShapeDtypeStruct((g, 1, coutp), jnp.float32)),        # partial sumsq
        grid=(g, npc),
        in_specs=in_specs,
        out_specs=(pl.BlockSpec((1, ho * wo, coutp), lambda i, j: (i * npc + j, 0, 0)),
                   pl.BlockSpec((1, 1, coutp), lambda i, j: (i, 0, 0)),      # resident per i
                   pl.BlockSpec((1, 1, coutp), lambda i, j: (i, 0, 0))),     # resident per i
        compiler_params=pltpu.CompilerParams(
            dimension_semantics=("parallel", "arbitrary"),   # stats accumulate over j only
            vmem_limit_bytes=_VMEM_LIMIT),
    )(*args)


def _affine_relu_call(y2, scale, shift, out_ch):
    n, m, coutp = y2.shape
    return pl.pallas_call(
        _affine_relu_kernel,
        out_shape=jax.ShapeDtypeStruct((n, m, out_ch), jnp.float32),
        grid=(n,),
        in_specs=[pl.BlockSpec((1, m, coutp), lambda i: (i, 0, 0)),
                  pl.BlockSpec((1, coutp), lambda i: (0, 0)),
                  pl.BlockSpec((1, coutp), lambda i: (0, 0))],
        out_specs=pl.BlockSpec((1, m, out_ch), lambda i: (i, 0, 0)),
        compiler_params=pltpu.CompilerParams(
            dimension_semantics=("parallel",),               # pure elementwise
            vmem_limit_bytes=_VMEM_LIMIT),
    )(y2, scale, shift)


# --------------------------------------------------------------------------- forward


def _prep_weight(w_oihw, cin_k, cout_p):
    """(Cout, Cin, 3, 3) torch layout -> (9*cin_k, cout_p) bf16, taps folded into K."""
    cout, cin, _, _ = w_oihw.shape
    wk = jnp.transpose(w_oihw, (2, 3, 1, 0)).astype(jnp.float32)        # (3,3,Cin,Cout)
    wk = jnp.pad(wk, ((0, 0), (0, 0), (0, cin_k - cin), (0, cout_p - cout)))
    return wk.reshape(9 * cin_k, cout_p).astype(jnp.bfloat16)


def _pad_vec(v, cpad):
    return jnp.pad(v.astype(jnp.float32), (0, cpad - v.shape[0])).reshape(1, cpad)


def _bn_scale_shift(ch_sum, ch_ssq, count, gamma_p, beta_p):
    """Fold batch statistics (E[y], E[y^2]) + gamma/beta into per-channel scale/shift."""
    mean = ch_sum / count
    var = jnp.maximum(ch_ssq / count - mean * mean, 0.0)    # biased batch var, guarded
    # TODO(synk): use a shifted/Welford variance if tighter parity with PyTorch is needed.
    scale = gamma_p * lax.rsqrt(var + jnp.float32(_EPS))
    shift = beta_p - mean * scale
    return scale, shift


def double_conv_forward(x_nchw, params):
    """DoubleConv forward: x (N, Cin, H, W) -> (N, Cout, H-4, W-4)."""
    # Conv biases cancel exactly under training-mode BatchNorm -> dropped from fused path.
    (w1, _b1, g1, be1), (w2, _b2, g2, be2) = params

    n, in_ch, h, wd = x_nchw.shape
    mid, out_ch = w1.shape[0], w2.shape[0]
    midp, outp = _round_up(mid, _LANE), _round_up(out_ch, _LANE)

    x = jnp.transpose(x_nchw, (0, 2, 3, 1)).astype(jnp.float32)         # NCHW -> NHWC

    w1k = _prep_weight(w1, in_ch, midp)          # (9*in_ch, midp)
    w2k = _prep_weight(w2, midp, outp)           # (9*midp,  outp)
    g1p, be1p = _pad_vec(g1, midp), _pad_vec(be1, midp)
    g2p, be2p = _pad_vec(g2, outp), _pad_vec(be2, outp)

    # Pass 1: conv1 + BN1 batch statistics (pre-norm y1 kept in HBM as bf16).
    ho1, wo1 = h - 2, wd - 2
    y1, s1, q1 = _conv_stats_call(x, w1k)
    s1, q1 = jnp.sum(s1, axis=0), jnp.sum(q1, axis=0)                   # reduce core partials
    scale1, shift1 = _bn_scale_shift(s1, q1, jnp.float32(n * ho1 * wo1), g1p, be1p)

    # Pass 2: BN1 + ReLU fused as conv2's prologue, plus BN2 batch statistics.
    ho2, wo2 = ho1 - 2, wo1 - 2
    y2, s2, q2 = _conv_stats_call(y1.reshape(n, ho1, wo1, midp), w2k, scale1, shift1)
    s2, q2 = jnp.sum(s2, axis=0), jnp.sum(q2, axis=0)
    scale2, shift2 = _bn_scale_shift(s2, q2, jnp.float32(n * ho2 * wo2), g2p, be2p)

    # Pass 3: BN2 + ReLU + channel de-pad, per-image lane-dense tiles.
    o = _affine_relu_call(y2, scale2, shift2, out_ch)                   # (n, ho2*wo2, out_ch)
    o = o.reshape(n, ho2, wo2, out_ch)
    return jnp.transpose(o, (0, 3, 1, 2))                               # NHWC -> NCHW


# ------------------------------------------------------------------- params & reference


def init_params(key, in_ch, out_ch, mid_ch=None):
    if not mid_ch:
        mid_ch = out_ch
    k = jax.random.split(key, 8)
    w1 = 0.1 * jax.random.normal(k[0], (mid_ch, in_ch, 3, 3), jnp.float32)
    b1 = 0.1 * jax.random.normal(k[1], (mid_ch,), jnp.float32)   # cancels under train-mode BN
    g1 = 1.0 + 0.1 * jax.random.normal(k[2], (mid_ch,), jnp.float32)
    be1 = 0.1 * jax.random.normal(k[3], (mid_ch,), jnp.float32)
    w2 = 0.1 * jax.random.normal(k[4], (out_ch, mid_ch, 3, 3), jnp.float32)
    b2 = 0.1 * jax.random.normal(k[5], (out_ch,), jnp.float32)   # cancels under train-mode BN
    g2 = 1.0 + 0.1 * jax.random.normal(k[6], (out_ch,), jnp.float32)
    be2 = 0.1 * jax.random.normal(k[7], (out_ch,), jnp.float32)
    return (w1, b1, g1, be1), (w2, b2, g2, be2)


def _ref_double_conv(x, params):
    """Pure-JAX f32 reference of the PyTorch module (training-mode BN, biases included)."""
    def block(x, w, b, g, be):
        y = lax.conv_general_dilated(
            x, w, window_strides=(1, 1), padding="VALID",
            dimension_numbers=("NCHW", "OIHW", "NCHW"),
            precision=lax.Precision.HIGHEST) + b[None, :, None, None]
        mean = jnp.mean(y, axis=(0, 2, 3), keepdims=True)
        var = jnp.mean((y - mean) ** 2, axis=(0, 2, 3), keepdims=True)
        yhat = (y - mean) * lax.rsqrt(var + _EPS)
        return jnp.maximum(yhat * g[None, :, None, None] + be[None, :, None, None], 0.0)

    (w1, b1, g1, be1), (w2, b2, g2, be2) = params
    return block(block(x, w1, b1, g1, be1), w2, b2, g2, be2)


if __name__ == "__main__":
    key = jax.random.PRNGKey(0)
    kx, kp = jax.random.split(key)

    N, IN_CH, OUT_CH, H, W = 2, 4, 8, 16, 16
    x = jax.random.normal(kx, (N, IN_CH, H, W), jnp.float32)     # NCHW like PyTorch
    params = init_params(kp, IN_CH, OUT_CH)

    fwd = jax.jit(double_conv_forward)
    out = jax.block_until_ready(fwd(x, params))

    assert out.shape == (N, OUT_CH, H - 4, W - 4), out.shape
    assert bool(jnp.all(jnp.isfinite(out))), "non-finite output"

    ref = _ref_double_conv(x, params)
    assert bool(jnp.allclose(out, ref, atol=1e-1, rtol=5e-2)), (
        "mismatch vs f32 reference: max|diff|=%g" % float(jnp.max(jnp.abs(out - ref))))
    print("KERNEL_OK")
</pallas_src>

<mosaic_0001>
module attributes {stable_mosaic.version = 11 : i64} {
  func.func @kernel(%arg0: i32, %arg1: i32, %arg2: memref<1x16x16x4xf32, #tpu.memory_space<vmem>>, %arg3: memref<36x128xbf16, #tpu.memory_space<vmem>>, %arg4: memref<1x196x128xbf16, #tpu.memory_space<vmem>>, %arg5: memref<1x1x128xf32, #tpu.memory_space<vmem>>, %arg6: memref<1x1x128xf32, #tpu.memory_space<vmem>>) attributes {dimension_semantics = [#tpu.dimension_semantics<parallel>, #tpu.dimension_semantics<arbitrary>], iteration_bounds = array<i64: 2, 1>, scalar_prefetch = 0 : i64, scratch_operands = 0 : i64, tpu.core_type = #tpu.core_type<tc>, window_params = [{transform_indices = @transform_0, window_bounds = array<i64: 1, 16, 16, 4>}, {pipeline_mode = #tpu.pipeline_mode<synchronous>, transform_indices = @transform_1, window_bounds = array<i64: 36, 128>}, {transform_indices = @transform_2, window_bounds = array<i64: 1, 196, 128>}, {transform_indices = @transform_3, window_bounds = array<i64: 1, 1, 128>}, {transform_indices = @transform_4, window_bounds = array<i64: 1, 1, 128>}]} {
    %c0 = arith.constant 0 : index
    %c0_0 = arith.constant 0 : index
    %c0_1 = arith.constant 0 : index
    %c0_2 = arith.constant 0 : index
    %0 = vector.load %arg2[%c0, %c0_0, %c0_1, %c0_2] : memref<1x16x16x4xf32, #tpu.memory_space<vmem>>, vector<1x16x16x4xf32>
    %1 = vector.shape_cast %0 : vector<1x16x16x4xf32> to vector<16x16x4xf32>
    %2 = vector.extract_strided_slice %1 {offsets = [0, 0, 0], sizes = [14, 14, 4], strides = [1, 1, 1]} : vector<16x16x4xf32> to vector<14x14x4xf32>
    %3 = vector.extract_strided_slice %1 {offsets = [0, 1, 0], sizes = [14, 14, 4], strides = [1, 1, 1]} : vector<16x16x4xf32> to vector<14x14x4xf32>
    %4 = vector.extract_strided_slice %1 {offsets = [0, 2, 0], sizes = [14, 14, 4], strides = [1, 1, 1]} : vector<16x16x4xf32> to vector<14x14x4xf32>
    %5 = vector.extract_strided_slice %1 {offsets = [1, 0, 0], sizes = [14, 14, 4], strides = [1, 1, 1]} : vector<16x16x4xf32> to vector<14x14x4xf32>
    %6 = vector.extract_strided_slice %1 {offsets = [1, 1, 0], sizes = [14, 14, 4], strides = [1, 1, 1]} : vector<16x16x4xf32> to vector<14x14x4xf32>
    %7 = vector.extract_strided_slice %1 {offsets = [1, 2, 0], sizes = [14, 14, 4], strides = [1, 1, 1]} : vector<16x16x4xf32> to vector<14x14x4xf32>
    %8 = vector.extract_strided_slice %1 {offsets = [2, 0, 0], sizes = [14, 14, 4], strides = [1, 1, 1]} : vector<16x16x4xf32> to vector<14x14x4xf32>
    %9 = vector.extract_strided_slice %1 {offsets = [2, 1, 0], sizes = [14, 14, 4], strides = [1, 1, 1]} : vector<16x16x4xf32> to vector<14x14x4xf32>
    %10 = vector.extract_strided_slice %1 {offsets = [2, 2, 0], sizes = [14, 14, 4], strides = [1, 1, 1]} : vector<16x16x4xf32> to vector<14x14x4xf32>
    %11 = tpu.concatenate %2, %3, %4, %5, %6, %7, %8, %9, %10 in 2 : vector<14x14x4xf32>, vector<14x14x4xf32>, vector<14x14x4xf32>, vector<14x14x4xf32>, vector<14x14x4xf32>, vector<14x14x4xf32>, vector<14x14x4xf32>, vector<14x14x4xf32>, vector<14x14x4xf32> -> vector<14x14x36xf32>
    %12 = vector.shape_cast %11 : vector<14x14x36xf32> to vector<196x36xf32>
    %13 = arith.truncf %12 : vector<196x36xf32> to vector<196x36xbf16>
    %c0_3 = arith.constant 0 : index
    %c0_4 = arith.constant 0 : index
    %14 = vector.load %arg3[%c0_3, %c0_4] : memref<36x128xbf16, #tpu.memory_space<vmem>>, vector<36x128xbf16>
    %cst = arith.constant dense<0.000000e+00> : vector<196x128xf32>
    %15 = tpu.matmul %13, %14, %cst {dimension_numbers = #tpu.dot_dimension_numbers<[1], [0], [0], [1], [0, 0, 1, 1], [], []>} : vector<196x36xbf16>, vector<36x128xbf16>, vector<196x128xf32> -> vector<196x128xf32>
    %16 = arith.truncf %15 : vector<196x128xf32> to vector<196x128xbf16>
    %c0_5 = arith.constant 0 : index
    %c0_6 = arith.constant 0 : index
    %c0_7 = arith.constant 0 : index
    %17 = vector.load %arg4[%c0_5, %c0_6, %c0_7] : memref<1x196x128xbf16, #tpu.memory_space<vmem>>, vector<1x196x128xbf16>
    %18 = vector.shape_cast %17 : vector<1x196x128xbf16> to vector<196x128xbf16>
    %19 = vector.shape_cast %16 : vector<196x128xbf16> to vector<1x196x128xbf16>
    tpu.vector_store %arg4[%c0_5, %c0_6, %c0_7], %19 {strides = array<i32>} : memref<1x196x128xbf16, #tpu.memory_space<vmem>>, vector<1x196x128xbf16>,
    %c0_i32 = arith.constant 0 : i32
    %20 = arith.cmpi eq, %arg1, %c0_i32 : i32
    %21 = arith.extui %20 : i1 to i32
    %c0_i32_8 = arith.constant 0 : i32
    %22 = arith.cmpi ne, %21, %c0_i32_8 : i32
    scf.if %22 {
      %cst_23 = arith.constant 0.000000e+00 : f32
      %40 = vector.broadcast %cst_23 : f32 to vector<1x1x128xf32>
      %c0_24 = arith.constant 0 : index
      %c0_25 = arith.constant 0 : index
      %c0_26 = arith.constant 0 : index
      %41 = vector.load %arg5[%c0_24, %c0_25, %c0_26] : memref<1x1x128xf32, #tpu.memory_space<vmem>>, vector<1x1x128xf32>
      tpu.vector_store %arg5[%c0_24, %c0_25, %c0_26], %40 {strides = array<i32>} : memref<1x1x128xf32, #tpu.memory_space<vmem>>, vector<1x1x128xf32>,
      %cst_27 = arith.constant 0.000000e+00 : f32
      %42 = vector.broadcast %cst_27 : f32 to vector<1x1x128xf32>
      %c0_28 = arith.constant 0 : index
      %c0_29 = arith.constant 0 : index
      %c0_30 = arith.constant 0 : index
      %43 = vector.load %arg6[%c0_28, %c0_29, %c0_30] : memref<1x1x128xf32, #tpu.memory_space<vmem>>, vector<1x1x128xf32>
      tpu.vector_store %arg6[%c0_28, %c0_29, %c0_30], %42 {strides = array<i32>} : memref<1x1x128xf32, #tpu.memory_space<vmem>>, vector<1x1x128xf32>,
    } else {
    }
    %c0_9 = arith.constant 0 : index
    %c0_10 = arith.constant 0 : index
    %c0_11 = arith.constant 0 : index
    %23 = vector.load %arg5[%c0_9, %c0_10, %c0_11] : memref<1x1x128xf32, #tpu.memory_space<vmem>>, vector<1x1x128xf32>
    %24 = vector.shape_cast %23 : vector<1x1x128xf32> to vector<1x128xf32>
    %cst_12 = arith.constant dense<0.000000e+00> : vector<128xf32>
    %25 = vector.multi_reduction <add>, %15, %cst_12 [0] : vector<196x128xf32> to vector<128xf32>
    %26 = vector.shape_cast %25 : vector<128xf32> to vector<1x128xf32>
    %27 = arith.addf %24, %26 : vector<1x128xf32>
    %c0_13 = arith.constant 0 : index
    %c0_14 = arith.constant 0 : index
    %c0_15 = arith.constant 0 : index
    %28 = vector.load %arg5[%c0_13, %c0_14, %c0_15] : memref<1x1x128xf32, #tpu.memory_space<vmem>>, vector<1x1x128xf32>
    %29 = vector.shape_cast %28 : vector<1x1x128xf32> to vector<1x128xf32>
    %30 = vector.shape_cast %27 : vector<1x128xf32> to vector<1x1x128xf32>
    tpu.vector_store %arg5[%c0_13, %c0_14, %c0_15], %30 {strides = array<i32>} : memref<1x1x128xf32, #tpu.memory_space<vmem>>, vector<1x1x128xf32>,
    %c0_16 = arith.constant 0 : index
    %c0_17 = arith.constant 0 : index
    %c0_18 = arith.constant 0 : index
    %31 = vector.load %arg6[%c0_16, %c0_17, %c0_18] : memref<1x1x128xf32, #tpu.memory_space<vmem>>, vector<1x1x128xf32>
    %32 = vector.shape_cast %31 : vector<1x1x128xf32> to vector<1x128xf32>
    %33 = arith.mulf %15, %15 : vector<196x128xf32>
    %cst_19 = arith.constant dense<0.000000e+00> : vector<128xf32>
    %34 = vector.multi_reduction <add>, %33, %cst_19 [0] : vector<196x128xf32> to vector<128xf32>
    %35 = vector.shape_cast %34 : vector<128xf32> to vector<1x128xf32>
    %36 = arith.addf %32, %35 : vector<1x128xf32>
    %c0_20 = arith.constant 0 : index
    %c0_21 = arith.constant 0 : index
    %c0_22 = arith.constant 0 : index
    %37 = vector.load %arg6[%c0_20, %c0_21, %c0_22] : memref<1x1x128xf32, #tpu.memory_space<vmem>>, vector<1x1x128xf32>
    %38 = vector.shape_cast %37 : vector<1x1x128xf32> to vector<1x128xf32>
    %39 = vector.shape_cast %36 : vector<1x128xf32> to vector<1x1x128xf32>
    tpu.vector_store %arg6[%c0_20, %c0_21, %c0_22], %39 {strides = array<i32>} : memref<1x1x128xf32, #tpu.memory_space<vmem>>, vector<1x1x128xf32>,
    return
  }
  func.func @transform_0(%arg0: i32, %arg1: i32) -> (i32, i32, i32, i32) {
    %c1_i32 = arith.constant 1 : i32
    %0 = arith.muli %arg0, %c1_i32 : i32
    %1 = arith.addi %0, %arg1 : i32
    %c0_i32 = arith.constant 0 : i32
    %c0_i32_0 = arith.constant 0 : i32
    %c0_i32_1 = arith.constant 0 : i32
    %c0_i32_2 = arith.constant 0 : i32
    return %1, %c0_i32, %c0_i32_0, %c0_i32_1 : i32, i32, i32, i32
  }
  func.func @transform_1(%arg0: i32, %arg1: i32) -> (i32, i32) {
    %c0_i32 = arith.constant 0 : i32
    %c0_i32_0 = arith.constant 0 : i32
    %c0_i32_1 = arith.constant 0 : i32
    return %c0_i32, %c0_i32_0 : i32, i32
  }
  func.func @transform_2(%arg0: i32, %arg1: i32) -> (i32, i32, i32) {
    %c1_i32 = arith.constant 1 : i32
    %0 = arith.muli %arg0, %c1_i32 : i32
    %1 = arith.addi %0, %arg1 : i32
    %c0_i32 = arith.constant 0 : i32
    %c0_i32_0 = arith.constant 0 : i32
    %c0_i32_1 = arith.constant 0 : i32
    return %1, %c0_i32, %c0_i32_0 : i32, i32, i32
  }
  func.func @transform_3(%arg0: i32, %arg1: i32) -> (i32, i32, i32) {
    %c0_i32 = arith.constant 0 : i32
    %c0_i32_0 = arith.constant 0 : i32
    %c0_i32_1 = arith.constant 0 : i32
    return %arg0, %c0_i32, %c0_i32_0 : i32, i32, i32
  }
  func.func @transform_4(%arg0: i32, %arg1: i32) -> (i32, i32, i32) {
    %c0_i32 = arith.constant 0 : i32
    %c0_i32_0 = arith.constant 0 : i32
    %c0_i32_1 = arith.constant 0 : i32
    return %arg0, %c0_i32, %c0_i32_0 : i32, i32, i32
  }
}

module attributes {stable_mosaic.version = 11 : i64} {
  func.func @_affine_relu_kernel(%arg0: i32, %arg1: memref<1x144x128xbf16, #tpu.memory_space<vmem>>, %arg2: memref<1x128xf32, #tpu.memory_space<vmem>>, %arg3: memref<1x128xf32, #tpu.memory_space<vmem>>, %arg4: memref<1x144x8xf32, #tpu.memory_space<vmem>>) attributes {dimension_semantics = [#tpu.dimension_semantics<parallel>], iteration_bounds = array<i64: 2>, scalar_prefetch = 0 : i64, scratch_operands = 0 : i64, tpu.core_type = #tpu.core_type<tc>, window_params = [{transform_indices = @transform_0, window_bounds = array<i64: 1, 144, 128>}, {pipeline_mode = #tpu.pipeline_mode<synchronous>, transform_indices = @transform_1, window_bounds = array<i64: 1, 128>}, {pipeline_mode = #tpu.pipeline_mode<synchronous>, transform_indices = @transform_2, window_bounds = array<i64: 1, 128>}, {transform_indices = @transform_3, window_bounds = array<i64: 1, 144, 8>}]} {
    %c0 = arith.constant 0 : index
    %c0_0 = arith.constant 0 : index
    %c0_1 = arith.constant 0 : index
    %0 = vector.load %arg1[%c0, %c0_0, %c0_1] : memref<1x144x128xbf16, #tpu.memory_space<vmem>>, vector<1x144x128xbf16>
    %1 = vector.shape_cast %0 : vector<1x144x128xbf16> to vector<144x128xbf16>
    %2 = arith.extf %1 : vector<144x128xbf16> to vector<144x128xf32>
    %c0_2 = arith.constant 0 : index
    %c0_3 = arith.constant 0 : index
    %3 = vector.load %arg2[%c0_2, %c0_3] : memref<1x128xf32, #tpu.memory_space<vmem>>, vector<1x128xf32>
    %4 = vector.broadcast %3 : vector<1x128xf32> to vector<144x128xf32>
    %5 = arith.mulf %2, %4 : vector<144x128xf32>
    %c0_4 = arith.constant 0 : index
    %c0_5 = arith.constant 0 : index
    %6 = vector.load %arg3[%c0_4, %c0_5] : memref<1x128xf32, #tpu.memory_space<vmem>>, vector<1x128xf32>
    %7 = vector.broadcast %6 : vector<1x128xf32> to vector<144x128xf32>
    %8 = arith.addf %5, %7 : vector<144x128xf32>
    %cst = arith.constant 0.000000e+00 : f32
    %9 = vector.broadcast %cst : f32 to vector<144x128xf32>
    %10 = arith.maximumf %8, %9 : vector<144x128xf32>
    %11 = vector.extract_strided_slice %10 {offsets = [0, 0], sizes = [144, 8], strides = [1, 1]} : vector<144x128xf32> to vector<144x8xf32>
    %c0_6 = arith.constant 0 : index
    %c0_7 = arith.constant 0 : index
    %c0_8 = arith.constant 0 : index
    %12 = vector.load %arg4[%c0_6, %c0_7, %c0_8] : memref<1x144x8xf32, #tpu.memory_space<vmem>>, vector<1x144x8xf32>
    %13 = vector.shape_cast %12 : vector<1x144x8xf32> to vector<144x8xf32>
    %14 = vector.shape_cast %11 : vector<144x8xf32> to vector<1x144x8xf32>
    tpu.vector_store %arg4[%c0_6, %c0_7, %c0_8], %14 {strides = array<i32>} : memref<1x144x8xf32, #tpu.memory_space<vmem>>, vector<1x144x8xf32>,
    return
  }
  func.func @transform_0(%arg0: i32) -> (i32, i32, i32) {
    %c0_i32 = arith.constant 0 : i32
    %c0_i32_0 = arith.constant 0 : i32
    %c0_i32_1 = arith.constant 0 : i32
    return %arg0, %c0_i32, %c0_i32_0 : i32, i32, i32
  }
  func.func @transform_1(%arg0: i32) -> (i32, i32) {
    %c0_i32 = arith.constant 0 : i32
    %c0_i32_0 = arith.constant 0 : i32
    %c0_i32_1 = arith.constant 0 : i32
    return %c0_i32, %c0_i32_0 : i32, i32
  }
  func.func @transform_2(%arg0: i32) -> (i32, i32) {
    %c0_i32 = arith.constant 0 : i32
    %c0_i32_0 = arith.constant 0 : i32
    %c0_i32_1 = arith.constant 0 : i32
    return %c0_i32, %c0_i32_0 : i32, i32
  }
  func.func @transform_3(%arg0: i32) -> (i32, i32, i32) {
    %c0_i32 = arith.constant 0 : i32
    %c0_i32_0 = arith.constant 0 : i32
    %c0_i32_1 = arith.constant 0 : i32
    return %arg0, %c0_i32, %c0_i32_0 : i32, i32, i32
  }
}

module attributes {stable_mosaic.version = 11 : i64} {
  func.func @kernel(%arg0: i32, %arg1: i32, %arg2: memref<1x14x14x128xbf16, #tpu.memory_space<vmem>>, %arg3: memref<1152x128xbf16, #tpu.memory_space<vmem>>, %arg4: memref<1x128xf32, #tpu.memory_space<vmem>>, %arg5: memref<1x128xf32, #tpu.memory_space<vmem>>, %arg6: memref<1x144x128xbf16, #tpu.memory_space<vmem>>, %arg7: memref<1x1x128xf32, #tpu.memory_space<vmem>>, %arg8: memref<1x1x128xf32, #tpu.memory_space<vmem>>) attributes {dimension_semantics = [#tpu.dimension_semantics<parallel>, #tpu.dimension_semantics<arbitrary>], iteration_bounds = array<i64: 2, 1>, scalar_prefetch = 0 : i64, scratch_operands = 0 : i64, tpu.core_type = #tpu.core_type<tc>, window_params = [{transform_indices = @transform_0, window_bounds = array<i64: 1, 14, 14, 128>}, {pipeline_mode = #tpu.pipeline_mode<synchronous>, transform_indices = @transform_1, window_bounds = array<i64: 1152, 128>}, {pipeline_mode = #tpu.pipeline_mode<synchronous>, transform_indices = @transform_2, window_bounds = array<i64: 1, 128>}, {pipeline_mode = #tpu.pipeline_mode<synchronous>, transform_indices = @transform_3, window_bounds = array<i64: 1, 128>}, {transform_indices = @transform_4, window_bounds = array<i64: 1, 144, 128>}, {transform_indices = @transform_5, window_bounds = array<i64: 1, 1, 128>}, {transform_indices = @transform_6, window_bounds = array<i64: 1, 1, 128>}]} {
    %c0 = arith.constant 0 : index
    %c0_0 = arith.constant 0 : index
    %c0_1 = arith.constant 0 : index
    %c0_2 = arith.constant 0 : index
    %0 = vector.load %arg2[%c0, %c0_0, %c0_1, %c0_2] : memref<1x14x14x128xbf16, #tpu.memory_space<vmem>>, vector<1x14x14x128xbf16>
    %1 = vector.shape_cast %0 : vector<1x14x14x128xbf16> to vector<14x14x128xbf16>
    %c0_3 = arith.constant 0 : index
    %c0_4 = arith.constant 0 : index
    %2 = vector.load %arg4[%c0_3, %c0_4] : memref<1x128xf32, #tpu.memory_space<vmem>>, vector<1x128xf32>
    %3 = vector.shape_cast %2 : vector<1x128xf32> to vector<1x1x128xf32>
    %c0_5 = arith.constant 0 : index
    %c0_6 = arith.constant 0 : index
    %4 = vector.load %arg5[%c0_5, %c0_6] : memref<1x128xf32, #tpu.memory_space<vmem>>, vector<1x128xf32>
    %5 = vector.shape_cast %4 : vector<1x128xf32> to vector<1x1x128xf32>
    %6 = arith.extf %1 : vector<14x14x128xbf16> to vector<14x14x128xf32>
    %7 = vector.broadcast %3 : vector<1x1x128xf32> to vector<14x14x128xf32>
    %8 = arith.mulf %6, %7 : vector<14x14x128xf32>
    %9 = vector.broadcast %5 : vector<1x1x128xf32> to vector<14x14x128xf32>
    %10 = arith.addf %8, %9 : vector<14x14x128xf32>
    %cst = arith.constant 0.000000e+00 : f32
    %11 = vector.broadcast %cst : f32 to vector<14x14x128xf32>
    %12 = arith.maximumf %10, %11 : vector<14x14x128xf32>
    %13 = arith.truncf %12 : vector<14x14x128xf32> to vector<14x14x128xbf16>
    %14 = vector.extract_strided_slice %13 {offsets = [0, 0, 0], sizes = [12, 12, 128], strides = [1, 1, 1]} : vector<14x14x128xbf16> to vector<12x12x128xbf16>
    %15 = vector.extract_strided_slice %13 {offsets = [0, 1, 0], sizes = [12, 12, 128], strides = [1, 1, 1]} : vector<14x14x128xbf16> to vector<12x12x128xbf16>
    %16 = vector.extract_strided_slice %13 {offsets = [0, 2, 0], sizes = [12, 12, 128], strides = [1, 1, 1]} : vector<14x14x128xbf16> to vector<12x12x128xbf16>
    %17 = vector.extract_strided_slice %13 {offsets = [1, 0, 0], sizes = [12, 12, 128], strides = [1, 1, 1]} : vector<14x14x128xbf16> to vector<12x12x128xbf16>
    %18 = vector.extract_strided_slice %13 {offsets = [1, 1, 0], sizes = [12, 12, 128], strides = [1, 1, 1]} : vector<14x14x128xbf16> to vector<12x12x128xbf16>
    %19 = vector.extract_strided_slice %13 {offsets = [1, 2, 0], sizes = [12, 12, 128], strides = [1, 1, 1]} : vector<14x14x128xbf16> to vector<12x12x128xbf16>
    %20 = vector.extract_strided_slice %13 {offsets = [2, 0, 0], sizes = [12, 12, 128], strides = [1, 1, 1]} : vector<14x14x128xbf16> to vector<12x12x128xbf16>
    %21 = vector.extract_strided_slice %13 {offsets = [2, 1, 0], sizes = [12, 12, 128], strides = [1, 1, 1]} : vector<14x14x128xbf16> to vector<12x12x128xbf16>
    %22 = vector.extract_strided_slice %13 {offsets = [2, 2, 0], sizes = [12, 12, 128], strides = [1, 1, 1]} : vector<14x14x128xbf16> to vector<12x12x128xbf16>
    %23 = tpu.concatenate %14, %15, %16, %17, %18, %19, %20, %21, %22 in 2 : vector<12x12x128xbf16>, vector<12x12x128xbf16>, vector<12x12x128xbf16>, vector<12x12x128xbf16>, vector<12x12x128xbf16>, vector<12x12x128xbf16>, vector<12x12x128xbf16>, vector<12x12x128xbf16>, vector<12x12x128xbf16> -> vector<12x12x1152xbf16>
    %24 = vector.shape_cast %23 : vector<12x12x1152xbf16> to vector<144x1152xbf16>
    %c0_7 = arith.constant 0 : index
    %c0_8 = arith.constant 0 : index
    %25 = vector.load %arg3[%c0_7, %c0_8] : memref<1152x128xbf16, #tpu.memory_space<vmem>>, vector<1152x128xbf16>
    %cst_9 = arith.constant dense<0.000000e+00> : vector<144x128xf32>
    %26 = tpu.matmul %24, %25, %cst_9 {dimension_numbers = #tpu.dot_dimension_numbers<[1], [0], [0], [1], [0, 0, 1, 1], [], []>} : vector<144x1152xbf16>, vector<1152x128xbf16>, vector<144x128xf32> -> vector<144x128xf32>
    %27 = arith.truncf %26 : vector<144x128xf32> to vector<144x128xbf16>
    %c0_10 = arith.constant 0 : index
    %c0_11 = arith.constant 0 : index
    %c0_12 = arith.constant 0 : index
    %28 = vector.load %arg6[%c0_10, %c0_11, %c0_12] : memref<1x144x128xbf16, #tpu.memory_space<vmem>>, vector<1x144x128xbf16>
    %29 = vector.shape_cast %28 : vector<1x144x128xbf16> to vector<144x128xbf16>
    %30 = vector.shape_cast %27 : vector<144x128xbf16> to vector<1x144x128xbf16>
    tpu.vector_store %arg6[%c0_10, %c0_11, %c0_12], %30 {strides = array<i32>} : memref<1x144x128xbf16, #tpu.memory_space<vmem>>, vector<1x144x128xbf16>,
    %c0_i32 = arith.constant 0 : i32
    %31 = arith.cmpi eq, %arg1, %c0_i32 : i32
    %32 = arith.extui %31 : i1 to i32
    %c0_i32_13 = arith.constant 0 : i32
    %33 = arith.cmpi ne, %32, %c0_i32_13 : i32
    scf.if %33 {
      %cst_28 = arith.constant 0.000000e+00 : f32
      %51 = vector.broadcast %cst_28 : f32 to vector<1x1x128xf32>
      %c0_29 = arith.constant 0 : index
      %c0_30 = arith.constant 0 : index
      %c0_31 = arith.constant 0 : index
      %52 = vector.load %arg7[%c0_29, %c0_30, %c0_31] : memref<1x1x128xf32, #tpu.memory_space<vmem>>, vector<1x1x128xf32>
      tpu.vector_store %arg7[%c0_29, %c0_30, %c0_31], %51 {strides = array<i32>} : memref<1x1x128xf32, #tpu.memory_space<vmem>>, vector<1x1x128xf32>,
      %cst_32 = arith.constant 0.000000e+00 : f32
      %53 = vector.broadcast %cst_32 : f32 to vector<1x1x128xf32>
      %c0_33 = arith.constant 0 : index
      %c0_34 = arith.constant 0 : index
      %c0_35 = arith.constant 0 : index
      %54 = vector.load %arg8[%c0_33, %c0_34, %c0_35] : memref<1x1x128xf32, #tpu.memory_space<vmem>>, vector<1x1x128xf32>
      tpu.vector_store %arg8[%c0_33, %c0_34, %c0_35], %53 {strides = array<i32>} : memref<1x1x128xf32, #tpu.memory_space<vmem>>, vector<1x1x128xf32>,
    } else {
    }
    %c0_14 = arith.constant 0 : index
    %c0_15 = arith.constant 0 : index
    %c0_16 = arith.constant 0 : index
    %34 = vector.load %arg7[%c0_14, %c0_15, %c0_16] : memref<1x1x128xf32, #tpu.memory_space<vmem>>, vector<1x1x128xf32>
    %35 = vector.shape_cast %34 : vector<1x1x128xf32> to vector<1x128xf32>
    %cst_17 = arith.constant dense<0.000000e+00> : vector<128xf32>
    %36 = vector.multi_reduction <add>, %26, %cst_17 [0] : vector<144x128xf32> to vector<128xf32>
    %37 = vector.shape_cast %36 : vector<128xf32> to vector<1x128xf32>
    %38 = arith.addf %35, %37 : vector<1x128xf32>
    %c0_18 = arith.constant 0 : index
    %c0_19 = arith.constant 0 : index
    %c0_20 = arith.constant 0 : index
    %39 = vector.load %arg7[%c0_18, %c0_19, %c0_20] : memref<1x1x128xf32, #tpu.memory_space<vmem>>, vector<1x1x128xf32>
    %40 = vector.shape_cast %39 : vector<1x1x128xf32> to vector<1x128xf32>
    %41 = vector.shape_cast %38 : vector<1x128xf32> to vector<1x1x128xf32>
    tpu.vector_store %arg7[%c0_18, %c0_19, %c0_20], %41 {strides = array<i32>} : memref<1x1x128xf32, #tpu.memory_space<vmem>>, vector<1x1x128xf32>,
    %c0_21 = arith.constant 0 : index
    %c0_22 = arith.constant 0 : index
    %c0_23 = arith.constant 0 : index
    %42 = vector.load %arg8[%c0_21, %c0_22, %c0_23] : memref<1x1x128xf32, #tpu.memory_space<vmem>>, vector<1x1x128xf32>
    %43 = vector.shape_cast %42 : vector<1x1x128xf32> to vector<1x128xf32>
    %44 = arith.mulf %26, %26 : vector<144x128xf32>
    %cst_24 = arith.constant dense<0.000000e+00> : vector<128xf32>
    %45 = vector.multi_reduction <add>, %44, %cst_24 [0] : vector<144x128xf32> to vector<128xf32>
    %46 = vector.shape_cast %45 : vector<128xf32> to vector<1x128xf32>
    %47 = arith.addf %43, %46 : vector<1x128xf32>
    %c0_25 = arith.constant 0 : index
    %c0_26 = arith.constant 0 : index
    %c0_27 = arith.constant 0 : index
    %48 = vector.load %arg8[%c0_25, %c0_26, %c0_27] : memref<1x1x128xf32, #tpu.memory_space<vmem>>, vector<1x1x128xf32>
    %49 = vector.shape_cast %48 : vector<1x1x128xf32> to vector<1x128xf32>
    %50 = vector.shape_cast %47 : vector<1x128xf32> to vector<1x1x128xf32>
    tpu.vector_store %arg8[%c0_25, %c0_26, %c0_27], %50 {strides = array<i32>} : memref<1x1x128xf32, #tpu.memory_space<vmem>>, vector<1x1x128xf32>,
    return
  }
  func.func @transform_0(%arg0: i32, %arg1: i32) -> (i32, i32, i32, i32) {
    %c1_i32 = arith.constant 1 : i32
    %0 = arith.muli %arg0, %c1_i32 : i32
    %1 = arith.addi %0, %arg1 : i32
    %c0_i32 = arith.constant 0 : i32
    %c0_i32_0 = arith.constant 0 : i32
    %c0_i32_1 = arith.constant 0 : i32
    %c0_i32_2 = arith.constant 0 : i32
    return %1, %c0_i32, %c0_i32_0, %c0_i32_1 : i32, i32, i32, i32
  }
  func.func @transform_1(%arg0: i32, %arg1: i32) -> (i32, i32) {
    %c0_i32 = arith.constant 0 : i32
    %c0_i32_0 = arith.constant 0 : i32
    %c0_i32_1 = arith.constant 0 : i32
    return %c0_i32, %c0_i32_0 : i32, i32
  }
  func.func @transform_2(%arg0: i32, %arg1: i32) -> (i32, i32) {
    %c0_i32 = arith.constant 0 : i32
    %c0_i32_0 = arith.constant 0 : i32
    %c0_i32_1 = arith.constant 0 : i32
    return %c0_i32, %c0_i32_0 : i32, i32
  }
  func.func @transform_3(%arg0: i32, %arg1: i32) -> (i32, i32) {
    %c0_i32 = arith.constant 0 : i32
    %c0_i32_0 = arith.constant 0 : i32
    %c0_i32_1 = arith.constant 0 : i32
    return %c0_i32, %c0_i32_0 : i32, i32
  }
  func.func @transform_4(%arg0: i32, %arg1: i32) -> (i32, i32, i32) {
    %c1_i32 = arith.constant 1 : i32
    %0 = arith.muli %arg0, %c1_i32 : i32
    %1 = arith.addi %0, %arg1 : i32
    %c0_i32 = arith.constant 0 : i32
    %c0_i32_0 = arith.constant 0 : i32
    %c0_i32_1 = arith.constant 0 : i32
    return %1, %c0_i32, %c0_i32_0 : i32, i32, i32
  }
  func.func @transform_5(%arg0: i32, %arg1: i32) -> (i32, i32, i32) {
    %c0_i32 = arith.constant 0 : i32
    %c0_i32_0 = arith.constant 0 : i32
    %c0_i32_1 = arith.constant 0 : i32
    return %arg0, %c0_i32, %c0_i32_0 : i32, i32, i32
  }
  func.func @transform_6(%arg0: i32, %arg1: i32) -> (i32, i32, i32) {
    %c0_i32 = arith.constant 0 : i32
    %c0_i32_0 = arith.constant 0 : i32
    %c0_i32_1 = arith.constant 0 : i32
    return %arg0, %c0_i32, %c0_i32_0 : i32, i32, i32
  }
}

</mosaic_0001>

<llo_original>
// kernel: double_conv_forward.5
$region0: #{double_conv_forward.5}
  #allocation0 [shape = 'u32[]', space=smem, size = 0x4, offset = 0x4, fixed_abs, tag = 'smem constant byte address 0x4 - core index']
  #allocation1 [shape = 'u32[72,128]{1,0:T(1,128)}', space=vmem, size = 0x9000, scoped, tag = 'internal scratch']
  %s0 = inlined_call_operand.vmem [shape: bf16[2,144,128], index: 0, kind: input, shape index: {}]
  %s1 = inlined_call_operand.vmem [shape: f32[1,128], index: 1, kind: input, shape index: {}]
  %s2 = inlined_call_operand.vmem [shape: f32[1,128], index: 2, kind: input, shape index: {}]
  %s3 = inlined_call_operand.vmem [shape: f32[2,144,8], index: 3, kind: output, shape index: {}]
  %s4 = sld [smem:[#allocation0]]
  $region45: #{double_conv_forward.5} parent=0
    _
  %s6 = ssub.s32 1, %s4
  %s7 = scalar_select 0, %s6, %s4
  loop: start=0, step=1, limit=4
  $region2: #{double_conv_forward.5} parent=0 // loop_pre_header
    _
  $region3: #{double_conv_forward.5} parent=0 // loop_header
    %s9 = sphi 0, %s13
    %p10 = scmp.ge.s32.totalorder %s9, 4
    %s19 = sphi 0, %s21
    %s22 = sphi 0, %s19
    %s23 = sphi 0, %s22
    %s39 = sphi 0, %s23
    %s43 = sphi 0, %s43
    %s45 = sphi 0, %s43
    %s46 = sphi 0, %s45
    %s60 = sphi 0, %s46
    %s64 = sphi 0, %s64
    %s66 = sphi 0, %s64
    %s67 = sphi 0, %s66
    %s81 = sphi 0, %s67
    %s87 = sphi 0, %s89
    %s90 = sphi 0, %s87
    %s91 = sphi 0, %s90
    %s107 = sphi 0, %s91
  $region4: #{double_conv_forward.5} parent=0 // loop_header_branch
    %12 = sbr.rel (%p10) target = $region8
  $region5: #{double_conv_forward.5} parent=0 // loop_body
    %s14 = ssub.s32 %s9, 1
    %s15 = ssub.s32 %s9, 2
    %s16 = sadd.s32 %s9, 1
    %s17 = ssub.s32 %s9, %s16
    %p18 = scmp.eq.s32.totalorder %s17, 0
    %s20 = sadd.s32 %s19, 1
    %s21 = scalar_select %p18, %s19, %s20
    %p24 = pneg %p18
    %p25 = scmp.eq.s32.totalorder %s9, 1
    %p26 = por %p24, %p25
    %p27 = scmp.ne.s32.totalorder %s19, %s22
    %p28 = scmp.eq.s32.totalorder %s9, 0
    %p29 = por %p27, %p28
    %p30 = scmp.ne.s32.totalorder %s19, %s22
    %p31 = scmp.eq.s32.totalorder %s14, 1
    %p32 = por %p30, %p31
    %p33 = scmp.ne.s32.totalorder %s22, %s23
    %p34 = scmp.eq.s32.totalorder %s14, 0
    %p35 = por %p33, %p34
    %p36 = scmp.ne.s32.totalorder %s22, %s23
    %p37 = scmp.eq.s32.totalorder %s15, 1
    %p38 = por %p36, %p37
    %p40 = scmp.ne.s32.totalorder %s23, %s39
    %p41 = scmp.eq.s32.totalorder %s15, 0
    %p42 = por %p40, %p41
    %s44 = sadd.s32 %s43, 1
    %p47 = scmp.eq.s32.totalorder %s9, 1
    %p48 = scmp.ne.s32.totalorder %s43, %s45
    %p49 = scmp.eq.s32.totalorder %s9, 0
    %p50 = por %p48, %p49
    %p51 = scmp.ne.s32.totalorder %s43, %s45
    %p52 = scmp.eq.s32.totalorder %s14, 1
    %p53 = por %p51, %p52
    %p54 = scmp.ne.s32.totalorder %s45, %s46
    %p55 = scmp.eq.s32.totalorder %s14, 0
    %p56 = por %p54, %p55
    %p57 = scmp.ne.s32.totalorder %s45, %s46
    %p58 = scmp.eq.s32.totalorder %s15, 1
    %p59 = por %p57, %p58
    %p61 = scmp.ne.s32.totalorder %s46, %s60
    %p62 = scmp.eq.s32.totalorder %s15, 0
    %p63 = por %p61, %p62
    %s65 = sadd.s32 %s64, 1
    %p68 = scmp.eq.s32.totalorder %s9, 1
    %p69 = scmp.ne.s32.totalorder %s64, %s66
    %p70 = scmp.eq.s32.totalorder %s9, 0
    %p71 = por %p69, %p70
    %p72 = scmp.ne.s32.totalorder %s64, %s66
    %p73 = scmp.eq.s32.totalorder %s14, 1
    %p74 = por %p72, %p73
    %p75 = scmp.ne.s32.totalorder %s66, %s67
    %p76 = scmp.eq.s32.totalorder %s14, 0
    %p77 = por %p75, %p76
    %p78 = scmp.ne.s32.totalorder %s66, %s67
    %p79 = scmp.eq.s32.totalorder %s15, 1
    %p80 = por %p78, %p79
    %p82 = scmp.ne.s32.totalorder %s67, %s81
    %p83 = scmp.eq.s32.totalorder %s15, 0
    %p84 = por %p82, %p83
    %s85 = ssub.s32 %s9, %s16
    %p86 = scmp.eq.s32.totalorder %s85, 0
    %s88 = sadd.s32 %s87, 1
    %s89 = scalar_select %p86, %s87, %s88
    %p92 = pneg %p86
    %p93 = scmp.eq.s32.totalorder %s9, 1
    %p94 = por %p92, %p93
    %p95 = scmp.ne.s32.totalorder %s87, %s90
    %p96 = scmp.eq.s32.totalorder %s9, 0
    %p97 = por %p95, %p96
    %p98 = scmp.ne.s32.totalorder %s87, %s90
    %p99 = scmp.eq.s32.totalorder %s14, 1
    %p100 = por %p98, %p99
    %p101 = scmp.ne.s32.totalorder %s90, %s91
    %p102 = scmp.eq.s32.totalorder %s14, 0
    %p103 = por %p101, %p102
    %p104 = scmp.ne.s32.totalorder %s90, %s91
    %p105 = scmp.eq.s32.totalorder %s15, 1
    %p106 = por %p104, %p105
    %p108 = scmp.ne.s32.totalorder %s91, %s107
    %p109 = scmp.eq.s32.totalorder %s15, 0
    %p110 = por %p108, %p109
    %p111 = scmp.le.s32.totalorder 1, %s9
    %p112 = scmp.lt.s32.totalorder %s9, 3
    %p113 = pnand %p111, %p112
    %p114 = pneg %p113
    // Predicated region
    $region9: #{double_conv_forward.5} parent=5 // pred_check
      _
    $region10: #{double_conv_forward.5} parent=5 // pred_check_branch
      %116 = sbr.rel (%p113) target = $region12
    $region11: #{double_conv_forward.5} parent=5 // pred_region
      %s117 = ssub.s32 %s9, 1
      // Predicated region
      $region13: #{double_conv_forward.5} parent=11 // pred_check
        %p118 = pneg %p56
      $region14: #{double_conv_forward.5} parent=11 // pred_check_branch
        %120 = sbr.rel (%p118) target = $region16
      $region15: #{double_conv_forward.5} parent=11 // pred_region
        _
      $region16: #{double_conv_forward.5} parent=11 // pred_fallthru
        _
      // Predicated region
      $region17: #{double_conv_forward.5} parent=11 // pred_check
        %p121 = pneg %p77
      $region18: #{double_conv_forward.5} parent=11 // pred_check_branch
        %123 = sbr.rel (%p121) target = $region20
      $region19: #{double_conv_forward.5} parent=11 // pred_region
        _
      $region20: #{double_conv_forward.5} parent=11 // pred_fallthru
        _
    $region12: #{double_conv_forward.5} parent=5 // pred_fallthru
      _
    %p124 = scmp.lt.s32.totalorder %s9, 2
    // Predicated region
    $region21: #{double_conv_forward.5} parent=5 // pred_check
      %p125 = pneg %p124
    $region22: #{double_conv_forward.5} parent=5 // pred_check_branch
      %127 = sbr.rel (%p125) target = $region24
    $region23: #{double_conv_forward.5} parent=5 // pred_region
      // Predicated region
      $region25: #{double_conv_forward.5} parent=23 // pred_check
        %p128 = pneg %p29
      $region26: #{double_conv_forward.5} parent=23 // pred_check_branch
        %130 = sbr.rel (%p128) target = $region28
      $region27: #{double_conv_forward.5} parent=23 // pred_region
        %p131 = scmp.lt.s32.totalorder %s9, 1
        %s132 = scalar_select %p131, %s9, 1
        %s133 = smul.addr %s132, 18
        %s134 = smul.addr %s133, 4
        %s135 = scalar_lea.vmem %s0, %s134
      $region28: #{double_conv_forward.5} parent=23 // pred_fallthru
        _
    $region24: #{double_conv_forward.5} parent=5 // pred_fallthru
      _
    %p136 = scmp.le.s32.totalorder 1, %s9
    %p137 = scmp.lt.s32.totalorder %s9, 3
    %p138 = pnand %p136, %p137
    %p139 = pneg %p138
    // Predicated region
    $region29: #{double_conv_forward.5} parent=5 // pred_check
      _
    $region30: #{double_conv_forward.5} parent=5 // pred_check_branch
      %141 = sbr.rel (%p138) target = $region32
    $region31: #{double_conv_forward.5} parent=5 // pred_region
      %s142 = ssub.s32 %s9, 1
      %p143 = scmp.lt.s32.totalorder %s14, 1
      %s144 = scalar_select %p143, %s14, 1
      %s145 = smul.addr %s144, 18
      %s146 = smul.addr %s145, 4
      %s147 = scalar_lea.vmem %s0, %s146
      %p148 = pneg %p35
      %p149 = pneg %p32
      %p150 = pneg %p56
      %p151 = pneg %p53
      %p152 = pneg %p77
      %p153 = pneg %p74
      %p154 = pneg %p103
      %p155 = pneg %p100
      %p156 = scmp.lt.s32.totalorder %s14, 1
      %s157 = scalar_select %p156, %s14, 1
      %s158 = smul.addr %s157, 18
      %s159 = smul.addr %s158, 8
      %s160 = scalar_lea.vmem %s3, %s159
      %p161 = scmp.lt.s32.totalorder %s14, 1
      %s162 = scalar_select %p161, %s14, 1
      %s163 = smul.addr %s162, 18
      %s164 = smul.addr %s163, 4
      %s165 = scalar_lea.vmem %s0, %s164
      %p166 = scmp.lt.s32.totalorder %s14, 1
      %s167 = scalar_select %p166, %s14, 1
      %s168 = smul.addr %s167, 18
      %s169 = smul.addr %s168, 8
      %s170 = scalar_lea.vmem %s3, %s169
      %v171 = vld [vmem:[%s165] sm:$0xf]
      %v172 = vld [vmem:[%s165 + $0x4] sm:$0xf]
      %v173 = vld [vmem:[%s165 + $0x8] sm:$0xf]
      %v174 = vld [vmem:[%s165 + $0xc] sm:$0xf]
      %v175 = vld [vmem:[%s165 + $0x10] sm:$0xf]
      %v176 = vld [vmem:[%s165 + $0x14] sm:$0xf]
      %v177 = vld [vmem:[%s165 + $0x18] sm:$0xf]
      %v178 = vld [vmem:[%s165 + $0x1c] sm:$0xf]
      %v179 = vld [vmem:[%s165 + $0x20] sm:$0xf]
      %v180 = vld [vmem:[%s165 + $0x24] sm:$0xf]
      %v181 = vld [vmem:[%s165 + $0x28] sm:$0xf]
      %v182 = vld [vmem:[%s165 + $0x2c] sm:$0xf]
      %v183 = vld [vmem:[%s165 + $0x30] sm:$0xf]
      %v184 = vld [vmem:[%s165 + $0x34] sm:$0xf]
      %v185 = vld [vmem:[%s165 + $0x38] sm:$0xf]
      %v186 = vld [vmem:[%s165 + $0x3c] sm:$0xf]
      %v187 = vld [vmem:[%s165 + $0x40] sm:$0xf]
      %v188 = vld [vmem:[%s165 + $0x44] sm:$0xf]
      %v189 = vunpack.c.l.bf16 %v171
      %v190 = vunpack.c.l.bf16 %v172
      %v191 = vunpack.c.l.bf16 %v173
      %v192 = vunpack.c.l.bf16 %v174
      %v193 = vunpack.c.l.bf16 %v175
      %v194 = vunpack.c.l.bf16 %v176
      %v195 = vunpack.c.l.bf16 %v177
      %v196 = vunpack.c.l.bf16 %v178
      %v197 = vunpack.c.l.bf16 %v179
      %v198 = vunpack.c.l.bf16 %v180
      %v199 = vunpack.c.l.bf16 %v181
      %v200 = vunpack.c.l.bf16 %v182
      %v201 = vunpack.c.l.bf16 %v183
      %v202 = vunpack.c.l.bf16 %v184
      %v203 = vunpack.c.l.bf16 %v185
      %v204 = vunpack.c.l.bf16 %v186
      %v205 = vunpack.c.l.bf16 %v187
      %v206 = vunpack.c.l.bf16 %v188
      %v207 = vld [vmem:[%s1] sm:$0x1]
      %v209 = vperm.slane %v207, 0
      %v211 = vmul.f32 %v189, %v209
      %v212 = vmul.f32 %v190, %v209
      %v213 = vmul.f32 %v191, %v209
      %v214 = vmul.f32 %v192, %v209
      %v215 = vmul.f32 %v193, %v209
      %v216 = vmul.f32 %v194, %v209
      %v217 = vmul.f32 %v195, %v209
      %v218 = vmul.f32 %v196, %v209
      %v219 = vmul.f32 %v197, %v209
      %v220 = vmul.f32 %v198, %v209
      %v221 = vmul.f32 %v199, %v209
      %v222 = vmul.f32 %v200, %v209
      %v223 = vmul.f32 %v201, %v209
      %v224 = vmul.f32 %v202, %v209
      %v225 = vmul.f32 %v203, %v209
      %v226 = vmul.f32 %v204, %v209
      %v227 = vmul.f32 %v205, %v209
      %v228 = vmul.f32 %v206, %v209
      %v229 = vld [vmem:[%s2] sm:$0x1]
      %v231 = vperm.slane %v229, 0
      %v233 = vadd.f32 %v211, %v231
      %v234 = vadd.f32 %v212, %v231
      %v235 = vadd.f32 %v213, %v231
      %v236 = vadd.f32 %v214, %v231
      %v237 = vadd.f32 %v215, %v231
      %v238 = vadd.f32 %v216, %v231
      %v239 = vadd.f32 %v217, %v231
      %v240 = vadd.f32 %v218, %v231
      %v241 = vadd.f32 %v219, %v231
      %v242 = vadd.f32 %v220, %v231
      %v243 = vadd.f32 %v221, %v231
      %v244 = vadd.f32 %v222, %v231
      %v245 = vadd.f32 %v223, %v231
      %v246 = vadd.f32 %v224, %v231
      %v247 = vadd.f32 %v225, %v231
      %v248 = vadd.f32 %v226, %v231
      %v249 = vadd.f32 %v227, %v231
      %v250 = vadd.f32 %v228, %v231
      %v251 = vmax.f32 %v233, 0.0
      %v252 = vmax.f32 %v234, 0.0
      %v253 = vmax.f32 %v235, 0.0
      %v254 = vmax.f32 %v236, 0.0
      %v255 = vmax.f32 %v237, 0.0
      %v256 = vmax.f32 %v238, 0.0
      %v257 = vmax.f32 %v239, 0.0
      %v258 = vmax.f32 %v240, 0.0
      %v259 = vmax.f32 %v241, 0.0
      %v260 = vmax.f32 %v242, 0.0
      %v261 = vmax.f32 %v243, 0.0
      %v262 = vmax.f32 %v244, 0.0
      %v263 = vmax.f32 %v245, 0.0
      %v264 = vmax.f32 %v246, 0.0
      %v265 = vmax.f32 %v247, 0.0
      %v266 = vmax.f32 %v248, 0.0
      %v267 = vmax.f32 %v249, 0.0
      %v268 = vmax.f32 %v250, 0.0
      %vm269 = vcmask 64512
      %270 = vst.msk [vmem:[%s170] sm:$0xff] %vm269, %v251
      %271 = vst.msk [vmem:[%s170 + $0x8] sm:$0xff] %vm269, %v252
      %272 = vst.msk [vmem:[%s170 + $0x10] sm:$0xff] %vm269, %v253
      %273 = vst.msk [vmem:[%s170 + $0x18] sm:$0xff] %vm269, %v254
      %274 = vst.msk [vmem:[%s170 + $0x20] sm:$0xff] %vm269, %v255
      %275 = vst.msk [vmem:[%s170 + $0x28] sm:$0xff] %vm269, %v256
      %276 = vst.msk [vmem:[%s170 + $0x30] sm:$0xff] %vm269, %v257
      %277 = vst.msk [vmem:[%s170 + $0x38] sm:$0xff] %vm269, %v258
      %278 = vst.msk [vmem:[%s170 + $0x40] sm:$0xff] %vm269, %v259
      %279 = vst.msk [vmem:[%s170 + $0x48] sm:$0xff] %vm269, %v260
      %280 = vst.msk [vmem:[%s170 + $0x50] sm:$0xff] %vm269, %v261
      %281 = vst.msk [vmem:[%s170 + $0x58] sm:$0xff] %vm269, %v262
      %282 = vst.msk [vmem:[%s170 + $0x60] sm:$0xff] %vm269, %v263
      %283 = vst.msk [vmem:[%s170 + $0x68] sm:$0xff] %vm269, %v264
      %284 = vst.msk [vmem:[%s170 + $0x70] sm:$0xff] %vm269, %v265
      %285 = vst.msk [vmem:[%s170 + $0x78] sm:$0xff] %vm269, %v266
      %286 = vst.msk [vmem:[%s170 + $0x80] sm:$0xff] %vm269, %v267
      %287 = vst.msk [vmem:[%s170 + $0x88] sm:$0xff] %vm269, %v268
      %p288 = scmp.lt.s32.totalorder %s14, 1
      %s289 = scalar_select %p288, %s14, 1
      %s290 = smul.addr %s289, 18
      %s291 = smul.addr %s290, 8
      %s292 = scalar_lea.vmem %s3, %s291
      // Predicated region
      $region33: #{double_conv_forward.5} parent=31 // pred_check
        %p293 = pneg %p100
      $region34: #{double_conv_forward.5} parent=31 // pred_check_branch
        %295 = sbr.rel (%p293) target = $region36
      $region35: #{double_conv_forward.5} parent=31 // pred_region
        _
      $region36: #{double_conv_forward.5} parent=31 // pred_fallthru
        _
    $region32: #{double_conv_forward.5} parent=5 // pred_fallthru
      _
    %p296 = scmp.le.s32.totalorder 2, %s9
    // Predicated region
    $region37: #{double_conv_forward.5} parent=5 // pred_check
      %p297 = pneg %p296
    $region38: #{double_conv_forward.5} parent=5 // pred_check_branch
      %299 = sbr.rel (%p297) target = $region40
    $region39: #{double_conv_forward.5} parent=5 // pred_region
      %s300 = ssub.s32 %s9, 2
      // Predicated region
      $region41: #{double_conv_forward.5} parent=39 // pred_check
        %p301 = pneg %p106
      $region42: #{double_conv_forward.5} parent=39 // pred_check_branch
        %303 = sbr.rel (%p301) target = $region44
      $region43: #{double_conv_forward.5} parent=39 // pred_region
        %p304 = scmp.lt.s32.totalorder %s15, 1
        %s305 = scalar_select %p304, %s15, 1
        %s306 = smul.addr %s305, 18
        %s307 = smul.addr %s306, 8
        %s308 = scalar_lea.vmem %s3, %s307
      $region44: #{double_conv_forward.5} parent=39 // pred_fallthru
        _
    $region40: #{double_conv_forward.5} parent=5 // pred_fallthru
      _
  $region6: #{double_conv_forward.5} parent=0 // loop_footer
    %s13 = sadd.s32 1, %s9
  $region7: #{double_conv_forward.5} parent=0 // loop_footer_branch
    %8 = sbr.rel target = $region3
  $region8: #{double_conv_forward.5} parent=0 // loop_exit
    _

// kernel: double_conv_forward.3
$region0: #{double_conv_forward.3}
  #allocation0 [shape = 'u32[]', space=smem, size = 0x4, offset = 0x4, fixed_abs, tag = 'smem constant byte address 0x4 - core index']
  #allocation1 [shape = 'u32[72,128]{1,0:T(1,128)}', space=vmem, size = 0x9000, scoped, tag = 'internal scratch']
  %s0 = inlined_call_operand.vmem [shape: f32[2,16,16,4], index: 0, kind: input, shape index: {}]
  %s1 = inlined_call_operand.vmem [shape: bf16[36,128], index: 1, kind: input, shape index: {}]
  %s2 = inlined_call_operand.vmem [shape: bf16[2,196,128], index: 2, kind: output, shape index: {0}]
  %s3 = inlined_call_operand.vmem [shape: f32[2,1,128], index: 3, kind: output, shape index: {1}]
  %s4 = inlined_call_operand.vmem [shape: f32[2,1,128], index: 4, kind: output, shape index: {2}]
  %5 = xla_tuple %s2, %s3, %s4
  %s6 = sld [smem:[#allocation0]]
  $region61: #{double_conv_forward.3} parent=0
    _
  %s8 = ssub.s32 1, %s6
  %s9 = scalar_select 0, %s8, %s6
  loop: start=0, step=1, limit=4
  $region2: #{double_conv_forward.3} parent=0 // loop_pre_header
    _
  $region3: #{double_conv_forward.3} parent=0 // loop_header
    %s11 = sphi 0, %s15
    %p12 = scmp.ge.s32.totalorder %s11, 4
    %s18 = sphi 0, %s30
    %s19 = sphi 0, %s26
    %s20 = sphi 0, %s18
    %s21 = sphi 0, %s19
    %s22 = sphi 0, %s20
    %s23 = sphi 0, %s21
    %s35 = sphi 0, %s37
    %s38 = sphi 0, %s35
    %s39 = sphi 0, %s38
    %s55 = sphi 0, %s39
    %s59 = sphi 0, %s59
    %s61 = sphi 0, %s59
    %s62 = sphi 0, %s61
    %s76 = sphi 0, %s62
    %s84 = sphi 0, %s86
    %s87 = sphi 0, %s84
    %s88 = sphi 0, %s87
    %s104 = sphi 0, %s88
    %s110 = sphi 0, %s112
    %s113 = sphi 0, %s110
    %s114 = sphi 0, %s113
    %s130 = sphi 0, %s114
    %s136 = sphi 0, %s138
    %s139 = sphi 0, %s136
    %s140 = sphi 0, %s139
    %s156 = sphi 0, %s140
  $region4: #{double_conv_forward.3} parent=0 // loop_header_branch
    %14 = sbr.rel (%p12) target = $region8
  $region5: #{double_conv_forward.3} parent=0 // loop_body
    %s16 = ssub.s32 %s11, 1
    %s17 = ssub.s32 %s11, 2
    %s24 = sadd.s32 1, %s19
    %p25 = scmp.ge.s32.totalorder %s24, 1
    %s26 = scalar_select %p25, 0, %s24
    %s27 = sadd.s32 1, %s18
    %s28 = scalar_select %p25, %s27, %s18
    %p29 = scmp.ge.s32.totalorder %s28, 2
    %s30 = scalar_select %p29, 0, %s28
    %s31 = sadd.s32 %s18, %s19
    %s32 = sadd.s32 %s30, %s26
    %s33 = ssub.s32 %s31, %s32
    %p34 = scmp.eq.s32.totalorder %s33, 0
    %s36 = sadd.s32 %s35, 1
    %s37 = scalar_select %p34, %s35, %s36
    %p40 = pneg %p34
    %p41 = scmp.eq.s32.totalorder %s11, 1
    %p42 = por %p40, %p41
    %p43 = scmp.ne.s32.totalorder %s35, %s38
    %p44 = scmp.eq.s32.totalorder %s11, 0
    %p45 = por %p43, %p44
    %p46 = scmp.ne.s32.totalorder %s35, %s38
    %p47 = scmp.eq.s32.totalorder %s16, 1
    %p48 = por %p46, %p47
    %p49 = scmp.ne.s32.totalorder %s38, %s39
    %p50 = scmp.eq.s32.totalorder %s16, 0
    %p51 = por %p49, %p50
    %p52 = scmp.ne.s32.totalorder %s38, %s39
    %p53 = scmp.eq.s32.totalorder %s17, 1
    %p54 = por %p52, %p53
    %p56 = scmp.ne.s32.totalorder %s39, %s55
    %p57 = scmp.eq.s32.totalorder %s17, 0
    %p58 = por %p56, %p57
    %s60 = sadd.s32 %s59, 1
    %p63 = scmp.eq.s32.totalorder %s11, 1
    %p64 = scmp.ne.s32.totalorder %s59, %s61
    %p65 = scmp.eq.s32.totalorder %s11, 0
    %p66 = por %p64, %p65
    %p67 = scmp.ne.s32.totalorder %s59, %s61
    %p68 = scmp.eq.s32.totalorder %s16, 1
    %p69 = por %p67, %p68
    %p70 = scmp.ne.s32.totalorder %s61, %s62
    %p71 = scmp.eq.s32.totalorder %s16, 0
    %p72 = por %p70, %p71
    %p73 = scmp.ne.s32.totalorder %s61, %s62
    %p74 = scmp.eq.s32.totalorder %s17, 1
    %p75 = por %p73, %p74
    %p77 = scmp.ne.s32.totalorder %s62, %s76
    %p78 = scmp.eq.s32.totalorder %s17, 0
    %p79 = por %p77, %p78
    %s80 = sadd.s32 %s18, %s19
    %s81 = sadd.s32 %s30, %s26
    %s82 = ssub.s32 %s80, %s81
    %p83 = scmp.eq.s32.totalorder %s82, 0
    %s85 = sadd.s32 %s84, 1
    %s86 = scalar_select %p83, %s84, %s85
    %p89 = pneg %p83
    %p90 = scmp.eq.s32.totalorder %s11, 1
    %p91 = por %p89, %p90
    %p92 = scmp.ne.s32.totalorder %s84, %s87
    %p93 = scmp.eq.s32.totalorder %s11, 0
    %p94 = por %p92, %p93
    %p95 = scmp.ne.s32.totalorder %s84, %s87
    %p96 = scmp.eq.s32.totalorder %s16, 1
    %p97 = por %p95, %p96
    %p98 = scmp.ne.s32.totalorder %s87, %s88
    %p99 = scmp.eq.s32.totalorder %s16, 0
    %p100 = por %p98, %p99
    %p101 = scmp.ne.s32.totalorder %s87, %s88
    %p102 = scmp.eq.s32.totalorder %s17, 1
    %p103 = por %p101, %p102
    %p105 = scmp.ne.s32.totalorder %s88, %s104
    %p106 = scmp.eq.s32.totalorder %s17, 0
    %p107 = por %p105, %p106
    %s108 = ssub.s32 %s18, %s30
    %p109 = scmp.eq.s32.totalorder %s108, 0
    %s111 = sadd.s32 %s110, 1
    %s112 = scalar_select %p109, %s110, %s111
    %p115 = pneg %p109
    %p116 = scmp.eq.s32.totalorder %s11, 1
    %p117 = por %p115, %p116
    %p118 = scmp.ne.s32.totalorder %s110, %s113
    %p119 = scmp.eq.s32.totalorder %s11, 0
    %p120 = por %p118, %p119
    %p121 = scmp.ne.s32.totalorder %s110, %s113
    %p122 = scmp.eq.s32.totalorder %s16, 1
    %p123 = por %p121, %p122
    %p124 = scmp.ne.s32.totalorder %s113, %s114
    %p125 = scmp.eq.s32.totalorder %s16, 0
    %p126 = por %p124, %p125
    %p127 = scmp.ne.s32.totalorder %s113, %s114
    %p128 = scmp.eq.s32.totalorder %s17, 1
    %p129 = por %p127, %p128
    %p131 = scmp.ne.s32.totalorder %s114, %s130
    %p132 = scmp.eq.s32.totalorder %s17, 0
    %p133 = por %p131, %p132
    %s134 = ssub.s32 %s18, %s30
    %p135 = scmp.eq.s32.totalorder %s134, 0
    %s137 = sadd.s32 %s136, 1
    %s138 = scalar_select %p135, %s136, %s137
    %p141 = pneg %p135
    %p142 = scmp.eq.s32.totalorder %s11, 1
    %p143 = por %p141, %p142
    %p144 = scmp.ne.s32.totalorder %s136, %s139
    %p145 = scmp.eq.s32.totalorder %s11, 0
    %p146 = por %p144, %p145
    %p147 = scmp.ne.s32.totalorder %s136, %s139
    %p148 = scmp.eq.s32.totalorder %s16, 1
    %p149 = por %p147, %p148
    %p150 = scmp.ne.s32.totalorder %s139, %s140
    %p151 = scmp.eq.s32.totalorder %s16, 0
    %p152 = por %p150, %p151
    %p153 = scmp.ne.s32.totalorder %s139, %s140
    %p154 = scmp.eq.s32.totalorder %s17, 1
    %p155 = por %p153, %p154
    %p157 = scmp.ne.s32.totalorder %s140, %s156
    %p158 = scmp.eq.s32.totalorder %s17, 0
    %p159 = por %p157, %p158
    %p160 = scmp.le.s32.totalorder 1, %s11
    %p161 = scmp.lt.s32.totalorder %s11, 3
    %p162 = pnand %p160, %p161
    %p163 = pneg %p162
    // Predicated region
    $region9: #{double_conv_forward.3} parent=5 // pred_check
      _
    $region10: #{double_conv_forward.3} parent=5 // pred_check_branch
      %165 = sbr.rel (%p162) target = $region12
    $region11: #{double_conv_forward.3} parent=5 // pred_region
      %s166 = ssub.s32 %s11, 1
      // Predicated region
      $region13: #{double_conv_forward.3} parent=11 // pred_check
        %p167 = pneg %p72
      $region14: #{double_conv_forward.3} parent=11 // pred_check_branch
        %169 = sbr.rel (%p167) target = $region16
      $region15: #{double_conv_forward.3} parent=11 // pred_region
        _
      $region16: #{double_conv_forward.3} parent=11 // pred_fallthru
        _
    $region12: #{double_conv_forward.3} parent=5 // pred_fallthru
      _
    %p170 = scmp.lt.s32.totalorder %s11, 2
    // Predicated region
    $region17: #{double_conv_forward.3} parent=5 // pred_check
      %p171 = pneg %p170
    $region18: #{double_conv_forward.3} parent=5 // pred_check_branch
      %173 = sbr.rel (%p171) target = $region20
    $region19: #{double_conv_forward.3} parent=5 // pred_region
      // Predicated region
      $region21: #{double_conv_forward.3} parent=19 // pred_check
        %p174 = pneg %p45
      $region22: #{double_conv_forward.3} parent=19 // pred_check_branch
        %176 = sbr.rel (%p174) target = $region24
      $region23: #{double_conv_forward.3} parent=19 // pred_region
        %s177 = sadd.s32 %s18, %s19
        %p178 = scmp.lt.s32.totalorder %s177, 1
        %s179 = scalar_select %p178, %s177, 1
        %s180 = smul.addr %s179, 32
        %s181 = smul.addr %s180, 8
        %s182 = scalar_lea.vmem %s0, %s181
        %s183 = sadd.s32 %s18, %s19
      $region24: #{double_conv_forward.3} parent=19 // pred_fallthru
        _
    $region20: #{double_conv_forward.3} parent=5 // pred_fallthru
      _
    %p184 = scmp.le.s32.totalorder 1, %s11
    %p185 = scmp.lt.s32.totalorder %s11, 3
    %p186 = pnand %p184, %p185
    %p187 = pneg %p186
    // Predicated region
    $region25: #{double_conv_forward.3} parent=5 // pred_check
      _
    $region26: #{double_conv_forward.3} parent=5 // pred_check_branch
      %189 = sbr.rel (%p186) target = $region28
    $region27: #{double_conv_forward.3} parent=5 // pred_region
      %s190 = ssub.s32 %s11, 1
      %s191 = sadd.s32 %s20, %s21
      %p192 = scmp.lt.s32.totalorder %s191, 1
      %s193 = scalar_select %p192, %s191, 1
      %s194 = smul.addr %s193, 32
      %s195 = smul.addr %s194, 8
      %s196 = scalar_lea.vmem %s0, %s195
      %p197 = pneg %p51
      %p198 = pneg %p48
      %p199 = pneg %p72
      %p200 = pneg %p69
      %p201 = pneg %p100
      %p202 = pneg %p97
      %s203 = sadd.s32 %s20, %s21
      %p204 = scmp.lt.s32.totalorder %s203, 1
      %s205 = scalar_select %p204, %s203, 1
      %s206 = smul.addr %s205, 25
      %s207 = smul.addr %s206, 4
      %s208 = scalar_lea.vmem %s2, %s207
      %p209 = pneg %p126
      %p210 = pneg %p123
      %p211 = scmp.lt.s32.totalorder %s20, 1
      %s212 = scalar_select %p211, %s20, 1
      %s213 = scalar_lea.vmem %s3, %s212
      %p214 = pneg %p152
      %p215 = pneg %p149
      %p216 = scmp.lt.s32.totalorder %s20, 1
      %s217 = scalar_select %p216, %s20, 1
      %s218 = scalar_lea.vmem %s4, %s217
      %s219 = sadd.s32 %s20, %s21
      %p220 = scmp.lt.s32.totalorder %s219, 1
      %s221 = scalar_select %p220, %s219, 1
      %s222 = smul.addr %s221, 32
      %s223 = smul.addr %s222, 8
      %s224 = scalar_lea.vmem %s0, %s223
      %s225 = sadd.s32 %s20, %s21
      %s226 = sadd.s32 %s20, %s21
      %p227 = scmp.lt.s32.totalorder %s226, 1
      %s228 = scalar_select %p227, %s226, 1
      %s229 = smul.addr %s228, 25
      %s230 = smul.addr %s229, 4
      %s231 = scalar_lea.vmem %s2, %s230
      %s232 = sadd.s32 %s20, %s21
      %p233 = scmp.lt.s32.totalorder %s20, 1
      %s234 = scalar_select %p233, %s20, 1
      %s235 = scalar_lea.vmem %s3, %s234
      %p236 = scmp.lt.s32.totalorder %s20, 1
      %s237 = scalar_select %p236, %s20, 1
      %s238 = scalar_lea.vmem %s4, %s237
      %v240 = vld [vmem:[%s224] sm:$0xff]
      %v241 = vld [vmem:[%s224 + $0x8] sm:$0xff]
      %v242 = vld [vmem:[%s224 + $0x10] sm:$0xff]
      %v243 = vld [vmem:[%s224 + $0x18] sm:$0xff]
      %v244 = vld [vmem:[%s224 + $0x20] sm:$0xff]
      %v245 = vld [vmem:[%s224 + $0x28] sm:$0xff]
      %v246 = vld [vmem:[%s224 + $0x30] sm:$0xff]
      %v247 = vld [vmem:[%s224 + $0x38] sm:$0xff]
      %v248 = vld [vmem:[%s224 + $0x40] sm:$0xff]
      %v249 = vld [vmem:[%s224 + $0x48] sm:$0xff]
      %v250 = vld [vmem:[%s224 + $0x50] sm:$0xff]
      %v251 = vld [vmem:[%s224 + $0x58] sm:$0xff]
      %v252 = vld [vmem:[%s224 + $0x60] sm:$0xff]
      %v253 = vld [vmem:[%s224 + $0x68] sm:$0xff]
      %v254 = vld [vmem:[%s224 + $0x70] sm:$0xff]
      %v255 = vld [vmem:[%s224 + $0x78] sm:$0xff]
      %v256 = vld [vmem:[%s224 + $0x80] sm:$0xff]
      %v257 = vld [vmem:[%s224 + $0x88] sm:$0xff]
      %v258 = vld [vmem:[%s224 + $0x90] sm:$0xff]
      %v259 = vld [vmem:[%s224 + $0x98] sm:$0xff]
      %v260 = vld [vmem:[%s224 + $0xa0] sm:$0xff]
      %v261 = vld [vmem:[%s224 + $0xa8] sm:$0xff]
      %v262 = vld [vmem:[%s224 + $0xb0] sm:$0xff]
      %v263 = vld [vmem:[%s224 + $0xb8] sm:$0xff]
      %v264 = vld [vmem:[%s224 + $0xc0] sm:$0xff]
      %v265 = vld [vmem:[%s224 + $0xc8] sm:$0xff]
      %v266 = vld [vmem:[%s224 + $0xd0] sm:$0xff]
      %v267 = vld [vmem:[%s224 + $0xd8] sm:$0xff]
      %v268 = vld [vmem:[%s224 + $0xe0] sm:$0xff]
      %v269 = vld [vmem:[%s224 + $0xe8] sm:$0xff]
      %v270 = vld [vmem:[%s224 + $0xf0] sm:$0xff]
      %v271 = vld [vmem:[%s224 + $0xf8] sm:$0xff]
      %vm300 = vcmask 1046528
      %v301 = vrot.slane %v240, 1
      %v302 = vrot.slane %v241, 1
      %v303 = vsel %vm300, %v301, %v302
      %v304 = vrot.slane %v242, 1
      %v305 = vrot.slane %v243, 1
      %v306 = vsel %vm300, %v304, %v305
      %v307 = vrot.slane %v244, 1
      %v308 = vrot.slane %v245, 1
      %v309 = vsel %vm300, %v307, %v308
      %v310 = vrot.slane %v246, 1
      %v311 = vrot.slane %v247, 1
      %v312 = vsel %vm300, %v310, %v311
      %v313 = vrot.slane %v248, 1
      %v314 = vrot.slane %v249, 1
      %v315 = vsel %vm300, %v313, %v314
      %v316 = vrot.slane %v250, 1
      %v317 = vrot.slane %v251, 1
      %v318 = vsel %vm300, %v316, %v317
      %v319 = vrot.slane %v252, 1
      %v320 = vrot.slane %v253, 1
      %v321 = vsel %vm300, %v319, %v320
      %v322 = vrot.slane %v254, 1
      %v323 = vrot.slane %v255, 1
      %v324 = vsel %vm300, %v322, %v323
      %v325 = vrot.slane %v256, 1
      %v326 = vrot.slane %v257, 1
      %v327 = vsel %vm300, %v325, %v326
      %v328 = vrot.slane %v258, 1
      %v329 = vrot.slane %v259, 1
      %v330 = vsel %vm300, %v328, %v329
      %v331 = vrot.slane %v260, 1
      %v332 = vrot.slane %v261, 1
      %v333 = vsel %vm300, %v331, %v332
      %v334 = vrot.slane %v262, 1
      %v335 = vrot.slane %v263, 1
      %v336 = vsel %vm300, %v334, %v335
      %v337 = vrot.slane %v264, 1
      %v338 = vrot.slane %v265, 1
      %v339 = vsel %vm300, %v337, %v338
      %v340 = vrot.slane %v266, 1
      %v341 = vrot.slane %v267, 1
      %v342 = vsel %vm300, %v340, %v341
      %343 = vrot.lane.b32.xlu0 %v303, 4
      %v344 = vpop.permute.xlu0 %343
      %345 = vrot.lane.b32.xlu0 %v302, 4
      %v346 = vpop.permute.xlu0 %345
      %347 = vrot.lane.b32.xlu0 %v306, 4
      %v348 = vpop.permute.xlu0 %347
      %349 = vrot.lane.b32.xlu0 %v305, 4
      %v350 = vpop.permute.xlu0 %349
      %351 = vrot.lane.b32.xlu0 %v309, 4
      %v352 = vpop.permute.xlu0 %351
      %353 = vrot.lane.b32.xlu0 %v308, 4
      %v354 = vpop.permute.xlu0 %353
      %355 = vrot.lane.b32.xlu0 %v312, 4
      %v356 = vpop.permute.xlu0 %355
      %357 = vrot.lane.b32.xlu0 %v311, 4
      %v358 = vpop.permute.xlu0 %357
      %359 = vrot.lane.b32.xlu0 %v315, 4
      %v360 = vpop.permute.xlu0 %359
      %361 = vrot.lane.b32.xlu0 %v314, 4
      %v362 = vpop.permute.xlu0 %361
      %363 = vrot.lane.b32.xlu0 %v318, 4
      %v364 = vpop.permute.xlu0 %363
      %365 = vrot.lane.b32.xlu0 %v317, 4
      %v366 = vpop.permute.xlu0 %365
      %367 = vrot.lane.b32.xlu0 %v321, 4
      %v368 = vpop.permute.xlu0 %367
      %369 = vrot.lane.b32.xlu0 %v320, 4
      %v370 = vpop.permute.xlu0 %369
      %371 = vrot.lane.b32.xlu0 %v324, 4
      %v372 = vpop.permute.xlu0 %371
      %373 = vrot.lane.b32.xlu0 %v323, 4
      %v374 = vpop.permute.xlu0 %373
      %375 = vrot.lane.b32.xlu0 %v327, 4
      %v376 = vpop.permute.xlu0 %375
      %377 = vrot.lane.b32.xlu0 %v326, 4
      %v378 = vpop.permute.xlu0 %377
      %379 = vrot.lane.b32.xlu0 %v330, 4
      %v380 = vpop.permute.xlu0 %379
      %381 = vrot.lane.b32.xlu0 %v329, 4
      %v382 = vpop.permute.xlu0 %381
      %383 = vrot.lane.b32.xlu0 %v333, 4
      %v384 = vpop.permute.xlu0 %383
      %385 = vrot.lane.b32.xlu0 %v332, 4
      %v386 = vpop.permute.xlu0 %385
      %387 = vrot.lane.b32.xlu0 %v336, 4
      %v388 = vpop.permute.xlu0 %387
      %389 = vrot.lane.b32.xlu0 %v335, 4
      %v390 = vpop.permute.xlu0 %389
      %391 = vrot.lane.b32.xlu0 %v339, 4
      %v392 = vpop.permute.xlu0 %391
      %393 = vrot.lane.b32.xlu0 %v338, 4
      %v394 = vpop.permute.xlu0 %393
      %395 = vrot.lane.b32.xlu0 %v342, 4
      %v396 = vpop.permute.xlu0 %395
      %397 = vrot.lane.b32.xlu0 %v341, 4
      %v398 = vpop.permute.xlu0 %397
      %vm427 = vcmask 1045504
      %v428 = vrot.slane %v240, 2
      %v429 = vrot.slane %v241, 2
      %v430 = vsel %vm427, %v428, %v429
      %v431 = vrot.slane %v242, 2
      %v432 = vrot.slane %v243, 2
      %v433 = vsel %vm427, %v431, %v432
      %v434 = vrot.slane %v244, 2
      %v435 = vrot.slane %v245, 2
      %v436 = vsel %vm427, %v434, %v435
      %v437 = vrot.slane %v246, 2
      %v438 = vrot.slane %v247, 2
      %v439 = vsel %vm427, %v437, %v438
      %v440 = vrot.slane %v248, 2
      %v441 = vrot.slane %v249, 2
      %v442 = vsel %vm427, %v440, %v441
      %v443 = vrot.slane %v250, 2
      %v444 = vrot.slane %v251, 2
      %v445 = vsel %vm427, %v443, %v444
      %v446 = vrot.slane %v252, 2
      %v447 = vrot.slane %v253, 2
      %v448 = vsel %vm427, %v446, %v447
      %v449 = vrot.slane %v254, 2
      %v450 = vrot.slane %v255, 2
      %v451 = vsel %vm427, %v449, %v450
      %v452 = vrot.slane %v256, 2
      %v453 = vrot.slane %v257, 2
      %v454 = vsel %vm427, %v452, %v453
      %v455 = vrot.slane %v258, 2
      %v456 = vrot.slane %v259, 2
      %v457 = vsel %vm427, %v455, %v456
      %v458 = vrot.slane %v260, 2
      %v459 = vrot.slane %v261, 2
      %v460 = vsel %vm427, %v458, %v459
      %v461 = vrot.slane %v262, 2
      %v462 = vrot.slane %v263, 2
      %v463 = vsel %vm427, %v461, %v462
      %v464 = vrot.slane %v264, 2
      %v465 = vrot.slane %v265, 2
      %v466 = vsel %vm427, %v464, %v465
      %v467 = vrot.slane %v266, 2
      %v468 = vrot.slane %v267, 2
      %v469 = vsel %vm427, %v467, %v468
      %470 = vrot.lane.b32.xlu0 %v430, 8
      %v471 = vpop.permute.xlu0 %470
      %472 = vrot.lane.b32.xlu0 %v429, 8
      %v473 = vpop.permute.xlu0 %472
      %474 = vrot.lane.b32.xlu0 %v433, 8
      %v475 = vpop.permute.xlu0 %474
      %476 = vrot.lane.b32.xlu0 %v432, 8
      %v477 = vpop.permute.xlu0 %476
      %478 = vrot.lane.b32.xlu0 %v436, 8
      %v479 = vpop.permute.xlu0 %478
      %480 = vrot.lane.b32.xlu0 %v435, 8
      %v481 = vpop.permute.xlu0 %480
      %482 = vrot.lane.b32.xlu0 %v439, 8
      %v483 = vpop.permute.xlu0 %482
      %484 = vrot.lane.b32.xlu0 %v438, 8
      %v485 = vpop.permute.xlu0 %484
      %486 = vrot.lane.b32.xlu0 %v442, 8
      %v487 = vpop.permute.xlu0 %486
      %488 = vrot.lane.b32.xlu0 %v441, 8
      %v489 = vpop.permute.xlu0 %488
      %490 = vrot.lane.b32.xlu0 %v445, 8
      %v491 = vpop.permute.xlu0 %490
      %492 = vrot.lane.b32.xlu0 %v444, 8
      %v493 = vpop.permute.xlu0 %492
      %494 = vrot.lane.b32.xlu0 %v448, 8
      %v495 = vpop.permute.xlu0 %494
      %496 = vrot.lane.b32.xlu0 %v447, 8
      %v497 = vpop.permute.xlu0 %496
      %498 = vrot.lane.b32.xlu0 %v451, 8
      %v499 = vpop.permute.xlu0 %498
      %500 = vrot.lane.b32.xlu0 %v450, 8
      %v501 = vpop.permute.xlu0 %500
      %502 = vrot.lane.b32.xlu0 %v454, 8
      %v503 = vpop.permute.xlu0 %502
      %504 = vrot.lane.b32.xlu0 %v453, 8
      %v505 = vpop.permute.xlu0 %504
      %506 = vrot.lane.b32.xlu0 %v457, 8
      %v507 = vpop.permute.xlu0 %506
      %508 = vrot.lane.b32.xlu0 %v456, 8
      %v509 = vpop.permute.xlu0 %508
      %510 = vrot.lane.b32.xlu0 %v460, 8
      %v511 = vpop.permute.xlu0 %510
      %512 = vrot.lane.b32.xlu0 %v459, 8
      %v513 = vpop.permute.xlu0 %512
      %514 = vrot.lane.b32.xlu0 %v463, 8
      %v515 = vpop.permute.xlu0 %514
      %516 = vrot.lane.b32.xlu0 %v462, 8
      %v517 = vpop.permute.xlu0 %516
      %518 = vrot.lane.b32.xlu0 %v466, 8
      %v519 = vpop.permute.xlu0 %518
      %520 = vrot.lane.b32.xlu0 %v465, 8
      %v521 = vpop.permute.xlu0 %520
      %522 = vrot.lane.b32.xlu0 %v469, 8
      %v523 = vpop.permute.xlu0 %522
      %524 = vrot.lane.b32.xlu0 %v468, 8
      %v525 = vpop.permute.xlu0 %524
      %556 = vrot.lane.b32.xlu0 %v242, 12
      %v557 = vpop.permute.xlu0 %556
      %558 = vrot.lane.b32.xlu0 %v243, 12
      %v559 = vpop.permute.xlu0 %558
      %560 = vrot.lane.b32.xlu0 %v244, 12
      %v561 = vpop.permute.xlu0 %560
      %562 = vrot.lane.b32.xlu0 %v245, 12
      %v563 = vpop.permute.xlu0 %562
      %564 = vrot.lane.b32.xlu0 %v246, 12
      %v565 = vpop.permute.xlu0 %564
      %566 = vrot.lane.b32.xlu0 %v247, 12
      %v567 = vpop.permute.xlu0 %566
      %568 = vrot.lane.b32.xlu0 %v248, 12
      %v569 = vpop.permute.xlu0 %568
      %570 = vrot.lane.b32.xlu0 %v249, 12
      %v571 = vpop.permute.xlu0 %570
      %572 = vrot.lane.b32.xlu0 %v250, 12
      %v573 = vpop.permute.xlu0 %572
      %574 = vrot.lane.b32.xlu0 %v251, 12
      %v575 = vpop.permute.xlu0 %574
      %576 = vrot.lane.b32.xlu0 %v252, 12
      %v577 = vpop.permute.xlu0 %576
      %578 = vrot.lane.b32.xlu0 %v253, 12
      %v579 = vpop.permute.xlu0 %578
      %580 = vrot.lane.b32.xlu0 %v254, 12
      %v581 = vpop.permute.xlu0 %580
      %582 = vrot.lane.b32.xlu0 %v255, 12
      %v583 = vpop.permute.xlu0 %582
      %584 = vrot.lane.b32.xlu0 %v256, 12
      %v585 = vpop.permute.xlu0 %584
      %586 = vrot.lane.b32.xlu0 %v257, 12
      %v587 = vpop.permute.xlu0 %586
      %588 = vrot.lane.b32.xlu0 %v258, 12
      %v589 = vpop.permute.xlu0 %588
      %590 = vrot.lane.b32.xlu0 %v259, 12
      %v591 = vpop.permute.xlu0 %590
      %592 = vrot.lane.b32.xlu0 %v260, 12
      %v593 = vpop.permute.xlu0 %592
      %594 = vrot.lane.b32.xlu0 %v261, 12
      %v595 = vpop.permute.xlu0 %594
      %596 = vrot.lane.b32.xlu0 %v262, 12
      %v597 = vpop.permute.xlu0 %596
      %598 = vrot.lane.b32.xlu0 %v263, 12
      %v599 = vpop.permute.xlu0 %598
      %600 = vrot.lane.b32.xlu0 %v264, 12
      %v601 = vpop.permute.xlu0 %600
      %602 = vrot.lane.b32.xlu0 %v265, 12
      %v603 = vpop.permute.xlu0 %602
      %604 = vrot.lane.b32.xlu0 %v266, 12
      %v605 = vpop.permute.xlu0 %604
      %606 = vrot.lane.b32.xlu0 %v267, 12
      %v607 = vpop.permute.xlu0 %606
      %608 = vrot.lane.b32.xlu0 %v268, 12
      %v609 = vpop.permute.xlu0 %608
      %610 = vrot.lane.b32.xlu0 %v269, 12
      %v611 = vpop.permute.xlu0 %610
      %v640 = vrot.slane %v268, 1
      %v641 = vrot.slane %v269, 1
      %v642 = vsel %vm300, %v640, %v641
      %643 = vrot.lane.b32.xlu0 %v306, 16
      %v644 = vpop.permute.xlu0 %643
      %645 = vrot.lane.b32.xlu0 %v305, 16
      %v646 = vpop.permute.xlu0 %645
      %647 = vrot.lane.b32.xlu0 %v309, 16
      %v648 = vpop.permute.xlu0 %647
      %649 = vrot.lane.b32.xlu0 %v308, 16
      %v650 = vpop.permute.xlu0 %649
      %651 = vrot.lane.b32.xlu0 %v312, 16
      %v652 = vpop.permute.xlu0 %651
      %653 = vrot.lane.b32.xlu0 %v311, 16
      %v654 = vpop.permute.xlu0 %653
      %655 = vrot.lane.b32.xlu0 %v315, 16
      %v656 = vpop.permute.xlu0 %655
      %657 = vrot.lane.b32.xlu0 %v314, 16
      %v658 = vpop.permute.xlu0 %657
      %659 = vrot.lane.b32.xlu0 %v318, 16
      %v660 = vpop.permute.xlu0 %659
      %661 = vrot.lane.b32.xlu0 %v317, 16
      %v662 = vpop.permute.xlu0 %661
      %663 = vrot.lane.b32.xlu0 %v321, 16
      %v664 = vpop.permute.xlu0 %663
      %665 = vrot.lane.b32.xlu0 %v320, 16
      %v666 = vpop.permute.xlu0 %665
      %667 = vrot.lane.b32.xlu0 %v324, 16
      %v668 = vpop.permute.xlu0 %667
      %669 = vrot.lane.b32.xlu0 %v323, 16
      %v670 = vpop.permute.xlu0 %669
      %671 = vrot.lane.b32.xlu0 %v327, 16
      %v672 = vpop.permute.xlu0 %671
      %673 = vrot.lane.b32.xlu0 %v326, 16
      %v674 = vpop.permute.xlu0 %673
      %675 = vrot.lane.b32.xlu0 %v330, 16
      %v676 = vpop.permute.xlu0 %675
      %677 = vrot.lane.b32.xlu0 %v329, 16
      %v678 = vpop.permute.xlu0 %677
      %679 = vrot.lane.b32.xlu0 %v333, 16
      %v680 = vpop.permute.xlu0 %679
      %681 = vrot.lane.b32.xlu0 %v332, 16
      %v682 = vpop.permute.xlu0 %681
      %683 = vrot.lane.b32.xlu0 %v336, 16
      %v684 = vpop.permute.xlu0 %683
      %685 = vrot.lane.b32.xlu0 %v335, 16
      %v686 = vpop.permute.xlu0 %685
      %687 = vrot.lane.b32.xlu0 %v339, 16
      %v688 = vpop.permute.xlu0 %687
      %689 = vrot.lane.b32.xlu0 %v338, 16
      %v690 = vpop.permute.xlu0 %689
      %691 = vrot.lane.b32.xlu0 %v342, 16
      %v692 = vpop.permute.xlu0 %691
      %693 = vrot.lane.b32.xlu0 %v341, 16
      %v694 = vpop.permute.xlu0 %693
      %695 = vrot.lane.b32.xlu0 %v642, 16
      %v696 = vpop.permute.xlu0 %695
      %697 = vrot.lane.b32.xlu0 %v641, 16
      %v698 = vpop.permute.xlu0 %697
      %v727 = vrot.slane %v268, 2
      %v728 = vrot.slane %v269, 2
      %v729 = vsel %vm427, %v727, %v728
      %730 = vrot.lane.b32.xlu0 %v433, 20
      %v731 = vpop.permute.xlu0 %730
      %732 = vrot.lane.b32.xlu0 %v432, 20
      %v733 = vpop.permute.xlu0 %732
      %734 = vrot.lane.b32.xlu0 %v436, 20
      %v735 = vpop.permute.xlu0 %734
      %736 = vrot.lane.b32.xlu0 %v435, 20
      %v737 = vpop.permute.xlu0 %736
      %738 = vrot.lane.b32.xlu0 %v439, 20
      %v739 = vpop.permute.xlu0 %738
      %740 = vrot.lane.b32.xlu0 %v438, 20
      %v741 = vpop.permute.xlu0 %740
      %742 = vrot.lane.b32.xlu0 %v442, 20
      %v743 = vpop.permute.xlu0 %742
      %744 = vrot.lane.b32.xlu0 %v441, 20
      %v745 = vpop.permute.xlu0 %744
      %746 = vrot.lane.b32.xlu0 %v445, 20
      %v747 = vpop.permute.xlu0 %746
      %748 = vrot.lane.b32.xlu0 %v444, 20
      %v749 = vpop.permute.xlu0 %748
      %750 = vrot.lane.b32.xlu0 %v448, 20
      %v751 = vpop.permute.xlu0 %750
      %752 = vrot.lane.b32.xlu0 %v447, 20
      %v753 = vpop.permute.xlu0 %752
      %754 = vrot.lane.b32.xlu0 %v451, 20
      %v755 = vpop.permute.xlu0 %754
      %756 = vrot.lane.b32.xlu0 %v450, 20
      %v757 = vpop.permute.xlu0 %756
      %758 = vrot.lane.b32.xlu0 %v454, 20
      %v759 = vpop.permute.xlu0 %758
      %760 = vrot.lane.b32.xlu0 %v453, 20
      %v761 = vpop.permute.xlu0 %760
      %762 = vrot.lane.b32.xlu0 %v457, 20
      %v763 = vpop.permute.xlu0 %762
      %764 = vrot.lane.b32.xlu0 %v456, 20
      %v765 = vpop.permute.xlu0 %764
      %766 = vrot.lane.b32.xlu0 %v460, 20
      %v767 = vpop.permute.xlu0 %766
      %768 = vrot.lane.b32.xlu0 %v459, 20
      %v769 = vpop.permute.xlu0 %768
      %770 = vrot.lane.b32.xlu0 %v463, 20
      %v771 = vpop.permute.xlu0 %770
      %772 = vrot.lane.b32.xlu0 %v462, 20
      %v773 = vpop.permute.xlu0 %772
      %774 = vrot.lane.b32.xlu0 %v466, 20
      %v775 = vpop.permute.xlu0 %774
      %776 = vrot.lane.b32.xlu0 %v465, 20
      %v777 = vpop.permute.xlu0 %776
      %778 = vrot.lane.b32.xlu0 %v469, 20
      %v779 = vpop.permute.xlu0 %778
      %780 = vrot.lane.b32.xlu0 %v468, 20
      %v781 = vpop.permute.xlu0 %780
      %782 = vrot.lane.b32.xlu0 %v729, 20
      %v783 = vpop.permute.xlu0 %782
      %784 = vrot.lane.b32.xlu0 %v728, 20
      %v785 = vpop.permute.xlu0 %784
      %816 = vrot.lane.b32.xlu0 %v244, 24
      %v817 = vpop.permute.xlu0 %816
      %818 = vrot.lane.b32.xlu0 %v245, 24
      %v819 = vpop.permute.xlu0 %818
      %820 = vrot.lane.b32.xlu0 %v246, 24
      %v821 = vpop.permute.xlu0 %820
      %822 = vrot.lane.b32.xlu0 %v247, 24
      %v823 = vpop.permute.xlu0 %822
      %824 = vrot.lane.b32.xlu0 %v248, 24
      %v825 = vpop.permute.xlu0 %824
      %826 = vrot.lane.b32.xlu0 %v249, 24
      %v827 = vpop.permute.xlu0 %826
      %828 = vrot.lane.b32.xlu0 %v250, 24
      %v829 = vpop.permute.xlu0 %828
      %830 = vrot.lane.b32.xlu0 %v251, 24
      %v831 = vpop.permute.xlu0 %830
      %832 = vrot.lane.b32.xlu0 %v252, 24
      %v833 = vpop.permute.xlu0 %832
      %834 = vrot.lane.b32.xlu0 %v253, 24
      %v835 = vpop.permute.xlu0 %834
      %836 = vrot.lane.b32.xlu0 %v254, 24
      %v837 = vpop.permute.xlu0 %836
      %838 = vrot.lane.b32.xlu0 %v255, 24
      %v839 = vpop.permute.xlu0 %838
      %840 = vrot.lane.b32.xlu0 %v256, 24
      %v841 = vpop.permute.xlu0 %840
      %842 = vrot.lane.b32.xlu0 %v257, 24
      %v843 = vpop.permute.xlu0 %842
      %844 = vrot.lane.b32.xlu0 %v258, 24
      %v845 = vpop.permute.xlu0 %844
      %846 = vrot.lane.b32.xlu0 %v259, 24
      %v847 = vpop.permute.xlu0 %846
      %848 = vrot.lane.b32.xlu0 %v260, 24
      %v849 = vpop.permute.xlu0 %848
      %850 = vrot.lane.b32.xlu0 %v261, 24
      %v851 = vpop.permute.xlu0 %850
      %852 = vrot.lane.b32.xlu0 %v262, 24
      %v853 = vpop.permute.xlu0 %852
      %854 = vrot.lane.b32.xlu0 %v263, 24
      %v855 = vpop.permute.xlu0 %854
      %856 = vrot.lane.b32.xlu0 %v264, 24
      %v857 = vpop.permute.xlu0 %856
      %858 = vrot.lane.b32.xlu0 %v265, 24
      %v859 = vpop.permute.xlu0 %858
      %860 = vrot.lane.b32.xlu0 %v266, 24
      %v861 = vpop.permute.xlu0 %860
      %862 = vrot.lane.b32.xlu0 %v267, 24
      %v863 = vpop.permute.xlu0 %862
      %864 = vrot.lane.b32.xlu0 %v268, 24
      %v865 = vpop.permute.xlu0 %864
      %866 = vrot.lane.b32.xlu0 %v269, 24
      %v867 = vpop.permute.xlu0 %866
      %868 = vrot.lane.b32.xlu0 %v270, 24
      %v869 = vpop.permute.xlu0 %868
      %870 = vrot.lane.b32.xlu0 %v271, 24
      %v871 = vpop.permute.xlu0 %870
      %v900 = vrot.slane %v270, 1
      %v901 = vrot.slane %v271, 1
      %v902 = vsel %vm300, %v900, %v901
      %903 = vrot.lane.b32.xlu0 %v309, 28
      %v904 = vpop.permute.xlu0 %903
      %905 = vrot.lane.b32.xlu0 %v308, 28
      %v906 = vpop.permute.xlu0 %905
      %907 = vrot.lane.b32.xlu0 %v312, 28
      %v908 = vpop.permute.xlu0 %907
      %909 = vrot.lane.b32.xlu0 %v311, 28
      %v910 = vpop.permute.xlu0 %909
      %911 = vrot.lane.b32.xlu0 %v315, 28
      %v912 = vpop.permute.xlu0 %911
      %913 = vrot.lane.b32.xlu0 %v314, 28
      %v914 = vpop.permute.xlu0 %913
      %915 = vrot.lane.b32.xlu0 %v318, 28
      %v916 = vpop.permute.xlu0 %915
      %917 = vrot.lane.b32.xlu0 %v317, 28
      %v918 = vpop.permute.xlu0 %917
      %919 = vrot.lane.b32.xlu0 %v321, 28
      %v920 = vpop.permute.xlu0 %919
      %921 = vrot.lane.b32.xlu0 %v320, 28
      %v922 = vpop.permute.xlu0 %921
      %923 = vrot.lane.b32.xlu0 %v324, 28
      %v924 = vpop.permute.xlu0 %923
      %925 = vrot.lane.b32.xlu0 %v323, 28
      %v926 = vpop.permute.xlu0 %925
      %927 = vrot.lane.b32.xlu0 %v327, 28
      %v928 = vpop.permute.xlu0 %927
      %929 = vrot.lane.b32.xlu0 %v326, 28
      %v930 = vpop.permute.xlu0 %929
      %931 = vrot.lane.b32.xlu0 %v330, 28
      %v932 = vpop.permute.xlu0 %931
      %933 = vrot.lane.b32.xlu0 %v329, 28
      %v934 = vpop.permute.xlu0 %933
      %935 = vrot.lane.b32.xlu0 %v333, 28
      %v936 = vpop.permute.xlu0 %935
      %937 = vrot.lane.b32.xlu0 %v332, 28
      %v938 = vpop.permute.xlu0 %937
      %939 = vrot.lane.b32.xlu0 %v336, 28
      %v940 = vpop.permute.xlu0 %939
      %941 = vrot.lane.b32.xlu0 %v335, 28
      %v942 = vpop.permute.xlu0 %941
      %943 = vrot.lane.b32.xlu0 %v339, 28
      %v944 = vpop.permute.xlu0 %943
      %945 = vrot.lane.b32.xlu0 %v338, 28
      %v946 = vpop.permute.xlu0 %945
      %947 = vrot.lane.b32.xlu0 %v342, 28
      %v948 = vpop.permute.xlu0 %947
      %949 = vrot.lane.b32.xlu0 %v341, 28
      %v950 = vpop.permute.xlu0 %949
      %951 = vrot.lane.b32.xlu0 %v642, 28
      %v952 = vpop.permute.xlu0 %951
      %953 = vrot.lane.b32.xlu0 %v641, 28
      %v954 = vpop.permute.xlu0 %953
      %955 = vrot.lane.b32.xlu0 %v902, 28
      %v956 = vpop.permute.xlu0 %955
      %957 = vrot.lane.b32.xlu0 %v901, 28
      %v958 = vpop.permute.xlu0 %957
      %v987 = vrot.slane %v270, 2
      %v988 = vrot.slane %v271, 2
      %v989 = vsel %vm427, %v987, %v988
      %990 = vrot.lane.b32.xlu0 %v436, 32
      %v991 = vpop.permute.xlu0 %990
      %992 = vrot.lane.b32.xlu0 %v435, 32
      %v993 = vpop.permute.xlu0 %992
      %994 = vrot.lane.b32.xlu0 %v439, 32
      %v995 = vpop.permute.xlu0 %994
      %996 = vrot.lane.b32.xlu0 %v438, 32
      %v997 = vpop.permute.xlu0 %996
      %998 = vrot.lane.b32.xlu0 %v442, 32
      %v999 = vpop.permute.xlu0 %998
      %1000 = vrot.lane.b32.xlu0 %v441, 32
      %v1001 = vpop.permute.xlu0 %1000
      %1002 = vrot.lane.b32.xlu0 %v445, 32
      %v1003 = vpop.permute.xlu0 %1002
      %1004 = vrot.lane.b32.xlu0 %v444, 32
      %v1005 = vpop.permute.xlu0 %1004
      %1006 = vrot.lane.b32.xlu0 %v448, 32
      %v1007 = vpop.permute.xlu0 %1006
      %1008 = vrot.lane.b32.xlu0 %v447, 32
      %v1009 = vpop.permute.xlu0 %1008
      %1010 = vrot.lane.b32.xlu0 %v451, 32
      %v1011 = vpop.permute.xlu0 %1010
      %1012 = vrot.lane.b32.xlu0 %v450, 32
      %v1013 = vpop.permute.xlu0 %1012
      %1014 = vrot.lane.b32.xlu0 %v454, 32
      %v1015 = vpop.permute.xlu0 %1014
      %1016 = vrot.lane.b32.xlu0 %v453, 32
      %v1017 = vpop.permute.xlu0 %1016
      %1018 = vrot.lane.b32.xlu0 %v457, 32
      %v1019 = vpop.permute.xlu0 %1018
      %1020 = vrot.lane.b32.xlu0 %v456, 32
      %v1021 = vpop.permute.xlu0 %1020
      %1022 = vrot.lane.b32.xlu0 %v460, 32
      %v1023 = vpop.permute.xlu0 %1022
      %1024 = vrot.lane.b32.xlu0 %v459, 32
      %v1025 = vpop.permute.xlu0 %1024
      %1026 = vrot.lane.b32.xlu0 %v463, 32
      %v1027 = vpop.permute.xlu0 %1026
      %1028 = vrot.lane.b32.xlu0 %v462, 32
      %v1029 = vpop.permute.xlu0 %1028
      %1030 = vrot.lane.b32.xlu0 %v466, 32
      %v1031 = vpop.permute.xlu0 %1030
      %1032 = vrot.lane.b32.xlu0 %v465, 32
      %v1033 = vpop.permute.xlu0 %1032
      %1034 = vrot.lane.b32.xlu0 %v469, 32
      %v1035 = vpop.permute.xlu0 %1034
      %1036 = vrot.lane.b32.xlu0 %v468, 32
      %v1037 = vpop.permute.xlu0 %1036
      %1038 = vrot.lane.b32.xlu0 %v729, 32
      %v1039 = vpop.permute.xlu0 %1038
      %1040 = vrot.lane.b32.xlu0 %v728, 32
      %v1041 = vpop.permute.xlu0 %1040
      %1042 = vrot.lane.b32.xlu0 %v989, 32
      %v1043 = vpop.permute.xlu0 %1042
      %1044 = vrot.lane.b32.xlu0 %v988, 32
      %v1045 = vpop.permute.xlu0 %1044
      %vm1074 = vcmask 31744
      %v1075 = vsel %vm1074, %v240, %v344
      %v1076 = vsel %vm1074, %v241, %v346
      %v1077 = vsel %vm1074, %v242, %v348
      %v1078 = vsel %vm1074, %v243, %v350
      %v1079 = vsel %vm1074, %v244, %v352
      %v1080 = vsel %vm1074, %v245, %v354
      %v1081 = vsel %vm1074, %v246, %v356
      %v1082 = vsel %vm1074, %v247, %v358
      %v1083 = vsel %vm1074, %v248, %v360
      %v1084 = vsel %vm1074, %v249, %v362
      %v1085 = vsel %vm1074, %v250, %v364
      %v1086 = vsel %vm1074, %v251, %v366
      %v1087 = vsel %vm1074, %v252, %v368
      %v1088 = vsel %vm1074, %v253, %v370
      %v1089 = vsel %vm1074, %v254, %v372
      %v1090 = vsel %vm1074, %v255, %v374
      %v1091 = vsel %vm1074, %v256, %v376
      %v1092 = vsel %vm1074, %v257, %v378
      %v1093 = vsel %vm1074, %v258, %v380
      %v1094 = vsel %vm1074, %v259, %v382
      %v1095 = vsel %vm1074, %v260, %v384
      %v1096 = vsel %vm1074, %v261, %v386
      %v1097 = vsel %vm1074, %v262, %v388
      %v1098 = vsel %vm1074, %v263, %v390
      %v1099 = vsel %vm1074, %v264, %v392
      %v1100 = vsel %vm1074, %v265, %v394
      %v1101 = vsel %vm1074, %v266, %v396
      %v1102 = vsel %vm1074, %v267, %v398
      %vm1103 = vcmask 64512
      %v1104 = vsel %vm1103, %v1075, %v471
      %v1105 = vsel %vm1103, %v1076, %v473
      %v1106 = vsel %vm1103, %v1077, %v475
      %v1107 = vsel %vm1103, %v1078, %v477
      %v1108 = vsel %vm1103, %v1079, %v479
      %v1109 = vsel %vm1103, %v1080, %v481
      %v1110 = vsel %vm1103, %v1081, %v483
      %v1111 = vsel %vm1103, %v1082, %v485
      %v1112 = vsel %vm1103, %v1083, %v487
      %v1113 = vsel %vm1103, %v1084, %v489
      %v1114 = vsel %vm1103, %v1085, %v491
      %v1115 = vsel %vm1103, %v1086, %v493
      %v1116 = vsel %vm1103, %v1087, %v495
      %v1117 = vsel %vm1103, %v1088, %v497
      %v1118 = vsel %vm1103, %v1089, %v499
      %v1119 = vsel %vm1103, %v1090, %v501
      %v1120 = vsel %vm1103, %v1091, %v503
      %v1121 = vsel %vm1103, %v1092, %v505
      %v1122 = vsel %vm1103, %v1093, %v507
      %v1123 = vsel %vm1103, %v1094, %v509
      %v1124 = vsel %vm1103, %v1095, %v511
      %v1125 = vsel %vm1103, %v1096, %v513
      %v1126 = vsel %vm1103, %v1097, %v515
      %v1127 = vsel %vm1103, %v1098, %v517
      %v1128 = vsel %vm1103, %v1099, %v519
      %v1129 = vsel %vm1103, %v1100, %v521
      %v1130 = vsel %vm1103, %v1101, %v523
      %v1131 = vsel %vm1103, %v1102, %v525
      %vm1132 = vcmask 97280
      %v1133 = vsel %vm1132, %v1104, %v557
      %v1134 = vsel %vm1132, %v1105, %v559
      %v1135 = vsel %vm1132, %v1106, %v561
      %v1136 = vsel %vm1132, %v1107, %v563
      %v1137 = vsel %vm1132, %v1108, %v565
      %v1138 = vsel %vm1132, %v1109, %v567
      %v1139 = vsel %vm1132, %v1110, %v569
      %v1140 = vsel %vm1132, %v1111, %v571
      %v1141 = vsel %vm1132, %v1112, %v573
      %v1142 = vsel %vm1132, %v1113, %v575
      %v1143 = vsel %vm1132, %v1114, %v577
      %v1144 = vsel %vm1132, %v1115, %v579
      %v1145 = vsel %vm1132, %v1116, %v581
      %v1146 = vsel %vm1132, %v1117, %v583
      %v1147 = vsel %vm1132, %v1118, %v585
      %v1148 = vsel %vm1132, %v1119, %v587
      %v1149 = vsel %vm1132, %v1120, %v589
      %v1150 = vsel %vm1132, %v1121, %v591
      %v1151 = vsel %vm1132, %v1122, %v593
      %v1152 = vsel %vm1132, %v1123, %v595
      %v1153 = vsel %vm1132, %v1124, %v597
      %v1154 = vsel %vm1132, %v1125, %v599
      %v1155 = vsel %vm1132, %v1126, %v601
      %v1156 = vsel %vm1132, %v1127, %v603
      %v1157 = vsel %vm1132, %v1128, %v605
      %v1158 = vsel %vm1132, %v1129, %v607
      %v1159 = vsel %vm1132, %v1130, %v609
      %v1160 = vsel %vm1132, %v1131, %v611
      %vm1161 = vcmask 130048
      %v1162 = vsel %vm1161, %v1133, %v644
      %v1163 = vsel %vm1161, %v1134, %v646
      %v1164 = vsel %vm1161, %v1135, %v648
      %v1165 = vsel %vm1161, %v1136, %v650
      %v1166 = vsel %vm1161, %v1137, %v652
      %v1167 = vsel %vm1161, %v1138, %v654
      %v1168 = vsel %vm1161, %v1139, %v656
      %v1169 = vsel %vm1161, %v1140, %v658
      %v1170 = vsel %vm1161, %v1141, %v660
      %v1171 = vsel %vm1161, %v1142, %v662
      %v1172 = vsel %vm1161, %v1143, %v664
      %v1173 = vsel %vm1161, %v1144, %v666
      %v1174 = vsel %vm1161, %v1145, %v668
      %v1175 = vsel %vm1161, %v1146, %v670
      %v1176 = vsel %vm1161, %v1147, %v672
      %v1177 = vsel %vm1161, %v1148, %v674
      %v1178 = vsel %vm1161, %v1149, %v676
      %v1179 = vsel %vm1161, %v1150, %v678
      %v1180 = vsel %vm1161, %v1151, %v680
      %v1181 = vsel %vm1161, %v1152, %v682
      %v1182 = vsel %vm1161, %v1153, %v684
      %v1183 = vsel %vm1161, %v1154, %v686
      %v1184 = vsel %vm1161, %v1155, %v688
      %v1185 = vsel %vm1161, %v1156, %v690
      %v1186 = vsel %vm1161, %v1157, %v692
      %v1187 = vsel %vm1161, %v1158, %v694
      %v1188 = vsel %vm1161, %v1159, %v696
      %v1189 = vsel %vm1161, %v1160, %v698
      %vm1190 = vcmask 162816
      %v1191 = vsel %vm1190, %v1162, %v731
      %v1192 = vsel %vm1190, %v1163, %v733
      %v1193 = vsel %vm1190, %v1164, %v735
      %v1194 = vsel %vm1190, %v1165, %v737
      %v1195 = vsel %vm1190, %v1166, %v739
      %v1196 = vsel %vm1190, %v1167, %v741
      %v1197 = vsel %vm1190, %v1168, %v743
      %v1198 = vsel %vm1190, %v1169, %v745
      %v1199 = vsel %vm1190, %v1170, %v747
      %v1200 = vsel %vm1190, %v1171, %v749
      %v1201 = vsel %vm1190, %v1172, %v751
      %v1202 = vsel %vm1190, %v1173, %v753
      %v1203 = vsel %vm1190, %v1174, %v755
      %v1204 = vsel %vm1190, %v1175, %v757
      %v1205 = vsel %vm1190, %v1176, %v759
      %v1206 = vsel %vm1190, %v1177, %v761
      %v1207 = vsel %vm1190, %v1178, %v763
      %v1208 = vsel %vm1190, %v1179, %v765
      %v1209 = vsel %vm1190, %v1180, %v767
      %v1210 = vsel %vm1190, %v1181, %v769
      %v1211 = vsel %vm1190, %v1182, %v771
      %v1212 = vsel %vm1190, %v1183, %v773
      %v1213 = vsel %vm1190, %v1184, %v775
      %v1214 = vsel %vm1190, %v1185, %v777
      %v1215 = vsel %vm1190, %v1186, %v779
      %v1216 = vsel %vm1190, %v1187, %v781
      %v1217 = vsel %vm1190, %v1188, %v783
      %v1218 = vsel %vm1190, %v1189, %v785
      %vm1219 = vcmask 195584
      %v1220 = vsel %vm1219, %v1191, %v817
      %v1221 = vsel %vm1219, %v1192, %v819
      %v1222 = vsel %vm1219, %v1193, %v821
      %v1223 = vsel %vm1219, %v1194, %v823
      %v1224 = vsel %vm1219, %v1195, %v825
      %v1225 = vsel %vm1219, %v1196, %v827
      %v1226 = vsel %vm1219, %v1197, %v829
      %v1227 = vsel %vm1219, %v1198, %v831
      %v1228 = vsel %vm1219, %v1199, %v833
      %v1229 = vsel %vm1219, %v1200, %v835
      %v1230 = vsel %vm1219, %v1201, %v837
      %v1231 = vsel %vm1219, %v1202, %v839
      %v1232 = vsel %vm1219, %v1203, %v841
      %v1233 = vsel %vm1219, %v1204, %v843
      %v1234 = vsel %vm1219, %v1205, %v845
      %v1235 = vsel %vm1219, %v1206, %v847
      %v1236 = vsel %vm1219, %v1207, %v849
      %v1237 = vsel %vm1219, %v1208, %v851
      %v1238 = vsel %vm1219, %v1209, %v853
      %v1239 = vsel %vm1219, %v1210, %v855
      %v1240 = vsel %vm1219, %v1211, %v857
      %v1241 = vsel %vm1219, %v1212, %v859
      %v1242 = vsel %vm1219, %v1213, %v861
      %v1243 = vsel %vm1219, %v1214, %v863
      %v1244 = vsel %vm1219, %v1215, %v865
      %v1245 = vsel %vm1219, %v1216, %v867
      %v1246 = vsel %vm1219, %v1217, %v869
      %v1247 = vsel %vm1219, %v1218, %v871
      %vm1248 = vcmask 228352
      %v1249 = vsel %vm1248, %v1220, %v904
      %v1250 = vsel %vm1248, %v1221, %v906
      %v1251 = vsel %vm1248, %v1222, %v908
      %v1252 = vsel %vm1248, %v1223, %v910
      %v1253 = vsel %vm1248, %v1224, %v912
      %v1254 = vsel %vm1248, %v1225, %v914
      %v1255 = vsel %vm1248, %v1226, %v916
      %v1256 = vsel %vm1248, %v1227, %v918
      %v1257 = vsel %vm1248, %v1228, %v920
      %v1258 = vsel %vm1248, %v1229, %v922
      %v1259 = vsel %vm1248, %v1230, %v924
      %v1260 = vsel %vm1248, %v1231, %v926
      %v1261 = vsel %vm1248, %v1232, %v928
      %v1262 = vsel %vm1248, %v1233, %v930
      %v1263 = vsel %vm1248, %v1234, %v932
      %v1264 = vsel %vm1248, %v1235, %v934
      %v1265 = vsel %vm1248, %v1236, %v936
      %v1266 = vsel %vm1248, %v1237, %v938
      %v1267 = vsel %vm1248, %v1238, %v940
      %v1268 = vsel %vm1248, %v1239, %v942
      %v1269 = vsel %vm1248, %v1240, %v944
      %v1270 = vsel %vm1248, %v1241, %v946
      %v1271 = vsel %vm1248, %v1242, %v948
      %v1272 = vsel %vm1248, %v1243, %v950
      %v1273 = vsel %vm1248, %v1244, %v952
      %v1274 = vsel %vm1248, %v1245, %v954
      %v1275 = vsel %vm1248, %v1246, %v956
      %v1276 = vsel %vm1248, %v1247, %v958
      %vm1277 = vcmask 261120
      %v1278 = vsel %vm1277, %v1249, %v991
      %v1279 = vsel %vm1277, %v1250, %v993
      %v1280 = vsel %vm1277, %v1251, %v995
      %v1281 = vsel %vm1277, %v1252, %v997
      %v1282 = vsel %vm1277, %v1253, %v999
      %v1283 = vsel %vm1277, %v1254, %v1001
      %v1284 = vsel %vm1277, %v1255, %v1003
      %v1285 = vsel %vm1277, %v1256, %v1005
      %v1286 = vsel %vm1277, %v1257, %v1007
      %v1287 = vsel %vm1277, %v1258, %v1009
      %v1288 = vsel %vm1277, %v1259, %v1011
      %v1289 = vsel %vm1277, %v1260, %v1013
      %v1290 = vsel %vm1277, %v1261, %v1015
      %v1291 = vsel %vm1277, %v1262, %v1017
      %v1292 = vsel %vm1277, %v1263, %v1019
      %v1293 = vsel %vm1277, %v1264, %v1021
      %v1294 = vsel %vm1277, %v1265, %v1023
      %v1295 = vsel %vm1277, %v1266, %v1025
      %v1296 = vsel %vm1277, %v1267, %v1027
      %v1297 = vsel %vm1277, %v1268, %v1029
      %v1298 = vsel %vm1277, %v1269, %v1031
      %v1299 = vsel %vm1277, %v1270, %v1033
      %v1300 = vsel %vm1277, %v1271, %v1035
      %v1301 = vsel %vm1277, %v1272, %v1037
      %v1302 = vsel %vm1277, %v1273, %v1039
      %v1303 = vsel %vm1277, %v1274, %v1041
      %v1304 = vsel %vm1277, %v1275, %v1043
      %v1305 = vsel %vm1277, %v1276, %v1045
      %v1334 = vrot.slane %v1278, 2
      %v1335 = vrot.slane %v1278, 4
      %v1336 = vrot.slane %v1278, 6
      %v1337 = vrot.slane %v1279, 2
      %v1338 = vrot.slane %v1279, 4
      %v1339 = vrot.slane %v1280, 2
      %v1340 = vrot.slane %v1280, 4
      %v1341 = vrot.slane %v1280, 6
      %v1342 = vrot.slane %v1281, 2
      %v1343 = vrot.slane %v1281, 4
      %v1344 = vrot.slane %v1282, 2
      %v1345 = vrot.slane %v1282, 4
      %v1346 = vrot.slane %v1282, 6
      %v1347 = vrot.slane %v1283, 2
      %v1348 = vrot.slane %v1283, 4
      %v1349 = vrot.slane %v1284, 2
      %v1350 = vrot.slane %v1284, 4
      %v1351 = vrot.slane %v1284, 6
      %v1352 = vrot.slane %v1285, 2
      %v1353 = vrot.slane %v1285, 4
      %v1354 = vrot.slane %v1286, 2
      %v1355 = vrot.slane %v1286, 4
      %v1356 = vrot.slane %v1286, 6
      %v1357 = vrot.slane %v1287, 2
      %v1358 = vrot.slane %v1287, 4
      %v1359 = vrot.slane %v1288, 2
      %v1360 = vrot.slane %v1288, 4
      %v1361 = vrot.slane %v1288, 6
      %v1362 = vrot.slane %v1289, 2
      %v1363 = vrot.slane %v1289, 4
      %v1364 = vrot.slane %v1290, 2
      %v1365 = vrot.slane %v1290, 4
      %v1366 = vrot.slane %v1290, 6
      %v1367 = vrot.slane %v1291, 2
      %v1368 = vrot.slane %v1291, 4
      %v1369 = vrot.slane %v1292, 2
      %v1370 = vrot.slane %v1292, 4
      %v1371 = vrot.slane %v1292, 6
      %v1372 = vrot.slane %v1293, 2
      %v1373 = vrot.slane %v1293, 4
      %v1374 = vrot.slane %v1294, 2
      %v1375 = vrot.slane %v1294, 4
      %v1376 = vrot.slane %v1294, 6
      %v1377 = vrot.slane %v1295, 2
      %v1378 = vrot.slane %v1295, 4
      %v1379 = vrot.slane %v1296, 2
      %v1380 = vrot.slane %v1296, 4
      %v1381 = vrot.slane %v1296, 6
      %v1382 = vrot.slane %v1297, 2
      %v1383 = vrot.slane %v1297, 4
      %v1384 = vrot.slane %v1298, 2
      %v1385 = vrot.slane %v1298, 4
      %v1386 = vrot.slane %v1298, 6
      %v1387 = vrot.slane %v1299, 2
      %v1388 = vrot.slane %v1299, 4
      %v1389 = vrot.slane %v1300, 2
      %v1390 = vrot.slane %v1300, 4
      %v1391 = vrot.slane %v1300, 6
      %v1392 = vrot.slane %v1301, 2
      %v1393 = vrot.slane %v1301, 4
      %v1394 = vrot.slane %v1302, 2
      %v1395 = vrot.slane %v1302, 4
      %v1396 = vrot.slane %v1302, 6
      %v1397 = vrot.slane %v1303, 2
      %v1398 = vrot.slane %v1303, 4
      %v1399 = vrot.slane %v1304, 2
      %v1400 = vrot.slane %v1304, 4
      %v1401 = vrot.slane %v1304, 6
      %v1402 = vrot.slane %v1305, 2
      %v1403 = vrot.slane %v1305, 4
      %1404 = vst [vmem:[#allocation1] ss:$4 sm:$0xff] %v1278
      %s1405 = scalar_lea.vmem [#allocation1], 1
      %1406 = vst [vmem:[%s1405] ss:$4 sm:$0xff] %v1334
      %s1407 = scalar_lea.vmem [#allocation1], 2
      %1408 = vst [vmem:[%s1407] ss:$4 sm:$0xff] %v1335
      %s1409 = scalar_lea.vmem [#allocation1], 3
      %1410 = vst [vmem:[%s1409] ss:$4 sm:$0xff] %v1336
      %s1411 = scalar_lea.vmem [#allocation1], 32
      %1412 = vst [vmem:[%s1411] ss:$4 sm:$0xff] %v1279
      %s1413 = scalar_lea.vmem [#allocation1], 33
      %1414 = vst [vmem:[%s1413] ss:$4 sm:$0xff] %v1337
      %s1415 = scalar_lea.vmem [#allocation1], 34
      %1416 = vst [vmem:[%s1415] ss:$4 sm:$0xff] %v1338
      %s1417 = scalar_lea.vmem [#allocation1], 35
      %1418 = vst [vmem:[%s1417] ss:$4 sm:$0xff] %v1280
      %v1419 = vld.sshfl [vmem:[#allocation1] sm:$0xff pattern:$0x73625140]
      %v1420 = vld.sshfl [vmem:[#allocation1 + $0x20] sm:$0xff pattern:$0x73625140]
      %1421 = vst [vmem:[#allocation1] ss:$4 sm:$0xff] %v1339
      %1422 = vst [vmem:[%s1405] ss:$4 sm:$0xff] %v1340
      %1423 = vst [vmem:[%s1407] ss:$4 sm:$0xff] %v1341
      %1424 = vst [vmem:[%s1409] ss:$4 sm:$0xff] %v1281
      %1425 = vst [vmem:[%s1411] ss:$4 sm:$0xff] %v1342
      %1426 = vst [vmem:[%s1413] ss:$4 sm:$0xff] %v1343
      %1427 = vst [vmem:[%s1415] ss:$4 sm:$0xff] %v1282
      %1428 = vst [vmem:[%s1417] ss:$4 sm:$0xff] %v1344
      %v1429 = vld.sshfl [vmem:[#allocation1] sm:$0xff pattern:$0x73625140]
      %v1430 = vld.sshfl [vmem:[#allocation1 + $0x20] sm:$0xff pattern:$0x73625140]
      %1431 = vst [vmem:[#allocation1] ss:$4 sm:$0xff] %v1345
      %1432 = vst [vmem:[%s1405] ss:$4 sm:$0xff] %v1346
      %1433 = vst [vmem:[%s1407] ss:$4 sm:$0xff] %v1283
      %1434 = vst [vmem:[%s1409] ss:$4 sm:$0xff] %v1347
      %1435 = vst [vmem:[%s1411] ss:$4 sm:$0xff] %v1348
      %1436 = vst [vmem:[%s1413] ss:$4 sm:$0xff] %v1284
      %1437 = vst [vmem:[%s1415] ss:$4 sm:$0xff] %v1349
      %1438 = vst [vmem:[%s1417] ss:$4 sm:$0xff] %v1350
      %v1439 = vld.sshfl [vmem:[#allocation1] sm:$0xff pattern:$0x73625140]
      %v1440 = vld.sshfl [vmem:[#allocation1 + $0x20] sm:$0xff pattern:$0x73625140]
      %1441 = vst [vmem:[#allocation1] ss:$4 sm:$0xff] %v1351
      %1442 = vst [vmem:[%s1405] ss:$4 sm:$0xff] %v1285
      %1443 = vst [vmem:[%s1407] ss:$4 sm:$0xff] %v1352
      %1444 = vst [vmem:[%s1409] ss:$4 sm:$0xff] %v1353
      %1445 = vst [vmem:[%s1411] ss:$4 sm:$0xff] %v1286
      %1446 = vst [vmem:[%s1413] ss:$4 sm:$0xff] %v1354
      %1447 = vst [vmem:[%s1415] ss:$4 sm:$0xff] %v1355
      %1448 = vst [vmem:[%s1417] ss:$4 sm:$0xff] %v1356
      %v1449 = vld.sshfl [vmem:[#allocation1] sm:$0xff pattern:$0x73625140]
      %v1450 = vld.sshfl [vmem:[#allocation1 + $0x20] sm:$0xff pattern:$0x73625140]
      %1451 = vst [vmem:[#allocation1] ss:$4 sm:$0xff] %v1287
      %1452 = vst [vmem:[%s1405] ss:$4 sm:$0xff] %v1357
      %1453 = vst [vmem:[%s1407] ss:$4 sm:$0xff] %v1358
      %1454 = vst [vmem:[%s1409] ss:$4 sm:$0xff] %v1288
      %1455 = vst [vmem:[%s1411] ss:$4 sm:$0xff] %v1359
      %1456 = vst [vmem:[%s1413] ss:$4 sm:$0xff] %v1360
      %1457 = vst [vmem:[%s1415] ss:$4 sm:$0xff] %v1361
      %1458 = vst [vmem:[%s1417] ss:$4 sm:$0xff] %v1289
      %v1459 = vld.sshfl [vmem:[#allocation1] sm:$0xff pattern:$0x73625140]
      %v1460 = vld.sshfl [vmem:[#allocation1 + $0x20] sm:$0xff pattern:$0x73625140]
      %1461 = vst [vmem:[#allocation1] ss:$4 sm:$0xff] %v1362
      %1462 = vst [vmem:[%s1405] ss:$4 sm:$0xff] %v1363
      %1463 = vst [vmem:[%s1407] ss:$4 sm:$0xff] %v1290
      %1464 = vst [vmem:[%s1409] ss:$4 sm:$0xff] %v1364
      %1465 = vst [vmem:[%s1411] ss:$4 sm:$0xff] %v1365
      %1466 = vst [vmem:[%s1413] ss:$4 sm:$0xff] %v1366
      %1467 = vst [vmem:[%s1415] ss:$4 sm:$0xff] %v1291
      %1468 = vst [vmem:[%s1417] ss:$4 sm:$0xff] %v1367
      %v1469 = vld.sshfl [vmem:[#allocation1] sm:$0xff pattern:$0x73625140]
      %v1470 = vld.sshfl [vmem:[#allocation1 + $0x20] sm:$0xff pattern:$0x73625140]
      %1471 = vst [vmem:[#allocation1] ss:$4 sm:$0xff] %v1368
      %1472 = vst [vmem:[%s1405] ss:$4 sm:$0xff] %v1292
      %1473 = vst [vmem:[%s1407] ss:$4 sm:$0xff] %v1369
      %1474 = vst [vmem:[%s1409] ss:$4 sm:$0xff] %v1370
      %1475 = vst [vmem:[%s1411] ss:$4 sm:$0xff] %v1371
      %1476 = vst [vmem:[%s1413] ss:$4 sm:$0xff] %v1293
      %1477 = vst [vmem:[%s1415] ss:$4 sm:$0xff] %v1372
      %1478 = vst [vmem:[%s1417] ss:$4 sm:$0xff] %v1373
      %v1479 = vld.sshfl [vmem:[#allocation1] sm:$0xff pattern:$0x73625140]
      %v1480 = vld.sshfl [vmem:[#allocation1 + $0x20] sm:$0xff pattern:$0x73625140]
      %1481 = vst [vmem:[#allocation1] ss:$4 sm:$0xff] %v1294
      %1482 = vst [vmem:[%s1405] ss:$4 sm:$0xff] %v1374
      %1483 = vst [vmem:[%s1407] ss:$4 sm:$0xff] %v1375
      %1484 = vst [vmem:[%s1409] ss:$4 sm:$0xff] %v1376
      %1485 = vst [vmem:[%s1411] ss:$4 sm:$0xff] %v1295
      %1486 = vst [vmem:[%s1413] ss:$4 sm:$0xff] %v1377
      %1487 = vst [vmem:[%s1415] ss:$4 sm:$0xff] %v1378
      %1488 = vst [vmem:[%s1417] ss:$4 sm:$0xff] %v1296
      %v1489 = vld.sshfl [vmem:[#allocation1] sm:$0xff pattern:$0x73625140]
      %v1490 = vld.sshfl [vmem:[#allocation1 + $0x20] sm:$0xff pattern:$0x73625140]
      %1491 = vst [vmem:[#allocation1] ss:$4 sm:$0xff] %v1379
      %1492 = vst [vmem:[%s1405] ss:$4 sm:$0xff] %v1380
      %1493 = vst [vmem:[%s1407] ss:$4 sm:$0xff] %v1381
      %1494 = vst [vmem:[%s1409] ss:$4 sm:$0xff] %v1297
      %1495 = vst [vmem:[%s1411] ss:$4 sm:$0xff] %v1382
      %1496 = vst [vmem:[%s1413] ss:$4 sm:$0xff] %v1383
      %1497 = vst [vmem:[%s1415] ss:$4 sm:$0xff] %v1298
      %1498 = vst [vmem:[%s1417] ss:$4 sm:$0xff] %v1384
      %v1499 = vld.sshfl [vmem:[#allocation1] sm:$0xff pattern:$0x73625140]
      %v1500 = vld.sshfl [vmem:[#allocation1 + $0x20] sm:$0xff pattern:$0x73625140]
      %1501 = vst [vmem:[#allocation1] ss:$4 sm:$0xff] %v1385
      %1502 = vst [vmem:[%s1405] ss:$4 sm:$0xff] %v1386
      %1503 = vst [vmem:[%s1407] ss:$4 sm:$0xff] %v1299
      %1504 = vst [vmem:[%s1409] ss:$4 sm:$0xff] %v1387
      %1505 = vst [vmem:[%s1411] ss:$4 sm:$0xff] %v1388
      %1506 = vst [vmem:[%s1413] ss:$4 sm:$0xff] %v1300
      %1507 = vst [vmem:[%s1415] ss:$4 sm:$0xff] %v1389
      %1508 = vst [vmem:[%s1417] ss:$4 sm:$0xff] %v1390
      %v1509 = vld.sshfl [vmem:[#allocation1] sm:$0xff pattern:$0x73625140]
      %v1510 = vld.sshfl [vmem:[#allocation1 + $0x20] sm:$0xff pattern:$0x73625140]
      %1511 = vst [vmem:[#allocation1] ss:$4 sm:$0xff] %v1391
      %1512 = vst [vmem:[%s1405] ss:$4 sm:$0xff] %v1301
      %1513 = vst [vmem:[%s1407] ss:$4 sm:$0xff] %v1392
      %1514 = vst [vmem:[%s1409] ss:$4 sm:$0xff] %v1393
      %1515 = vst [vmem:[%s1411] ss:$4 sm:$0xff] %v1302
      %1516 = vst [vmem:[%s1413] ss:$4 sm:$0xff] %v1394
      %1517 = vst [vmem:[%s1415] ss:$4 sm:$0xff] %v1395
      %1518 = vst [vmem:[%s1417] ss:$4 sm:$0xff] %v1396
      %v1519 = vld.sshfl [vmem:[#allocation1] sm:$0xff pattern:$0x73625140]
      %v1520 = vld.sshfl [vmem:[#allocation1 + $0x20] sm:$0xff pattern:$0x73625140]
      %1521 = vst [vmem:[#allocation1] ss:$4 sm:$0xff] %v1303
      %1522 = vst [vmem:[%s1405] ss:$4 sm:$0xff] %v1397
      %1523 = vst [vmem:[%s1407] ss:$4 sm:$0xff] %v1398
      %1524 = vst [vmem:[%s1409] ss:$4 sm:$0xff] %v1304
      %1525 = vst [vmem:[%s1411] ss:$4 sm:$0xff] %v1399
      %1526 = vst [vmem:[%s1413] ss:$4 sm:$0xff] %v1400
      %1527 = vst [vmem:[%s1415] ss:$4 sm:$0xff] %v1401
      %1528 = vst [vmem:[%s1417] ss:$4 sm:$0xff] %v1305
      %v1529 = vld.sshfl [vmem:[#allocation1] sm:$0xff pattern:$0x73625140]
      %v1530 = vld.sshfl [vmem:[#allocation1 + $0x20] sm:$0xff pattern:$0x73625140]
      %1531 = vst [vmem:[#allocation1] ss:$4 sm:$0xff] %v1402
      %1532 = vst [vmem:[%s1405] ss:$4 sm:$0xff] %v1403
      %v1533 = vld.sshfl [vmem:[#allocation1] sm:$0xff pattern:$0x73625140]
      %v1559 = vpack.c.bf16 %v1420, %v1419
      %v1560 = vpack.c.bf16 %v1430, %v1429
      %v1561 = vpack.c.bf16 %v1440, %v1439
      %v1562 = vpack.c.bf16 %v1450, %v1449
      %v1563 = vpack.c.bf16 %v1460, %v1459
      %v1564 = vpack.c.bf16 %v1470, %v1469
      %v1565 = vpack.c.bf16 %v1480, %v1479
      %v1566 = vpack.c.bf16 %v1490, %v1489
      %v1567 = vpack.c.bf16 %v1500, %v1499
      %v1568 = vpack.c.bf16 %v1510, %v1509
      %v1569 = vpack.c.bf16 %v1520, %v1519
      %v1570 = vpack.c.bf16 %v1530, %v1529
      %v1571 = vpack.c.bf16 %v1533, %v1533
      %v1572 = vld [vmem:[%s1] sm:$0xf]
      %v1573 = vld [vmem:[%s1 + $0x4] sm:$0xf]
      %v1574 = vld [vmem:[%s1 + $0x8] sm:$0xf]
      %v1575 = vld [vmem:[%s1 + $0xc] sm:$0xf]
      %v1576 = vld [vmem:[%s1 + $0x10] sm:$0x3]
      %v1582 = vunpack.c.l.b16 %v1572
      %v1583 = vunpack.c.l.b16 %v1573
      %v1584 = vunpack.c.l.b16 %v1574
      %v1585 = vunpack.c.l.b16 %v1575
      %v1586 = vunpack.c.l.b16 %v1576
      %v1587 = vpack.c.b16 %v1583, %v1582
      %v1588 = vpack.c.b16 %v1585, %v1584
      %v1589 = vpack.c.b16 %v1586, %v1586
      %vm1592 = vcmask 293888
      %v1594 = vsel %vm1592, %v1559, 0
      %v1597 = vsel %vm1592, %v1560, 0
      %v1600 = vsel %vm1592, %v1561, 0
      %v1603 = vsel %vm1592, %v1562, 0
      %v1606 = vsel %vm1592, %v1563, 0
      %v1609 = vsel %vm1592, %v1564, 0
      %v1612 = vsel %vm1592, %v1565, 0
      %v1615 = vsel %vm1592, %v1566, 0
      %v1618 = vsel %vm1592, %v1567, 0
      %v1621 = vsel %vm1592, %v1568, 0
      %v1624 = vsel %vm1592, %v1569, 0
      %v1627 = vsel %vm1592, %v1570, 0
      %v1630 = vsel %vm1592, %v1571, 0
      %vm1632 = vcmask 1041408
      %v1634 = vsel %vm1632, %v1589, 0
      %1636 = vmatpush.bf16.msra.mxu0 0
      %1637 = vmatpush.bf16.msra.mxu0 0
      %1638 = vmatpush.bf16.msra.mxu0 0
      %1639 = vmatpush.bf16.msra.mxu0 0
      %1640 = vmatpush.bf16.msra.mxu0 0
      %1641 = vmatpush.bf16.msra.mxu0 %v1634
      %1642 = vmatpush.bf16.msra.mxu0 %v1588
      %1643 = vmatpush.bf16.msra.mxu0 %v1587
      %1644 = vmatmul.bf16.gmra.mxu0 %v1594
      %v1645 = vpop.f32.mrf.mxu0
      %v1646 = vadd.f32 0.0, %v1645
      %v1647 = vpop.f32.mrf.mxu0
      %v1648 = vadd.f32 0.0, %v1647
      %1649 = vmatmul.bf16.gmra.mxu0 %v1597
      %v1650 = vpop.f32.mrf.mxu0
      %v1651 = vadd.f32 0.0, %v1650
      %v1652 = vpop.f32.mrf.mxu0
      %v1653 = vadd.f32 0.0, %v1652
      %1654 = vmatmul.bf16.gmra.mxu0 %v1600
      %v1655 = vpop.f32.mrf.mxu0
      %v1656 = vadd.f32 0.0, %v1655
      %v1657 = vpop.f32.mrf.mxu0
      %v1658 = vadd.f32 0.0, %v1657
      %1659 = vmatmul.bf16.gmra.mxu0 %v1603
      %v1660 = vpop.f32.mrf.mxu0
      %v1661 = vadd.f32 0.0, %v1660
      %v1662 = vpop.f32.mrf.mxu0
      %v1663 = vadd.f32 0.0, %v1662
      %1664 = vmatmul.bf16.gmra.mxu0 %v1606
      %v1665 = vpop.f32.mrf.mxu0
      %v1666 = vadd.f32 0.0, %v1665
      %v1667 = vpop.f32.mrf.mxu0
      %v1668 = vadd.f32 0.0, %v1667
      %1669 = vmatmul.bf16.gmra.mxu0 %v1609
      %v1670 = vpop.f32.mrf.mxu0
      %v1671 = vadd.f32 0.0, %v1670
      %v1672 = vpop.f32.mrf.mxu0
      %v1673 = vadd.f32 0.0, %v1672
      %1674 = vmatmul.bf16.gmra.mxu0 %v1612
      %v1675 = vpop.f32.mrf.mxu0
      %v1676 = vadd.f32 0.0, %v1675
      %v1677 = vpop.f32.mrf.mxu0
      %v1678 = vadd.f32 0.0, %v1677
      %1679 = vmatmul.bf16.gmra.mxu0 %v1615
      %v1680 = vpop.f32.mrf.mxu0
      %v1681 = vadd.f32 0.0, %v1680
      %v1682 = vpop.f32.mrf.mxu0
      %v1683 = vadd.f32 0.0, %v1682
      %1684 = vmatmul.bf16.gmra.mxu0 %v1618
      %v1685 = vpop.f32.mrf.mxu0
      %v1686 = vadd.f32 0.0, %v1685
      %v1687 = vpop.f32.mrf.mxu0
      %v1688 = vadd.f32 0.0, %v1687
      %1689 = vmatmul.bf16.gmra.mxu0 %v1621
      %v1690 = vpop.f32.mrf.mxu0
      %v1691 = vadd.f32 0.0, %v1690
      %v1692 = vpop.f32.mrf.mxu0
      %v1693 = vadd.f32 0.0, %v1692
      %1694 = vmatmul.bf16.gmra.mxu0 %v1624
      %v1695 = vpop.f32.mrf.mxu0
      %v1696 = vadd.f32 0.0, %v1695
      %v1697 = vpop.f32.mrf.mxu0
      %v1698 = vadd.f32 0.0, %v1697
      %1699 = vmatmul.bf16.gmra.mxu0 %v1627
      %v1700 = vpop.f32.mrf.mxu0
      %v1701 = vadd.f32 0.0, %v1700
      %v1702 = vpop.f32.mrf.mxu0
      %v1703 = vadd.f32 0.0, %v1702
      %1704 = vmatmul.bf16.gmra.mxu0 %v1630
      %v1705 = vpop.f32.mrf.mxu0
      %v1706 = vadd.f32 0.0, %v1705
      %v1707 = vpop.f32.mrf.mxu0
      %1708 = vdwg.mxu0
      %v1709 = vpack.c.bf16 %v1646, %v1646
      %v1710 = vpack.c.bf16 %v1648, %v1648
      %v1711 = vpack.c.bf16 %v1651, %v1651
      %v1712 = vpack.c.bf16 %v1653, %v1653
      %v1713 = vpack.c.bf16 %v1656, %v1656
      %v1714 = vpack.c.bf16 %v1658, %v1658
      %v1715 = vpack.c.bf16 %v1661, %v1661
      %v1716 = vpack.c.bf16 %v1663, %v1663
      %v1717 = vpack.c.bf16 %v1666, %v1666
      %v1718 = vpack.c.bf16 %v1668, %v1668
      %v1719 = vpack.c.bf16 %v1671, %v1671
      %v1720 = vpack.c.bf16 %v1673, %v1673
      %v1721 = vpack.c.bf16 %v1676, %v1676
      %v1722 = vpack.c.bf16 %v1678, %v1678
      %v1723 = vpack.c.bf16 %v1681, %v1681
      %v1724 = vpack.c.bf16 %v1683, %v1683
      %v1725 = vpack.c.bf16 %v1686, %v1686
      %v1726 = vpack.c.bf16 %v1688, %v1688
      %v1727 = vpack.c.bf16 %v1691, %v1691
      %v1728 = vpack.c.bf16 %v1693, %v1693
      %v1729 = vpack.c.bf16 %v1696, %v1696
      %v1730 = vpack.c.bf16 %v1698, %v1698
      %v1731 = vpack.c.bf16 %v1701, %v1701
      %v1732 = vpack.c.bf16 %v1703, %v1703
      %v1733 = vpack.c.bf16 %v1706, %v1706
      %1734 = vst [vmem:[%s231] sm:$0xf] %v1709
      %1735 = vst [vmem:[%s231 + $0x4] sm:$0xf] %v1710
      %1736 = vst [vmem:[%s231 + $0x8] sm:$0xf] %v1711
      %1737 = vst [vmem:[%s231 + $0xc] sm:$0xf] %v1712
      %1738 = vst [vmem:[%s231 + $0x10] sm:$0xf] %v1713
      %1739 = vst [vmem:[%s231 + $0x14] sm:$0xf] %v1714
      %1740 = vst [vmem:[%s231 + $0x18] sm:$0xf] %v1715
      %1741 = vst [vmem:[%s231 + $0x1c] sm:$0xf] %v1716
      %1742 = vst [vmem:[%s231 + $0x20] sm:$0xf] %v1717
      %1743 = vst [vmem:[%s231 + $0x24] sm:$0xf] %v1718
      %1744 = vst [vmem:[%s231 + $0x28] sm:$0xf] %v1719
      %1745 = vst [vmem:[%s231 + $0x2c] sm:$0xf] %v1720
      %1746 = vst [vmem:[%s231 + $0x30] sm:$0xf] %v1721
      %1747 = vst [vmem:[%s231 + $0x34] sm:$0xf] %v1722
      %1748 = vst [vmem:[%s231 + $0x38] sm:$0xf] %v1723
      %1749 = vst [vmem:[%s231 + $0x3c] sm:$0xf] %v1724
      %1750 = vst [vmem:[%s231 + $0x40] sm:$0xf] %v1725
      %1751 = vst [vmem:[%s231 + $0x44] sm:$0xf] %v1726
      %1752 = vst [vmem:[%s231 + $0x48] sm:$0xf] %v1727
      %1753 = vst [vmem:[%s231 + $0x4c] sm:$0xf] %v1728
      %1754 = vst [vmem:[%s231 + $0x50] sm:$0xf] %v1729
      %1755 = vst [vmem:[%s231 + $0x54] sm:$0xf] %v1730
      %1756 = vst [vmem:[%s231 + $0x58] sm:$0xf] %v1731
      %1757 = vst [vmem:[%s231 + $0x5c] sm:$0xf] %v1732
      %1758 = vst [vmem:[%s231 + $0x60] sm:$0x3] %v1733
      %p1759 = scmp.eq.s32.totalorder %s21, 0
      // Predicated region
      $region29: #{double_conv_forward.3} parent=27 // pred_check
        %p1760 = pneg %p1759
      $region30: #{double_conv_forward.3} parent=27 // pred_check_branch
        %1762 = sbr.rel (%p1760) target = $region32
      $region31: #{double_conv_forward.3} parent=27 // pred_region
        %1763 = vst [vmem:[%s235] sm:$0x1] 0.0
        %1764 = vst [vmem:[%s238] sm:$0x1] 0.0
      $region32: #{double_conv_forward.3} parent=27 // pred_fallthru
        _
      %v1765 = vld [vmem:[%s235] sm:$0x1]
      %v1766 = vadd.f32 %v1646, %v1648
      %v1767 = vadd.f32 %v1766, %v1651
      %v1768 = vadd.f32 %v1767, %v1653
      %v1769 = vadd.f32 %v1768, %v1656
      %v1770 = vadd.f32 %v1769, %v1658
      %v1771 = vadd.f32 %v1770, %v1661
      %v1772 = vadd.f32 %v1771, %v1663
      %v1773 = vadd.f32 %v1772, %v1666
      %v1774 = vadd.f32 %v1773, %v1668
      %v1775 = vadd.f32 %v1774, %v1671
      %v1776 = vadd.f32 %v1775, %v1673
      %v1777 = vadd.f32 %v1776, %v1676
      %v1778 = vadd.f32 %v1777, %v1678
      %v1779 = vadd.f32 %v1778, %v1681
      %v1780 = vadd.f32 %v1779, %v1683
      %v1781 = vadd.f32 %v1780, %v1686
      %v1782 = vadd.f32 %v1781, %v1688
      %v1783 = vadd.f32 %v1782, %v1691
      %v1784 = vadd.f32 %v1783, %v1693
      %v1785 = vadd.f32 %v1784, %v1696
      %v1786 = vadd.f32 %v1785, %v1698
      %v1787 = vadd.f32 %v1786, %v1701
      %v1788 = vadd.f32 %v1787, %v1703
      %vm1789 = vcmask 1043456
      %v1790 = vsel %vm1789, %v1706, 0.0
      %v1791 = vadd.f32 %v1788, %v1790
      %v1792 = vrot.slane %v1791, 4
      %v1793 = vadd.f32 %v1791, %v1792
      %v1794 = vrot.slane %v1793, 2
      %v1795 = vadd.f32 %v1793, %v1794
      %v1796 = vrot.slane %v1795, 1
      %v1797 = vadd.f32 %v1795, %v1796
      %v1798 = vadd.f32 %v1765, %v1797
      %1799 = vst [vmem:[%s235] sm:$0x1] %v1798
      %v1800 = vld [vmem:[%s238] sm:$0x1]
      %v1801 = vmul.f32 %v1646, %v1646
      %v1802 = vmul.f32 %v1648, %v1648
      %v1803 = vmul.f32 %v1651, %v1651
      %v1804 = vmul.f32 %v1653, %v1653
      %v1805 = vmul.f32 %v1656, %v1656
      %v1806 = vmul.f32 %v1658, %v1658
      %v1807 = vmul.f32 %v1661, %v1661
      %v1808 = vmul.f32 %v1663, %v1663
      %v1809 = vmul.f32 %v1666, %v1666
      %v1810 = vmul.f32 %v1668, %v1668
      %v1811 = vmul.f32 %v1671, %v1671
      %v1812 = vmul.f32 %v1673, %v1673
      %v1813 = vmul.f32 %v1676, %v1676
      %v1814 = vmul.f32 %v1678, %v1678
      %v1815 = vmul.f32 %v1681, %v1681
      %v1816 = vmul.f32 %v1683, %v1683
      %v1817 = vmul.f32 %v1686, %v1686
      %v1818 = vmul.f32 %v1688, %v1688
      %v1819 = vmul.f32 %v1691, %v1691
      %v1820 = vmul.f32 %v1693, %v1693
      %v1821 = vmul.f32 %v1696, %v1696
      %v1822 = vmul.f32 %v1698, %v1698
      %v1823 = vmul.f32 %v1701, %v1701
      %v1824 = vmul.f32 %v1703, %v1703
      %v1825 = vmul.f32 %v1706, %v1706
      %v1826 = vadd.f32 %v1801, %v1802
      %v1827 = vadd.f32 %v1826, %v1803
      %v1828 = vadd.f32 %v1827, %v1804
      %v1829 = vadd.f32 %v1828, %v1805
      %v1830 = vadd.f32 %v1829, %v1806
      %v1831 = vadd.f32 %v1830, %v1807
      %v1832 = vadd.f32 %v1831, %v1808
      %v1833 = vadd.f32 %v1832, %v1809
      %v1834 = vadd.f32 %v1833, %v1810
      %v1835 = vadd.f32 %v1834, %v1811
      %v1836 = vadd.f32 %v1835, %v1812
      %v1837 = vadd.f32 %v1836, %v1813
      %v1838 = vadd.f32 %v1837, %v1814
      %v1839 = vadd.f32 %v1838, %v1815
      %v1840 = vadd.f32 %v1839, %v1816
      %v1841 = vadd.f32 %v1840, %v1817
      %v1842 = vadd.f32 %v1841, %v1818
      %v1843 = vadd.f32 %v1842, %v1819
      %v1844 = vadd.f32 %v1843, %v1820
      %v1845 = vadd.f32 %v1844, %v1821
      %v1846 = vadd.f32 %v1845, %v1822
      %v1847 = vadd.f32 %v1846, %v1823
      %v1848 = vadd.f32 %v1847, %v1824
      %v1849 = vsel %vm1789, %v1825, 0.0
      %v1850 = vadd.f32 %v1848, %v1849
      %v1851 = vrot.slane %v1850, 4
      %v1852 = vadd.f32 %v1850, %v1851
      %v1853 = vrot.slane %v1852, 2
      %v1854 = vadd.f32 %v1852, %v1853
      %v1855 = vrot.slane %v1854, 1
      %v1856 = vadd.f32 %v1854, %v1855
      %v1857 = vadd.f32 %v1800, %v1856
      %1858 = vst [vmem:[%s238] sm:$0x1] %v1857
      %s1859 = sadd.s32 %s20, %s21
      %p1860 = scmp.lt.s32.totalorder %s1859, 1
      %s1861 = scalar_select %p1860, %s1859, 1
      %s1862 = smul.addr %s1861, 25
      %s1863 = smul.addr %s1862, 4
      %s1864 = scalar_lea.vmem %s2, %s1863
      %p1865 = scmp.lt.s32.totalorder %s20, 1
      %s1866 = scalar_select %p1865, %s20, 1
      %s1867 = scalar_lea.vmem %s3, %s1866
      %p1868 = scmp.lt.s32.totalorder %s20, 1
      %s1869 = scalar_select %p1868, %s20, 1
      %s1870 = scalar_lea.vmem %s4, %s1869
      // Predicated region
      $region33: #{double_conv_forward.3} parent=27 // pred_check
        %p1871 = pneg %p97
      $region34: #{double_conv_forward.3} parent=27 // pred_check_branch
        %1873 = sbr.rel (%p1871) target = $region36
      $region35: #{double_conv_forward.3} parent=27 // pred_region
        %s1874 = sadd.s32 %s20, %s21
      $region36: #{double_conv_forward.3} parent=27 // pred_fallthru
        _
      // Predicated region
      $region37: #{double_conv_forward.3} parent=27 // pred_check
        %p1875 = pneg %p123
      $region38: #{double_conv_forward.3} parent=27 // pred_check_branch
        %1877 = sbr.rel (%p1875) target = $region40
      $region39: #{double_conv_forward.3} parent=27 // pred_region
        _
      $region40: #{double_conv_forward.3} parent=27 // pred_fallthru
        _
      // Predicated region
      $region41: #{double_conv_forward.3} parent=27 // pred_check
        %p1878 = pneg %p149
      $region42: #{double_conv_forward.3} parent=27 // pred_check_branch
        %1880 = sbr.rel (%p1878) target = $region44
      $region43: #{double_conv_forward.3} parent=27 // pred_region
        _
      $region44: #{double_conv_forward.3} parent=27 // pred_fallthru
        _
    $region28: #{double_conv_forward.3} parent=5 // pred_fallthru
      _
    %p1881 = scmp.le.s32.totalorder 2, %s11
    // Predicated region
    $region45: #{double_conv_forward.3} parent=5 // pred_check
      %p1882 = pneg %p1881
    $region46: #{double_conv_forward.3} parent=5 // pred_check_branch
      %1884 = sbr.rel (%p1882) target = $region48
    $region47: #{double_conv_forward.3} parent=5 // pred_region
      %s1885 = ssub.s32 %s11, 2
      // Predicated region
      $region49: #{double_conv_forward.3} parent=47 // pred_check
        %p1886 = pneg %p103
      $region50: #{double_conv_forward.3} parent=47 // pred_check_branch
        %1888 = sbr.rel (%p1886) target = $region52
      $region51: #{double_conv_forward.3} parent=47 // pred_region
        %s1889 = sadd.s32 %s22, %s23
        %p1890 = scmp.lt.s32.totalorder %s1889, 1
        %s1891 = scalar_select %p1890, %s1889, 1
        %s1892 = smul.addr %s1891, 25
        %s1893 = smul.addr %s1892, 4
        %s1894 = scalar_lea.vmem %s2, %s1893
      $region52: #{double_conv_forward.3} parent=47 // pred_fallthru
        _
      // Predicated region
      $region53: #{double_conv_forward.3} parent=47 // pred_check
        %p1895 = pneg %p129
      $region54: #{double_conv_forward.3} parent=47 // pred_check_branch
        %1897 = sbr.rel (%p1895) target = $region56
      $region55: #{double_conv_forward.3} parent=47 // pred_region
        %p1898 = scmp.lt.s32.totalorder %s22, 1
        %s1899 = scalar_select %p1898, %s22, 1
        %s1900 = scalar_lea.vmem %s3, %s1899
      $region56: #{double_conv_forward.3} parent=47 // pred_fallthru
        _
      // Predicated region
      $region57: #{double_conv_forward.3} parent=47 // pred_check
        %p1901 = pneg %p155
      $region58: #{double_conv_forward.3} parent=47 // pred_check_branch
        %1903 = sbr.rel (%p1901) target = $region60
      $region59: #{double_conv_forward.3} parent=47 // pred_region
        %p1904 = scmp.lt.s32.totalorder %s22, 1
        %s1905 = scalar_select %p1904, %s22, 1
        %s1906 = scalar_lea.vmem %s4, %s1905
      $region60: #{double_conv_forward.3} parent=47 // pred_fallthru
        _
    $region48: #{double_conv_forward.3} parent=5 // pred_fallthru
      _
  $region6: #{double_conv_forward.3} parent=0 // loop_footer
    %s15 = sadd.s32 1, %s11
  $region7: #{double_conv_forward.3} parent=0 // loop_footer_branch
    %10 = sbr.rel target = $region3
  $region8: #{double_conv_forward.3} parent=0 // loop_exit
    _

// kernel: double_conv_forward.4
$region0: #{double_conv_forward.4}
  #allocation0 [shape = 'u32[]', space=smem, size = 0x4, offset = 0x4, fixed_abs, tag = 'smem constant byte address 0x4 - core index']
  #allocation1 [shape = 'u32[72,128]{1,0:T(1,128)}', space=vmem, size = 0x9000, scoped, tag = 'internal scratch']
  %s0 = inlined_call_operand.vmem [shape: bf16[2,14,14,128], index: 0, kind: input, shape index: {}]
  %s1 = inlined_call_operand.vmem [shape: bf16[1152,128], index: 1, kind: input, shape index: {}]
  %s2 = inlined_call_operand.vmem [shape: f32[1,128], index: 2, kind: input, shape index: {}]
  %s3 = inlined_call_operand.vmem [shape: f32[1,128], index: 3, kind: input, shape index: {}]
  %s4 = inlined_call_operand.vmem [shape: bf16[2,144,128], index: 4, kind: output, shape index: {0}]
  %s5 = inlined_call_operand.vmem [shape: f32[2,1,128], index: 5, kind: output, shape index: {1}]
  %s6 = inlined_call_operand.vmem [shape: f32[2,1,128], index: 6, kind: output, shape index: {2}]
  %7 = xla_tuple %s4, %s5, %s6
  %s8 = sld [smem:[#allocation0]]
  $region69: #{double_conv_forward.4} parent=0
    _
  %s10 = ssub.s32 1, %s8
  %s11 = scalar_select 0, %s10, %s8
  loop: start=0, step=1, limit=4
  $region2: #{double_conv_forward.4} parent=0 // loop_pre_header
    _
  $region3: #{double_conv_forward.4} parent=0 // loop_header
    %s13 = sphi 0, %s17
    %p14 = scmp.ge.s32.totalorder %s13, 4
    %s20 = sphi 0, %s32
    %s21 = sphi 0, %s28
    %s22 = sphi 0, %s20
    %s23 = sphi 0, %s21
    %s24 = sphi 0, %s22
    %s25 = sphi 0, %s23
    %s37 = sphi 0, %s39
    %s40 = sphi 0, %s37
    %s41 = sphi 0, %s40
    %s57 = sphi 0, %s41
    %s61 = sphi 0, %s61
    %s63 = sphi 0, %s61
    %s64 = sphi 0, %s63
    %s78 = sphi 0, %s64
    %s82 = sphi 0, %s82
    %s84 = sphi 0, %s82
    %s85 = sphi 0, %s84
    %s99 = sphi 0, %s85
    %s103 = sphi 0, %s103
    %s105 = sphi 0, %s103
    %s106 = sphi 0, %s105
    %s120 = sphi 0, %s106
    %s128 = sphi 0, %s130
    %s131 = sphi 0, %s128
    %s132 = sphi 0, %s131
    %s148 = sphi 0, %s132
    %s154 = sphi 0, %s156
    %s157 = sphi 0, %s154
    %s158 = sphi 0, %s157
    %s174 = sphi 0, %s158
    %s180 = sphi 0, %s182
    %s183 = sphi 0, %s180
    %s184 = sphi 0, %s183
    %s200 = sphi 0, %s184
  $region4: #{double_conv_forward.4} parent=0 // loop_header_branch
    %16 = sbr.rel (%p14) target = $region8
  $region5: #{double_conv_forward.4} parent=0 // loop_body
    %s18 = ssub.s32 %s13, 1
    %s19 = ssub.s32 %s13, 2
    %s26 = sadd.s32 1, %s21
    %p27 = scmp.ge.s32.totalorder %s26, 1
    %s28 = scalar_select %p27, 0, %s26
    %s29 = sadd.s32 1, %s20
    %s30 = scalar_select %p27, %s29, %s20
    %p31 = scmp.ge.s32.totalorder %s30, 2
    %s32 = scalar_select %p31, 0, %s30
    %s33 = sadd.s32 %s20, %s21
    %s34 = sadd.s32 %s32, %s28
    %s35 = ssub.s32 %s33, %s34
    %p36 = scmp.eq.s32.totalorder %s35, 0
    %s38 = sadd.s32 %s37, 1
    %s39 = scalar_select %p36, %s37, %s38
    %p42 = pneg %p36
    %p43 = scmp.eq.s32.totalorder %s13, 1
    %p44 = por %p42, %p43
    %p45 = scmp.ne.s32.totalorder %s37, %s40
    %p46 = scmp.eq.s32.totalorder %s13, 0
    %p47 = por %p45, %p46
    %p48 = scmp.ne.s32.totalorder %s37, %s40
    %p49 = scmp.eq.s32.totalorder %s18, 1
    %p50 = por %p48, %p49
    %p51 = scmp.ne.s32.totalorder %s40, %s41
    %p52 = scmp.eq.s32.totalorder %s18, 0
    %p53 = por %p51, %p52
    %p54 = scmp.ne.s32.totalorder %s40, %s41
    %p55 = scmp.eq.s32.totalorder %s19, 1
    %p56 = por %p54, %p55
    %p58 = scmp.ne.s32.totalorder %s41, %s57
    %p59 = scmp.eq.s32.totalorder %s19, 0
    %p60 = por %p58, %p59
    %s62 = sadd.s32 %s61, 1
    %p65 = scmp.eq.s32.totalorder %s13, 1
    %p66 = scmp.ne.s32.totalorder %s61, %s63
    %p67 = scmp.eq.s32.totalorder %s13, 0
    %p68 = por %p66, %p67
    %p69 = scmp.ne.s32.totalorder %s61, %s63
    %p70 = scmp.eq.s32.totalorder %s18, 1
    %p71 = por %p69, %p70
    %p72 = scmp.ne.s32.totalorder %s63, %s64
    %p73 = scmp.eq.s32.totalorder %s18, 0
    %p74 = por %p72, %p73
    %p75 = scmp.ne.s32.totalorder %s63, %s64
    %p76 = scmp.eq.s32.totalorder %s19, 1
    %p77 = por %p75, %p76
    %p79 = scmp.ne.s32.totalorder %s64, %s78
    %p80 = scmp.eq.s32.totalorder %s19, 0
    %p81 = por %p79, %p80
    %s83 = sadd.s32 %s82, 1
    %p86 = scmp.eq.s32.totalorder %s13, 1
    %p87 = scmp.ne.s32.totalorder %s82, %s84
    %p88 = scmp.eq.s32.totalorder %s13, 0
    %p89 = por %p87, %p88
    %p90 = scmp.ne.s32.totalorder %s82, %s84
    %p91 = scmp.eq.s32.totalorder %s18, 1
    %p92 = por %p90, %p91
    %p93 = scmp.ne.s32.totalorder %s84, %s85
    %p94 = scmp.eq.s32.totalorder %s18, 0
    %p95 = por %p93, %p94
    %p96 = scmp.ne.s32.totalorder %s84, %s85
    %p97 = scmp.eq.s32.totalorder %s19, 1
    %p98 = por %p96, %p97
    %p100 = scmp.ne.s32.totalorder %s85, %s99
    %p101 = scmp.eq.s32.totalorder %s19, 0
    %p102 = por %p100, %p101
    %s104 = sadd.s32 %s103, 1
    %p107 = scmp.eq.s32.totalorder %s13, 1
    %p108 = scmp.ne.s32.totalorder %s103, %s105
    %p109 = scmp.eq.s32.totalorder %s13, 0
    %p110 = por %p108, %p109
    %p111 = scmp.ne.s32.totalorder %s103, %s105
    %p112 = scmp.eq.s32.totalorder %s18, 1
    %p113 = por %p111, %p112
    %p114 = scmp.ne.s32.totalorder %s105, %s106
    %p115 = scmp.eq.s32.totalorder %s18, 0
    %p116 = por %p114, %p115
    %p117 = scmp.ne.s32.totalorder %s105, %s106
    %p118 = scmp.eq.s32.totalorder %s19, 1
    %p119 = por %p117, %p118
    %p121 = scmp.ne.s32.totalorder %s106, %s120
    %p122 = scmp.eq.s32.totalorder %s19, 0
    %p123 = por %p121, %p122
    %s124 = sadd.s32 %s20, %s21
    %s125 = sadd.s32 %s32, %s28
    %s126 = ssub.s32 %s124, %s125
    %p127 = scmp.eq.s32.totalorder %s126, 0
    %s129 = sadd.s32 %s128, 1
    %s130 = scalar_select %p127, %s128, %s129
    %p133 = pneg %p127
    %p134 = scmp.eq.s32.totalorder %s13, 1
    %p135 = por %p133, %p134
    %p136 = scmp.ne.s32.totalorder %s128, %s131
    %p137 = scmp.eq.s32.totalorder %s13, 0
    %p138 = por %p136, %p137
    %p139 = scmp.ne.s32.totalorder %s128, %s131
    %p140 = scmp.eq.s32.totalorder %s18, 1
    %p141 = por %p139, %p140
    %p142 = scmp.ne.s32.totalorder %s131, %s132
    %p143 = scmp.eq.s32.totalorder %s18, 0
    %p144 = por %p142, %p143
    %p145 = scmp.ne.s32.totalorder %s131, %s132
    %p146 = scmp.eq.s32.totalorder %s19, 1
    %p147 = por %p145, %p146
    %p149 = scmp.ne.s32.totalorder %s132, %s148
    %p150 = scmp.eq.s32.totalorder %s19, 0
    %p151 = por %p149, %p150
    %s152 = ssub.s32 %s20, %s32
    %p153 = scmp.eq.s32.totalorder %s152, 0
    %s155 = sadd.s32 %s154, 1
    %s156 = scalar_select %p153, %s154, %s155
    %p159 = pneg %p153
    %p160 = scmp.eq.s32.totalorder %s13, 1
    %p161 = por %p159, %p160
    %p162 = scmp.ne.s32.totalorder %s154, %s157
    %p163 = scmp.eq.s32.totalorder %s13, 0
    %p164 = por %p162, %p163
    %p165 = scmp.ne.s32.totalorder %s154, %s157
    %p166 = scmp.eq.s32.totalorder %s18, 1
    %p167 = por %p165, %p166
    %p168 = scmp.ne.s32.totalorder %s157, %s158
    %p169 = scmp.eq.s32.totalorder %s18, 0
    %p170 = por %p168, %p169
    %p171 = scmp.ne.s32.totalorder %s157, %s158
    %p172 = scmp.eq.s32.totalorder %s19, 1
    %p173 = por %p171, %p172
    %p175 = scmp.ne.s32.totalorder %s158, %s174
    %p176 = scmp.eq.s32.totalorder %s19, 0
    %p177 = por %p175, %p176
    %s178 = ssub.s32 %s20, %s32
    %p179 = scmp.eq.s32.totalorder %s178, 0
    %s181 = sadd.s32 %s180, 1
    %s182 = scalar_select %p179, %s180, %s181
    %p185 = pneg %p179
    %p186 = scmp.eq.s32.totalorder %s13, 1
    %p187 = por %p185, %p186
    %p188 = scmp.ne.s32.totalorder %s180, %s183
    %p189 = scmp.eq.s32.totalorder %s13, 0
    %p190 = por %p188, %p189
    %p191 = scmp.ne.s32.totalorder %s180, %s183
    %p192 = scmp.eq.s32.totalorder %s18, 1
    %p193 = por %p191, %p192
    %p194 = scmp.ne.s32.totalorder %s183, %s184
    %p195 = scmp.eq.s32.totalorder %s18, 0
    %p196 = por %p194, %p195
    %p197 = scmp.ne.s32.totalorder %s183, %s184
    %p198 = scmp.eq.s32.totalorder %s19, 1
    %p199 = por %p197, %p198
    %p201 = scmp.ne.s32.totalorder %s184, %s200
    %p202 = scmp.eq.s32.totalorder %s19, 0
    %p203 = por %p201, %p202
    %p204 = scmp.le.s32.totalorder 1, %s13
    %p205 = scmp.lt.s32.totalorder %s13, 3
    %p206 = pnand %p204, %p205
    %p207 = pneg %p206
    // Predicated region
    $region9: #{double_conv_forward.4} parent=5 // pred_check
      _
    $region10: #{double_conv_forward.4} parent=5 // pred_check_branch
      %209 = sbr.rel (%p206) target = $region12
    $region11: #{double_conv_forward.4} parent=5 // pred_region
      %s210 = ssub.s32 %s13, 1
      // Predicated region
      $region13: #{double_conv_forward.4} parent=11 // pred_check
        %p211 = pneg %p74
      $region14: #{double_conv_forward.4} parent=11 // pred_check_branch
        %213 = sbr.rel (%p211) target = $region16
      $region15: #{double_conv_forward.4} parent=11 // pred_region
        _
      $region16: #{double_conv_forward.4} parent=11 // pred_fallthru
        _
      // Predicated region
      $region17: #{double_conv_forward.4} parent=11 // pred_check
        %p214 = pneg %p95
      $region18: #{double_conv_forward.4} parent=11 // pred_check_branch
        %216 = sbr.rel (%p214) target = $region20
      $region19: #{double_conv_forward.4} parent=11 // pred_region
        _
      $region20: #{double_conv_forward.4} parent=11 // pred_fallthru
        _
      // Predicated region
      $region21: #{double_conv_forward.4} parent=11 // pred_check
        %p217 = pneg %p116
      $region22: #{double_conv_forward.4} parent=11 // pred_check_branch
        %219 = sbr.rel (%p217) target = $region24
      $region23: #{double_conv_forward.4} parent=11 // pred_region
        _
      $region24: #{double_conv_forward.4} parent=11 // pred_fallthru
        _
    $region12: #{double_conv_forward.4} parent=5 // pred_fallthru
      _
    %p220 = scmp.lt.s32.totalorder %s13, 2
    // Predicated region
    $region25: #{double_conv_forward.4} parent=5 // pred_check
      %p221 = pneg %p220
    $region26: #{double_conv_forward.4} parent=5 // pred_check_branch
      %223 = sbr.rel (%p221) target = $region28
    $region27: #{double_conv_forward.4} parent=5 // pred_region
      // Predicated region
      $region29: #{double_conv_forward.4} parent=27 // pred_check
        %p224 = pneg %p47
      $region30: #{double_conv_forward.4} parent=27 // pred_check_branch
        %226 = sbr.rel (%p224) target = $region32
      $region31: #{double_conv_forward.4} parent=27 // pred_region
        %s227 = sadd.s32 %s20, %s21
        %p228 = scmp.lt.s32.totalorder %s227, 1
        %s229 = scalar_select %p228, %s227, 1
        %s230 = smul.addr %s229, 28
        %s231 = smul.addr %s230, 4
        %s232 = scalar_lea.vmem %s0, %s231
        %s233 = sadd.s32 %s20, %s21
      $region32: #{double_conv_forward.4} parent=27 // pred_fallthru
        _
    $region28: #{double_conv_forward.4} parent=5 // pred_fallthru
      _
    %p234 = scmp.le.s32.totalorder 1, %s13
    %p235 = scmp.lt.s32.totalorder %s13, 3
    %p236 = pnand %p234, %p235
    %p237 = pneg %p236
    // Predicated region
    $region33: #{double_conv_forward.4} parent=5 // pred_check
      _
    $region34: #{double_conv_forward.4} parent=5 // pred_check_branch
      %239 = sbr.rel (%p236) target = $region36
    $region35: #{double_conv_forward.4} parent=5 // pred_region
      %s240 = ssub.s32 %s13, 1
      %s241 = sadd.s32 %s22, %s23
      %p242 = scmp.lt.s32.totalorder %s241, 1
      %s243 = scalar_select %p242, %s241, 1
      %s244 = smul.addr %s243, 28
      %s245 = smul.addr %s244, 4
      %s246 = scalar_lea.vmem %s0, %s245
      %p247 = pneg %p53
      %p248 = pneg %p50
      %p249 = pneg %p74
      %p250 = pneg %p71
      %p251 = pneg %p95
      %p252 = pneg %p92
      %p253 = pneg %p116
      %p254 = pneg %p113
      %p255 = pneg %p144
      %p256 = pneg %p141
      %s257 = sadd.s32 %s22, %s23
      %p258 = scmp.lt.s32.totalorder %s257, 1
      %s259 = scalar_select %p258, %s257, 1
      %s260 = smul.addr %s259, 18
      %s261 = smul.addr %s260, 4
      %s262 = scalar_lea.vmem %s4, %s261
      %p263 = pneg %p170
      %p264 = pneg %p167
      %p265 = scmp.lt.s32.totalorder %s22, 1
      %s266 = scalar_select %p265, %s22, 1
      %s267 = scalar_lea.vmem %s5, %s266
      %p268 = pneg %p196
      %p269 = pneg %p193
      %p270 = scmp.lt.s32.totalorder %s22, 1
      %s271 = scalar_select %p270, %s22, 1
      %s272 = scalar_lea.vmem %s6, %s271
      %s273 = sadd.s32 %s22, %s23
      %p274 = scmp.lt.s32.totalorder %s273, 1
      %s275 = scalar_select %p274, %s273, 1
      %s276 = smul.addr %s275, 28
      %s277 = smul.addr %s276, 4
      %s278 = scalar_lea.vmem %s0, %s277
      %s279 = sadd.s32 %s22, %s23
      %s280 = sadd.s32 %s22, %s23
      %p281 = scmp.lt.s32.totalorder %s280, 1
      %s282 = scalar_select %p281, %s280, 1
      %s283 = smul.addr %s282, 18
      %s284 = smul.addr %s283, 4
      %s285 = scalar_lea.vmem %s4, %s284
      %s286 = sadd.s32 %s22, %s23
      %p287 = scmp.lt.s32.totalorder %s22, 1
      %s288 = scalar_select %p287, %s22, 1
      %s289 = scalar_lea.vmem %s5, %s288
      %p290 = scmp.lt.s32.totalorder %s22, 1
      %s291 = scalar_select %p290, %s22, 1
      %s292 = scalar_lea.vmem %s6, %s291
      %v293 = vld [vmem:[%s278] sm:$0xf]
      %v294 = vld [vmem:[%s278 + $0x4] sm:$0x7]
      %v295 = vld [vmem:[%s278 + $0x8] sm:$0xf]
      %v296 = vld [vmem:[%s278 + $0xc] sm:$0x7]
      %v297 = vld [vmem:[%s278 + $0x10] sm:$0xf]
      %v298 = vld [vmem:[%s278 + $0x14] sm:$0x7]
      %v299 = vld [vmem:[%s278 + $0x18] sm:$0xf]
      %v300 = vld [vmem:[%s278 + $0x1c] sm:$0x7]
      %v301 = vld [vmem:[%s278 + $0x20] sm:$0xf]
      %v302 = vld [vmem:[%s278 + $0x24] sm:$0x7]
      %v303 = vld [vmem:[%s278 + $0x28] sm:$0xf]
      %v304 = vld [vmem:[%s278 + $0x2c] sm:$0x7]
      %v305 = vld [vmem:[%s278 + $0x30] sm:$0xf]
      %v306 = vld [vmem:[%s278 + $0x34] sm:$0x7]
      %v307 = vld [vmem:[%s278 + $0x38] sm:$0xf]
      %v308 = vld [vmem:[%s278 + $0x3c] sm:$0x7]
      %v309 = vld [vmem:[%s278 + $0x40] sm:$0xf]
      %v310 = vld [vmem:[%s278 + $0x44] sm:$0x7]
      %v311 = vld [vmem:[%s278 + $0x48] sm:$0xf]
      %v312 = vld [vmem:[%s278 + $0x4c] sm:$0x7]
      %v313 = vld [vmem:[%s278 + $0x50] sm:$0xf]
      %v314 = vld [vmem:[%s278 + $0x54] sm:$0x7]
      %v315 = vld [vmem:[%s278 + $0x58] sm:$0xf]
      %v316 = vld [vmem:[%s278 + $0x5c] sm:$0x7]
      %v317 = vld [vmem:[%s278 + $0x60] sm:$0xf]
      %v318 = vld [vmem:[%s278 + $0x64] sm:$0x7]
      %v319 = vld [vmem:[%s278 + $0x68] sm:$0xf]
      %v320 = vld [vmem:[%s278 + $0x6c] sm:$0x7]
      %v321 = vld [vmem:[%s2] sm:$0x1]
      %v322 = vld [vmem:[%s3] sm:$0x1]
      %v323 = vunpack.c.l.bf16 %v293
      %v324 = vunpack.c.l.bf16 %v294
      %v325 = vunpack.c.l.bf16 %v295
      %v326 = vunpack.c.l.bf16 %v296
      %v327 = vunpack.c.l.bf16 %v297
      %v328 = vunpack.c.l.bf16 %v298
      %v329 = vunpack.c.l.bf16 %v299
      %v330 = vunpack.c.l.bf16 %v300
      %v331 = vunpack.c.l.bf16 %v301
      %v332 = vunpack.c.l.bf16 %v302
      %v333 = vunpack.c.l.bf16 %v303
      %v334 = vunpack.c.l.bf16 %v304
      %v335 = vunpack.c.l.bf16 %v305
      %v336 = vunpack.c.l.bf16 %v306
      %v337 = vunpack.c.l.bf16 %v307
      %v338 = vunpack.c.l.bf16 %v308
      %v339 = vunpack.c.l.bf16 %v309
      %v340 = vunpack.c.l.bf16 %v310
      %v341 = vunpack.c.l.bf16 %v311
      %v342 = vunpack.c.l.bf16 %v312
      %v343 = vunpack.c.l.bf16 %v313
      %v344 = vunpack.c.l.bf16 %v314
      %v345 = vunpack.c.l.bf16 %v315
      %v346 = vunpack.c.l.bf16 %v316
      %v347 = vunpack.c.l.bf16 %v317
      %v348 = vunpack.c.l.bf16 %v318
      %v349 = vunpack.c.l.bf16 %v319
      %v350 = vunpack.c.l.bf16 %v320
      %v352 = vperm.slane %v321, 0
      %v354 = vmul.f32 %v323, %v352
      %v355 = vmul.f32 %v324, %v352
      %v356 = vmul.f32 %v325, %v352
      %v357 = vmul.f32 %v326, %v352
      %v358 = vmul.f32 %v327, %v352
      %v359 = vmul.f32 %v328, %v352
      %v360 = vmul.f32 %v329, %v352
      %v361 = vmul.f32 %v330, %v352
      %v362 = vmul.f32 %v331, %v352
      %v363 = vmul.f32 %v332, %v352
      %v364 = vmul.f32 %v333, %v352
      %v365 = vmul.f32 %v334, %v352
      %v366 = vmul.f32 %v335, %v352
      %v367 = vmul.f32 %v336, %v352
      %v368 = vmul.f32 %v337, %v352
      %v369 = vmul.f32 %v338, %v352
      %v370 = vmul.f32 %v339, %v352
      %v371 = vmul.f32 %v340, %v352
      %v372 = vmul.f32 %v341, %v352
      %v373 = vmul.f32 %v342, %v352
      %v374 = vmul.f32 %v343, %v352
      %v375 = vmul.f32 %v344, %v352
      %v376 = vmul.f32 %v345, %v352
      %v377 = vmul.f32 %v346, %v352
      %v378 = vmul.f32 %v347, %v352
      %v379 = vmul.f32 %v348, %v352
      %v380 = vmul.f32 %v349, %v352
      %v381 = vmul.f32 %v350, %v352
      %v383 = vperm.slane %v322, 0
      %v385 = vadd.f32 %v354, %v383
      %v386 = vadd.f32 %v355, %v383
      %v387 = vadd.f32 %v356, %v383
      %v388 = vadd.f32 %v357, %v383
      %v389 = vadd.f32 %v358, %v383
      %v390 = vadd.f32 %v359, %v383
      %v391 = vadd.f32 %v360, %v383
      %v392 = vadd.f32 %v361, %v383
      %v393 = vadd.f32 %v362, %v383
      %v394 = vadd.f32 %v363, %v383
      %v395 = vadd.f32 %v364, %v383
      %v396 = vadd.f32 %v365, %v383
      %v397 = vadd.f32 %v366, %v383
      %v398 = vadd.f32 %v367, %v383
      %v399 = vadd.f32 %v368, %v383
      %v400 = vadd.f32 %v369, %v383
      %v401 = vadd.f32 %v370, %v383
      %v402 = vadd.f32 %v371, %v383
      %v403 = vadd.f32 %v372, %v383
      %v404 = vadd.f32 %v373, %v383
      %v405 = vadd.f32 %v374, %v383
      %v406 = vadd.f32 %v375, %v383
      %v407 = vadd.f32 %v376, %v383
      %v408 = vadd.f32 %v377, %v383
      %v409 = vadd.f32 %v378, %v383
      %v410 = vadd.f32 %v379, %v383
      %v411 = vadd.f32 %v380, %v383
      %v412 = vadd.f32 %v381, %v383
      %v413 = vmax.f32 %v385, 0.0
      %v414 = vmax.f32 %v386, 0.0
      %v415 = vmax.f32 %v387, 0.0
      %v416 = vmax.f32 %v388, 0.0
      %v417 = vmax.f32 %v389, 0.0
      %v418 = vmax.f32 %v390, 0.0
      %v419 = vmax.f32 %v391, 0.0
      %v420 = vmax.f32 %v392, 0.0
      %v421 = vmax.f32 %v393, 0.0
      %v422 = vmax.f32 %v394, 0.0
      %v423 = vmax.f32 %v395, 0.0
      %v424 = vmax.f32 %v396, 0.0
      %v425 = vmax.f32 %v397, 0.0
      %v426 = vmax.f32 %v398, 0.0
      %v427 = vmax.f32 %v399, 0.0
      %v428 = vmax.f32 %v400, 0.0
      %v429 = vmax.f32 %v401, 0.0
      %v430 = vmax.f32 %v402, 0.0
      %v431 = vmax.f32 %v403, 0.0
      %v432 = vmax.f32 %v404, 0.0
      %v433 = vmax.f32 %v405, 0.0
      %v434 = vmax.f32 %v406, 0.0
      %v435 = vmax.f32 %v407, 0.0
      %v436 = vmax.f32 %v408, 0.0
      %v437 = vmax.f32 %v409, 0.0
      %v438 = vmax.f32 %v410, 0.0
      %v439 = vmax.f32 %v411, 0.0
      %v440 = vmax.f32 %v412, 0.0
      %v441 = vpack.c.bf16 %v413, %v413
      %v442 = vpack.c.bf16 %v414, %v414
      %v443 = vpack.c.bf16 %v415, %v415
      %v444 = vpack.c.bf16 %v416, %v416
      %v445 = vpack.c.bf16 %v417, %v417
      %v446 = vpack.c.bf16 %v418, %v418
      %v447 = vpack.c.bf16 %v419, %v419
      %v448 = vpack.c.bf16 %v420, %v420
      %v449 = vpack.c.bf16 %v421, %v421
      %v450 = vpack.c.bf16 %v422, %v422
      %v451 = vpack.c.bf16 %v423, %v423
      %v452 = vpack.c.bf16 %v424, %v424
      %v453 = vpack.c.bf16 %v425, %v425
      %v454 = vpack.c.bf16 %v426, %v426
      %v455 = vpack.c.bf16 %v427, %v427
      %v456 = vpack.c.bf16 %v428, %v428
      %v457 = vpack.c.bf16 %v429, %v429
      %v458 = vpack.c.bf16 %v430, %v430
      %v459 = vpack.c.bf16 %v431, %v431
      %v460 = vpack.c.bf16 %v432, %v432
      %v461 = vpack.c.bf16 %v433, %v433
      %v462 = vpack.c.bf16 %v434, %v434
      %v463 = vpack.c.bf16 %v435, %v435
      %v464 = vpack.c.bf16 %v436, %v436
      %v465 = vpack.c.bf16 %v437, %v437
      %v466 = vpack.c.bf16 %v438, %v438
      %v467 = vpack.c.bf16 %v439, %v439
      %v468 = vpack.c.bf16 %v440, %v440
      %v493 = vunpack.c.l.b16 %v441
      %v494 = vunpack.c.l.b16 %v442
      %v495 = vunpack.c.l.b16 %v443
      %v496 = vunpack.c.l.b16 %v444
      %v497 = vunpack.c.l.b16 %v445
      %v498 = vunpack.c.l.b16 %v446
      %v499 = vunpack.c.l.b16 %v447
      %v500 = vunpack.c.l.b16 %v448
      %v501 = vunpack.c.l.b16 %v449
      %v502 = vunpack.c.l.b16 %v450
      %v503 = vunpack.c.l.b16 %v451
      %v504 = vunpack.c.l.b16 %v452
      %v505 = vunpack.c.l.b16 %v453
      %v506 = vunpack.c.l.b16 %v454
      %v507 = vunpack.c.l.b16 %v455
      %v508 = vunpack.c.l.b16 %v456
      %v509 = vunpack.c.l.b16 %v457
      %v510 = vunpack.c.l.b16 %v458
      %v511 = vunpack.c.l.b16 %v459
      %v512 = vunpack.c.l.b16 %v460
      %v513 = vunpack.c.l.b16 %v461
      %v514 = vunpack.c.l.b16 %v462
      %v515 = vunpack.c.l.b16 %v463
      %v516 = vunpack.c.l.b16 %v464
      %v517 = vpack.c.b16 %v494, %v493
      %v518 = vpack.c.b16 %v496, %v495
      %v519 = vpack.c.b16 %v498, %v497
      %v520 = vpack.c.b16 %v500, %v499
      %v521 = vpack.c.b16 %v502, %v501
      %v522 = vpack.c.b16 %v504, %v503
      %v523 = vpack.c.b16 %v506, %v505
      %v524 = vpack.c.b16 %v508, %v507
      %v525 = vpack.c.b16 %v510, %v509
      %v526 = vpack.c.b16 %v512, %v511
      %v527 = vpack.c.b16 %v514, %v513
      %v528 = vpack.c.b16 %v516, %v515
      %v530 = vshrl.u32 %v517, 16
      %v532 = vshll.u32 %v517, 16
      %v534 = vrot.slane %v532, 1
      %v535 = vor.u32 %v530, %v534
      %v537 = vshrl.u32 %v518, 16
      %v539 = vshll.u32 %v518, 16
      %v541 = vrot.slane %v539, 1
      %v542 = vor.u32 %v537, %v541
      %v544 = vshrl.u32 %v519, 16
      %v546 = vshll.u32 %v519, 16
      %v548 = vrot.slane %v546, 1
      %v549 = vor.u32 %v544, %v548
      %v551 = vshrl.u32 %v520, 16
      %v553 = vshll.u32 %v520, 16
      %v555 = vrot.slane %v553, 1
      %v556 = vor.u32 %v551, %v555
      %v558 = vshrl.u32 %v521, 16
      %v560 = vshll.u32 %v521, 16
      %v562 = vrot.slane %v560, 1
      %v563 = vor.u32 %v558, %v562
      %v565 = vshrl.u32 %v522, 16
      %v567 = vshll.u32 %v522, 16
      %v569 = vrot.slane %v567, 1
      %v570 = vor.u32 %v565, %v569
      %v572 = vshrl.u32 %v523, 16
      %v574 = vshll.u32 %v523, 16
      %v576 = vrot.slane %v574, 1
      %v577 = vor.u32 %v572, %v576
      %v579 = vshrl.u32 %v524, 16
      %v581 = vshll.u32 %v524, 16
      %v583 = vrot.slane %v581, 1
      %v584 = vor.u32 %v579, %v583
      %v586 = vshrl.u32 %v525, 16
      %v588 = vshll.u32 %v525, 16
      %v590 = vrot.slane %v588, 1
      %v591 = vor.u32 %v586, %v590
      %v593 = vshrl.u32 %v526, 16
      %v595 = vshll.u32 %v526, 16
      %v597 = vrot.slane %v595, 1
      %v598 = vor.u32 %v593, %v597
      %v600 = vshrl.u32 %v527, 16
      %v602 = vshll.u32 %v527, 16
      %v604 = vrot.slane %v602, 1
      %v605 = vor.u32 %v600, %v604
      %v607 = vshrl.u32 %v528, 16
      %v609 = vshll.u32 %v528, 16
      %v611 = vrot.slane %v609, 1
      %v612 = vor.u32 %v607, %v611
      %v613 = vrot.slane %v517, 1
      %v614 = vrot.slane %v518, 1
      %v615 = vrot.slane %v519, 1
      %v616 = vrot.slane %v520, 1
      %v617 = vrot.slane %v521, 1
      %v618 = vrot.slane %v522, 1
      %v619 = vrot.slane %v523, 1
      %v620 = vrot.slane %v524, 1
      %v621 = vrot.slane %v525, 1
      %v622 = vrot.slane %v526, 1
      %v623 = vrot.slane %v527, 1
      %v624 = vrot.slane %v528, 1
      %v627 = vunpack.c.l.b16 %v465
      %v628 = vunpack.c.l.b16 %v466
      %v629 = vpack.c.b16 %v628, %v627
      %v631 = vshrl.u32 %v629, 16
      %v633 = vshll.u32 %v629, 16
      %v635 = vrot.slane %v633, 1
      %v636 = vor.u32 %v631, %v635
      %v637 = vrot.slane %v629, 1
      %v640 = vunpack.c.l.b16 %v467
      %v641 = vunpack.c.l.b16 %v468
      %v642 = vpack.c.b16 %v641, %v640
      %v644 = vshrl.u32 %v642, 16
      %v646 = vshll.u32 %v642, 16
      %v648 = vrot.slane %v646, 1
      %v649 = vor.u32 %v644, %v648
      %v650 = vrot.slane %v642, 1
      %v651 = vrot.slane %v535, 6
      %v652 = vrot.slane %v613, 4
      %v653 = vrot.slane %v518, 2
      %v654 = vrot.slane %v614, 6
      %v655 = vrot.slane %v519, 4
      %v656 = vrot.slane %v549, 2
      %v657 = vrot.slane %v542, 6
      %v658 = vrot.slane %v614, 4
      %v659 = vrot.slane %v519, 2
      %v660 = vrot.slane %v615, 6
      %v661 = vrot.slane %v520, 4
      %v662 = vrot.slane %v556, 2
      %v663 = vrot.slane %v549, 6
      %v664 = vrot.slane %v615, 4
      %v665 = vrot.slane %v520, 2
      %v666 = vrot.slane %v616, 6
      %v667 = vrot.slane %v521, 4
      %v668 = vrot.slane %v563, 2
      %v669 = vrot.slane %v556, 6
      %v670 = vrot.slane %v616, 4
      %v671 = vrot.slane %v521, 2
      %v672 = vrot.slane %v617, 6
      %v673 = vrot.slane %v522, 4
      %v674 = vrot.slane %v570, 2
      %v675 = vrot.slane %v563, 6
      %v676 = vrot.slane %v617, 4
      %v677 = vrot.slane %v522, 2
      %v678 = vrot.slane %v618, 6
      %v679 = vrot.slane %v523, 4
      %v680 = vrot.slane %v577, 2
      %v681 = vrot.slane %v570, 6
      %v682 = vrot.slane %v618, 4
      %v683 = vrot.slane %v523, 2
      %v684 = vrot.slane %v619, 6
      %v685 = vrot.slane %v524, 4
      %v686 = vrot.slane %v584, 2
      %v687 = vrot.slane %v577, 6
      %v688 = vrot.slane %v619, 4
      %v689 = vrot.slane %v524, 2
      %v690 = vrot.slane %v620, 6
      %v691 = vrot.slane %v525, 4
      %v692 = vrot.slane %v591, 2
      %v693 = vrot.slane %v584, 6
      %v694 = vrot.slane %v620, 4
      %v695 = vrot.slane %v525, 2
      %v696 = vrot.slane %v621, 6
      %v697 = vrot.slane %v526, 4
      %v698 = vrot.slane %v598, 2
      %v699 = vrot.slane %v591, 6
      %v700 = vrot.slane %v621, 4
      %v701 = vrot.slane %v526, 2
      %v702 = vrot.slane %v622, 6
      %v703 = vrot.slane %v527, 4
      %v704 = vrot.slane %v605, 2
      %v705 = vrot.slane %v598, 6
      %v706 = vrot.slane %v622, 4
      %v707 = vrot.slane %v527, 2
      %v708 = vrot.slane %v623, 6
      %v709 = vrot.slane %v528, 4
      %v710 = vrot.slane %v612, 2
      %v711 = vrot.slane %v605, 6
      %v712 = vrot.slane %v623, 4
      %v713 = vrot.slane %v528, 2
      %v714 = vrot.slane %v624, 6
      %v715 = vrot.slane %v629, 4
      %v716 = vrot.slane %v636, 2
      %v717 = vrot.slane %v612, 6
      %v718 = vrot.slane %v624, 4
      %v719 = vrot.slane %v629, 2
      %v720 = vrot.slane %v637, 6
      %v721 = vrot.slane %v642, 4
      %v722 = vrot.slane %v649, 2
      %vm723 = vcmask 1041408
      %v725 = vsel %vm723, %v517, %v651
      %vm726 = vcmask 1045508
      %v729 = vsel %vm726, %v652, %v653
      %vm730 = vcmask 1043456
      %v731 = vsel %vm730, %v725, %v729
      %v734 = vsel %vm723, %v542, %v654
      %v737 = vsel %vm726, %v655, %v656
      %v738 = vsel %vm730, %v734, %v737
      %vm739 = vcmask 1043458
      %v740 = vsel %vm739, %v517, %v651
      %vm741 = vcmask 1045504
      %v742 = vsel %vm741, %v653, %v652
      %vm743 = vcmask 1045506
      %v744 = vsel %vm743, %v740, %v742
      %v746 = vrot.slane %v744, 2
      %v747 = vsel %vm739, %v542, %v654
      %v748 = vsel %vm741, %v656, %v655
      %v749 = vsel %vm743, %v747, %v748
      %v751 = vrot.slane %v749, 2
      %v752 = vrot.slane %v615, 2
      %v753 = vsel %vm726, %v517, %v651
      %v754 = vsel %vm723, %v652, %v653
      %v755 = vsel %vm730, %v754, %v753
      %v757 = vrot.slane %v755, 4
      %v758 = vsel %vm726, %v542, %v654
      %v759 = vsel %vm723, %v655, %v656
      %v760 = vsel %vm730, %v759, %v758
      %v762 = vrot.slane %v760, 4
      %v764 = vsel %vm723, %v518, %v657
      %v767 = vsel %vm726, %v658, %v659
      %v768 = vsel %vm730, %v764, %v767
      %v771 = vsel %vm723, %v549, %v660
      %v774 = vsel %vm726, %v661, %v662
      %v775 = vsel %vm730, %v771, %v774
      %v776 = vsel %vm739, %v518, %v657
      %v777 = vsel %vm741, %v659, %v658
      %v778 = vsel %vm743, %v776, %v777
      %v780 = vrot.slane %v778, 2
      %v781 = vsel %vm739, %v549, %v660
      %v782 = vsel %vm741, %v662, %v661
      %v783 = vsel %vm743, %v781, %v782
      %v785 = vrot.slane %v783, 2
      %v786 = vrot.slane %v616, 2
      %v787 = vsel %vm726, %v518, %v657
      %v788 = vsel %vm723, %v658, %v659
      %v789 = vsel %vm730, %v788, %v787
      %v791 = vrot.slane %v789, 4
      %v792 = vsel %vm726, %v549, %v660
      %v793 = vsel %vm723, %v661, %v662
      %v794 = vsel %vm730, %v793, %v792
      %v796 = vrot.slane %v794, 4
      %v798 = vsel %vm723, %v519, %v663
      %v801 = vsel %vm726, %v664, %v665
      %v802 = vsel %vm730, %v798, %v801
      %v805 = vsel %vm723, %v556, %v666
      %v808 = vsel %vm726, %v667, %v668
      %v809 = vsel %vm730, %v805, %v808
      %v810 = vsel %vm739, %v519, %v663
      %v811 = vsel %vm741, %v665, %v664
      %v812 = vsel %vm743, %v810, %v811
      %v814 = vrot.slane %v812, 2
      %v815 = vsel %vm739, %v556, %v666
      %v816 = vsel %vm741, %v668, %v667
      %v817 = vsel %vm743, %v815, %v816
      %v819 = vrot.slane %v817, 2
      %v820 = vrot.slane %v617, 2
      %v821 = vsel %vm726, %v519, %v663
      %v822 = vsel %vm723, %v664, %v665
      %v823 = vsel %vm730, %v822, %v821
      %v825 = vrot.slane %v823, 4
      %v826 = vsel %vm726, %v556, %v666
      %v827 = vsel %vm723, %v667, %v668
      %v828 = vsel %vm730, %v827, %v826
      %v830 = vrot.slane %v828, 4
      %v832 = vsel %vm723, %v520, %v669
      %v835 = vsel %vm726, %v670, %v671
      %v836 = vsel %vm730, %v832, %v835
      %v839 = vsel %vm723, %v563, %v672
      %v842 = vsel %vm726, %v673, %v674
      %v843 = vsel %vm730, %v839, %v842
      %v844 = vsel %vm739, %v520, %v669
      %v845 = vsel %vm741, %v671, %v670
      %v846 = vsel %vm743, %v844, %v845
      %v848 = vrot.slane %v846, 2
      %v849 = vsel %vm739, %v563, %v672
      %v850 = vsel %vm741, %v674, %v673
      %v851 = vsel %vm743, %v849, %v850
      %v853 = vrot.slane %v851, 2
      %v854 = vrot.slane %v618, 2
      %v855 = vsel %vm726, %v520, %v669
      %v856 = vsel %vm723, %v670, %v671
      %v857 = vsel %vm730, %v856, %v855
      %v859 = vrot.slane %v857, 4
      %v860 = vsel %vm726, %v563, %v672
      %v861 = vsel %vm723, %v673, %v674
      %v862 = vsel %vm730, %v861, %v860
      %v864 = vrot.slane %v862, 4
      %v866 = vsel %vm723, %v521, %v675
      %v869 = vsel %vm726, %v676, %v677
      %v870 = vsel %vm730, %v866, %v869
      %v873 = vsel %vm723, %v570, %v678
      %v876 = vsel %vm726, %v679, %v680
      %v877 = vsel %vm730, %v873, %v876
      %v878 = vsel %vm739, %v521, %v675
      %v879 = vsel %vm741, %v677, %v676
      %v880 = vsel %vm743, %v878, %v879
      %v882 = vrot.slane %v880, 2
      %v883 = vsel %vm739, %v570, %v678
      %v884 = vsel %vm741, %v680, %v679
      %v885 = vsel %vm743, %v883, %v884
      %v887 = vrot.slane %v885, 2
      %v888 = vrot.slane %v619, 2
      %v889 = vsel %vm726, %v521, %v675
      %v890 = vsel %vm723, %v676, %v677
      %v891 = vsel %vm730, %v890, %v889
      %v893 = vrot.slane %v891, 4
      %v894 = vsel %vm726, %v570, %v678
      %v895 = vsel %vm723, %v679, %v680
      %v896 = vsel %vm730, %v895, %v894
      %v898 = vrot.slane %v896, 4
      %v900 = vsel %vm723, %v522, %v681
      %v903 = vsel %vm726, %v682, %v683
      %v904 = vsel %vm730, %v900, %v903
      %v907 = vsel %vm723, %v577, %v684
      %v910 = vsel %vm726, %v685, %v686
      %v911 = vsel %vm730, %v907, %v910
      %v912 = vsel %vm739, %v522, %v681
      %v913 = vsel %vm741, %v683, %v682
      %v914 = vsel %vm743, %v912, %v913
      %v916 = vrot.slane %v914, 2
      %v917 = vsel %vm739, %v577, %v684
      %v918 = vsel %vm741, %v686, %v685
      %v919 = vsel %vm743, %v917, %v918
      %v921 = vrot.slane %v919, 2
      %v922 = vrot.slane %v620, 2
      %v923 = vsel %vm726, %v522, %v681
      %v924 = vsel %vm723, %v682, %v683
      %v925 = vsel %vm730, %v924, %v923
      %v927 = vrot.slane %v925, 4
      %v928 = vsel %vm726, %v577, %v684
      %v929 = vsel %vm723, %v685, %v686
      %v930 = vsel %vm730, %v929, %v928
      %v932 = vrot.slane %v930, 4
      %v934 = vsel %vm723, %v523, %v687
      %v937 = vsel %vm726, %v688, %v689
      %v938 = vsel %vm730, %v934, %v937
      %v941 = vsel %vm723, %v584, %v690
      %v944 = vsel %vm726, %v691, %v692
      %v945 = vsel %vm730, %v941, %v944
      %v946 = vsel %vm739, %v523, %v687
      %v947 = vsel %vm741, %v689, %v688
      %v948 = vsel %vm743, %v946, %v947
      %v950 = vrot.slane %v948, 2
      %v951 = vsel %vm739, %v584, %v690
      %v952 = vsel %vm741, %v692, %v691
      %v953 = vsel %vm743, %v951, %v952
      %v955 = vrot.slane %v953, 2
      %v956 = vrot.slane %v621, 2
      %v957 = vsel %vm726, %v523, %v687
      %v958 = vsel %vm723, %v688, %v689
      %v959 = vsel %vm730, %v958, %v957
      %v961 = vrot.slane %v959, 4
      %v962 = vsel %vm726, %v584, %v690
      %v963 = vsel %vm723, %v691, %v692
      %v964 = vsel %vm730, %v963, %v962
      %v966 = vrot.slane %v964, 4
      %v968 = vsel %vm723, %v524, %v693
      %v971 = vsel %vm726, %v694, %v695
      %v972 = vsel %vm730, %v968, %v971
      %v975 = vsel %vm723, %v591, %v696
      %v978 = vsel %vm726, %v697, %v698
      %v979 = vsel %vm730, %v975, %v978
      %v980 = vsel %vm739, %v524, %v693
      %v981 = vsel %vm741, %v695, %v694
      %v982 = vsel %vm743, %v980, %v981
      %v984 = vrot.slane %v982, 2
      %v985 = vsel %vm739, %v591, %v696
      %v986 = vsel %vm741, %v698, %v697
      %v987 = vsel %vm743, %v985, %v986
      %v989 = vrot.slane %v987, 2
      %v990 = vrot.slane %v622, 2
      %v991 = vsel %vm726, %v524, %v693
      %v992 = vsel %vm723, %v694, %v695
      %v993 = vsel %vm730, %v992, %v991
      %v995 = vrot.slane %v993, 4
      %v996 = vsel %vm726, %v591, %v696
      %v997 = vsel %vm723, %v697, %v698
      %v998 = vsel %vm730, %v997, %v996
      %v1000 = vrot.slane %v998, 4
      %v1002 = vsel %vm723, %v525, %v699
      %v1005 = vsel %vm726, %v700, %v701
      %v1006 = vsel %vm730, %v1002, %v1005
      %v1009 = vsel %vm723, %v598, %v702
      %v1012 = vsel %vm726, %v703, %v704
      %v1013 = vsel %vm730, %v1009, %v1012
      %v1014 = vsel %vm739, %v525, %v699
      %v1015 = vsel %vm741, %v701, %v700
      %v1016 = vsel %vm743, %v1014, %v1015
      %v1018 = vrot.slane %v1016, 2
      %v1019 = vsel %vm739, %v598, %v702
      %v1020 = vsel %vm741, %v704, %v703
      %v1021 = vsel %vm743, %v1019, %v1020
      %v1023 = vrot.slane %v1021, 2
      %v1024 = vrot.slane %v623, 2
      %v1025 = vsel %vm726, %v525, %v699
      %v1026 = vsel %vm723, %v700, %v701
      %v1027 = vsel %vm730, %v1026, %v1025
      %v1029 = vrot.slane %v1027, 4
      %v1030 = vsel %vm726, %v598, %v702
      %v1031 = vsel %vm723, %v703, %v704
      %v1032 = vsel %vm730, %v1031, %v1030
      %v1034 = vrot.slane %v1032, 4
      %v1036 = vsel %vm723, %v526, %v705
      %v1039 = vsel %vm726, %v706, %v707
      %v1040 = vsel %vm730, %v1036, %v1039
      %v1043 = vsel %vm723, %v605, %v708
      %v1046 = vsel %vm726, %v709, %v710
      %v1047 = vsel %vm730, %v1043, %v1046
      %v1048 = vsel %vm739, %v526, %v705
      %v1049 = vsel %vm741, %v707, %v706
      %v1050 = vsel %vm743, %v1048, %v1049
      %v1052 = vrot.slane %v1050, 2
      %v1053 = vsel %vm739, %v605, %v708
      %v1054 = vsel %vm741, %v710, %v709
      %v1055 = vsel %vm743, %v1053, %v1054
      %v1057 = vrot.slane %v1055, 2
      %v1058 = vrot.slane %v624, 2
      %v1059 = vsel %vm726, %v526, %v705
      %v1060 = vsel %vm723, %v706, %v707
      %v1061 = vsel %vm730, %v1060, %v1059
      %v1063 = vrot.slane %v1061, 4
      %v1064 = vsel %vm726, %v605, %v708
      %v1065 = vsel %vm723, %v709, %v710
      %v1066 = vsel %vm730, %v1065, %v1064
      %v1068 = vrot.slane %v1066, 4
      %v1070 = vsel %vm723, %v527, %v711
      %v1073 = vsel %vm726, %v712, %v713
      %v1074 = vsel %vm730, %v1070, %v1073
      %v1077 = vsel %vm723, %v612, %v714
      %v1080 = vsel %vm726, %v715, %v716
      %v1081 = vsel %vm730, %v1077, %v1080
      %v1082 = vsel %vm739, %v527, %v711
      %v1083 = vsel %vm741, %v713, %v712
      %v1084 = vsel %vm743, %v1082, %v1083
      %v1086 = vrot.slane %v1084, 2
      %v1087 = vsel %vm739, %v612, %v714
      %v1088 = vsel %vm741, %v716, %v715
      %v1089 = vsel %vm743, %v1087, %v1088
      %v1091 = vrot.slane %v1089, 2
      %v1092 = vrot.slane %v637, 2
      %v1093 = vsel %vm726, %v527, %v711
      %v1094 = vsel %vm723, %v712, %v713
      %v1095 = vsel %vm730, %v1094, %v1093
      %v1097 = vrot.slane %v1095, 4
      %v1098 = vsel %vm726, %v612, %v714
      %v1099 = vsel %vm723, %v715, %v716
      %v1100 = vsel %vm730, %v1099, %v1098
      %v1102 = vrot.slane %v1100, 4
      %v1103 = vrot.slane %v637, 4
      %v1105 = vsel %vm723, %v528, %v717
      %v1108 = vsel %vm726, %v718, %v719
      %v1109 = vsel %vm730, %v1105, %v1108
      %v1112 = vsel %vm723, %v636, %v720
      %v1115 = vsel %vm726, %v721, %v722
      %v1116 = vsel %vm730, %v1112, %v1115
      %v1117 = vsel %vm739, %v528, %v717
      %v1118 = vsel %vm741, %v719, %v718
      %v1119 = vsel %vm743, %v1117, %v1118
      %v1121 = vrot.slane %v1119, 2
      %v1122 = vsel %vm739, %v636, %v720
      %v1123 = vsel %vm741, %v722, %v721
      %v1124 = vsel %vm743, %v1122, %v1123
      %v1126 = vrot.slane %v1124, 2
      %v1127 = vrot.slane %v650, 2
      %v1128 = vsel %vm726, %v528, %v717
      %v1129 = vsel %vm723, %v718, %v719
      %v1130 = vsel %vm730, %v1129, %v1128
      %v1132 = vrot.slane %v1130, 4
      %v1133 = vsel %vm726, %v636, %v720
      %v1134 = vsel %vm723, %v721, %v722
      %v1135 = vsel %vm730, %v1134, %v1133
      %v1137 = vrot.slane %v1135, 4
      %v1138 = vrot.slane %v650, 4
      %v1139 = vld [vmem:[%s1] sm:$0xf]
      %v1140 = vld [vmem:[%s1 + $0x4] sm:$0xf]
      %v1141 = vld [vmem:[%s1 + $0x8] sm:$0xf]
      %v1142 = vld [vmem:[%s1 + $0xc] sm:$0xf]
      %v1143 = vld [vmem:[%s1 + $0x10] sm:$0xf]
      %v1144 = vld [vmem:[%s1 + $0x14] sm:$0xf]
      %v1145 = vld [vmem:[%s1 + $0x18] sm:$0xf]
      %v1146 = vld [vmem:[%s1 + $0x1c] sm:$0xf]
      %v1147 = vld [vmem:[%s1 + $0x20] sm:$0xf]
      %v1148 = vld [vmem:[%s1 + $0x24] sm:$0xf]
      %v1149 = vld [vmem:[%s1 + $0x28] sm:$0xf]
      %v1150 = vld [vmem:[%s1 + $0x2c] sm:$0xf]
      %v1151 = vld [vmem:[%s1 + $0x30] sm:$0xf]
      %v1152 = vld [vmem:[%s1 + $0x34] sm:$0xf]
      %v1153 = vld [vmem:[%s1 + $0x38] sm:$0xf]
      %v1154 = vld [vmem:[%s1 + $0x3c] sm:$0xf]
      %v1155 = vld [vmem:[%s1 + $0x40] sm:$0xf]
      %v1156 = vld [vmem:[%s1 + $0x44] sm:$0xf]
      %v1157 = vld [vmem:[%s1 + $0x48] sm:$0xf]
      %v1158 = vld [vmem:[%s1 + $0x4c] sm:$0xf]
      %v1159 = vld [vmem:[%s1 + $0x50] sm:$0xf]
      %v1160 = vld [vmem:[%s1 + $0x54] sm:$0xf]
      %v1161 = vld [vmem:[%s1 + $0x58] sm:$0xf]
      %v1162 = vld [vmem:[%s1 + $0x5c] sm:$0xf]
      %v1163 = vld [vmem:[%s1 + $0x60] sm:$0xf]
      %v1164 = vld [vmem:[%s1 + $0x64] sm:$0xf]
      %v1165 = vld [vmem:[%s1 + $0x68] sm:$0xf]
      %v1166 = vld [vmem:[%s1 + $0x6c] sm:$0xf]
      %v1167 = vld [vmem:[%s1 + $0x70] sm:$0xf]
      %v1168 = vld [vmem:[%s1 + $0x74] sm:$0xf]
      %v1169 = vld [vmem:[%s1 + $0x78] sm:$0xf]
      %v1170 = vld [vmem:[%s1 + $0x7c] sm:$0xf]
      %v1171 = vld [vmem:[%s1 + $0x80] sm:$0xf]
      %v1172 = vld [vmem:[%s1 + $0x84] sm:$0xf]
      %v1173 = vld [vmem:[%s1 + $0x88] sm:$0xf]
      %v1174 = vld [vmem:[%s1 + $0x8c] sm:$0xf]
      %v1175 = vld [vmem:[%s1 + $0x90] sm:$0xf]
      %v1176 = vld [vmem:[%s1 + $0x94] sm:$0xf]
      %v1177 = vld [vmem:[%s1 + $0x98] sm:$0xf]
      %v1178 = vld [vmem:[%s1 + $0x9c] sm:$0xf]
      %v1179 = vld [vmem:[%s1 + $0xa0] sm:$0xf]
      %v1180 = vld [vmem:[%s1 + $0xa4] sm:$0xf]
      %v1181 = vld [vmem:[%s1 + $0xa8] sm:$0xf]
      %v1182 = vld [vmem:[%s1 + $0xac] sm:$0xf]
      %v1183 = vld [vmem:[%s1 + $0xb0] sm:$0xf]
      %v1184 = vld [vmem:[%s1 + $0xb4] sm:$0xf]
      %v1185 = vld [vmem:[%s1 + $0xb8] sm:$0xf]
      %v1186 = vld [vmem:[%s1 + $0xbc] sm:$0xf]
      %v1187 = vld [vmem:[%s1 + $0xc0] sm:$0xf]
      %v1188 = vld [vmem:[%s1 + $0xc4] sm:$0xf]
      %v1189 = vld [vmem:[%s1 + $0xc8] sm:$0xf]
      %v1190 = vld [vmem:[%s1 + $0xcc] sm:$0xf]
      %v1191 = vld [vmem:[%s1 + $0xd0] sm:$0xf]
      %v1192 = vld [vmem:[%s1 + $0xd4] sm:$0xf]
      %v1193 = vld [vmem:[%s1 + $0xd8] sm:$0xf]
      %v1194 = vld [vmem:[%s1 + $0xdc] sm:$0xf]
      %v1195 = vld [vmem:[%s1 + $0xe0] sm:$0xf]
      %v1196 = vld [vmem:[%s1 + $0xe4] sm:$0xf]
      %v1197 = vld [vmem:[%s1 + $0xe8] sm:$0xf]
      %v1198 = vld [vmem:[%s1 + $0xec] sm:$0xf]
      %v1199 = vld [vmem:[%s1 + $0xf0] sm:$0xf]
      %v1200 = vld [vmem:[%s1 + $0xf4] sm:$0xf]
      %v1201 = vld [vmem:[%s1 + $0xf8] sm:$0xf]
      %v1202 = vld [vmem:[%s1 + $0xfc] sm:$0xf]
      %v1203 = vld [vmem:[%s1 + $0x100] sm:$0xf]
      %v1204 = vld [vmem:[%s1 + $0x104] sm:$0xf]
      %v1205 = vld [vmem:[%s1 + $0x108] sm:$0xf]
      %v1206 = vld [vmem:[%s1 + $0x10c] sm:$0xf]
      %v1207 = vld [vmem:[%s1 + $0x110] sm:$0xf]
      %v1208 = vld [vmem:[%s1 + $0x114] sm:$0xf]
      %v1209 = vld [vmem:[%s1 + $0x118] sm:$0xf]
      %v1210 = vld [vmem:[%s1 + $0x11c] sm:$0xf]
      %v1211 = vld [vmem:[%s1 + $0x120] sm:$0xf]
      %v1212 = vld [vmem:[%s1 + $0x124] sm:$0xf]
      %v1213 = vld [vmem:[%s1 + $0x128] sm:$0xf]
      %v1214 = vld [vmem:[%s1 + $0x12c] sm:$0xf]
      %v1215 = vld [vmem:[%s1 + $0x130] sm:$0xf]
      %v1216 = vld [vmem:[%s1 + $0x134] sm:$0xf]
      %v1217 = vld [vmem:[%s1 + $0x138] sm:$0xf]
      %v1218 = vld [vmem:[%s1 + $0x13c] sm:$0xf]
      %v1219 = vld [vmem:[%s1 + $0x140] sm:$0xf]
      %v1220 = vld [vmem:[%s1 + $0x144] sm:$0xf]
      %v1221 = vld [vmem:[%s1 + $0x148] sm:$0xf]
      %v1222 = vld [vmem:[%s1 + $0x14c] sm:$0xf]
      %v1223 = vld [vmem:[%s1 + $0x150] sm:$0xf]
      %v1224 = vld [vmem:[%s1 + $0x154] sm:$0xf]
      %v1225 = vld [vmem:[%s1 + $0x158] sm:$0xf]
      %v1226 = vld [vmem:[%s1 + $0x15c] sm:$0xf]
      %v1227 = vld [vmem:[%s1 + $0x160] sm:$0xf]
      %v1228 = vld [vmem:[%s1 + $0x164] sm:$0xf]
      %v1229 = vld [vmem:[%s1 + $0x168] sm:$0xf]
      %v1230 = vld [vmem:[%s1 + $0x16c] sm:$0xf]
      %v1231 = vld [vmem:[%s1 + $0x170] sm:$0xf]
      %v1232 = vld [vmem:[%s1 + $0x174] sm:$0xf]
      %v1233 = vld [vmem:[%s1 + $0x178] sm:$0xf]
      %v1234 = vld [vmem:[%s1 + $0x17c] sm:$0xf]
      %v1235 = vld [vmem:[%s1 + $0x180] sm:$0xf]
      %v1236 = vld [vmem:[%s1 + $0x184] sm:$0xf]
      %v1237 = vld [vmem:[%s1 + $0x188] sm:$0xf]
      %v1238 = vld [vmem:[%s1 + $0x18c] sm:$0xf]
      %v1239 = vld [vmem:[%s1 + $0x190] sm:$0xf]
      %v1240 = vld [vmem:[%s1 + $0x194] sm:$0xf]
      %v1241 = vld [vmem:[%s1 + $0x198] sm:$0xf]
      %v1242 = vld [vmem:[%s1 + $0x19c] sm:$0xf]
      %v1243 = vld [vmem:[%s1 + $0x1a0] sm:$0xf]
      %v1244 = vld [vmem:[%s1 + $0x1a4] sm:$0xf]
      %v1245 = vld [vmem:[%s1 + $0x1a8] sm:$0xf]
      %v1246 = vld [vmem:[%s1 + $0x1ac] sm:$0xf]
      %v1247 = vld [vmem:[%s1 + $0x1b0] sm:$0xf]
      %v1248 = vld [vmem:[%s1 + $0x1b4] sm:$0xf]
      %v1249 = vld [vmem:[%s1 + $0x1b8] sm:$0xf]
      %v1250 = vld [vmem:[%s1 + $0x1bc] sm:$0xf]
      %v1251 = vld [vmem:[%s1 + $0x1c0] sm:$0xf]
      %v1252 = vld [vmem:[%s1 + $0x1c4] sm:$0xf]
      %v1253 = vld [vmem:[%s1 + $0x1c8] sm:$0xf]
      %v1254 = vld [vmem:[%s1 + $0x1cc] sm:$0xf]
      %v1255 = vld [vmem:[%s1 + $0x1d0] sm:$0xf]
      %v1256 = vld [vmem:[%s1 + $0x1d4] sm:$0xf]
      %v1257 = vld [vmem:[%s1 + $0x1d8] sm:$0xf]
      %v1258 = vld [vmem:[%s1 + $0x1dc] sm:$0xf]
      %v1259 = vld [vmem:[%s1 + $0x1e0] sm:$0xf]
      %v1260 = vld [vmem:[%s1 + $0x1e4] sm:$0xf]
      %v1261 = vld [vmem:[%s1 + $0x1e8] sm:$0xf]
      %v1262 = vld [vmem:[%s1 + $0x1ec] sm:$0xf]
      %v1263 = vld [vmem:[%s1 + $0x1f0] sm:$0xf]
      %v1264 = vld [vmem:[%s1 + $0x1f4] sm:$0xf]
      %v1265 = vld [vmem:[%s1 + $0x1f8] sm:$0xf]
      %v1266 = vld [vmem:[%s1 + $0x1fc] sm:$0xf]
      %v1267 = vld [vmem:[%s1 + $0x200] sm:$0xf]
      %v1268 = vld [vmem:[%s1 + $0x204] sm:$0xf]
      %v1269 = vld [vmem:[%s1 + $0x208] sm:$0xf]
      %v1270 = vld [vmem:[%s1 + $0x20c] sm:$0xf]
      %v1271 = vld [vmem:[%s1 + $0x210] sm:$0xf]
      %v1272 = vld [vmem:[%s1 + $0x214] sm:$0xf]
      %v1273 = vld [vmem:[%s1 + $0x218] sm:$0xf]
      %v1274 = vld [vmem:[%s1 + $0x21c] sm:$0xf]
      %v1275 = vld [vmem:[%s1 + $0x220] sm:$0xf]
      %v1276 = vld [vmem:[%s1 + $0x224] sm:$0xf]
      %v1277 = vld [vmem:[%s1 + $0x228] sm:$0xf]
      %v1278 = vld [vmem:[%s1 + $0x22c] sm:$0xf]
      %v1279 = vld [vmem:[%s1 + $0x230] sm:$0xf]
      %v1280 = vld [vmem:[%s1 + $0x234] sm:$0xf]
      %v1281 = vld [vmem:[%s1 + $0x238] sm:$0xf]
      %v1282 = vld [vmem:[%s1 + $0x23c] sm:$0xf]
      %1283 = vst [vmem:[#allocation1] ss:$4 sm:$0xff] %v731
      %s1285 = scalar_lea.vmem [#allocation1], 1
      %1286 = vst [vmem:[%s1285] ss:$4 sm:$0xff] %v746
      %s1288 = scalar_lea.vmem [#allocation1], 2
      %1289 = vst [vmem:[%s1288] ss:$4 sm:$0xff] %v757
      %s1290 = scalar_lea.vmem [#allocation1], 3
      %1291 = vst [vmem:[%s1290] ss:$4 sm:$0xff] %v768
      %s1292 = scalar_lea.vmem [#allocation1], 32
      %1293 = vst [vmem:[%s1292] ss:$4 sm:$0xff] %v738
      %s1295 = scalar_lea.vmem [#allocation1], 33
      %1296 = vst [vmem:[%s1295] ss:$4 sm:$0xff] %v751
      %s1298 = scalar_lea.vmem [#allocation1], 34
      %1299 = vst [vmem:[%s1298] ss:$4 sm:$0xff] %v762
      %s1300 = scalar_lea.vmem [#allocation1], 35
      %1301 = vst [vmem:[%s1300] ss:$4 sm:$0xff] %v775
      %v1302 = vld.sshfl [vmem:[#allocation1] sm:$0xff pattern:$0x73625140]
      %v1303 = vld.sshfl [vmem:[#allocation1 + $0x8] sm:$0xff pattern:$0x73625140]
      %v1304 = vld.sshfl [vmem:[#allocation1 + $0x10] sm:$0xff pattern:$0x73625140]
      %v1305 = vld.sshfl [vmem:[#allocation1 + $0x18] sm:$0xff pattern:$0x73625140]
      %v1306 = vld.sshfl [vmem:[#allocation1 + $0x20] sm:$0xff pattern:$0x73625140]
      %v1307 = vld.sshfl [vmem:[#allocation1 + $0x28] sm:$0xff pattern:$0x73625140]
      %v1308 = vld.sshfl [vmem:[#allocation1 + $0x30] sm:$0xff pattern:$0x73625140]
      %v1309 = vld.sshfl [vmem:[#allocation1 + $0x38] sm:$0xff pattern:$0x73625140]
      %1311 = vst [vmem:[#allocation1] ss:$4 sm:$0xff] %v615
      %1313 = vst [vmem:[%s1285] ss:$4 sm:$0xff] %v752
      %1314 = vst [vmem:[%s1288] ss:$4 sm:$0xff] %v664
      %1316 = vst [vmem:[%s1290] ss:$4 sm:$0xff] %v616
      %1318 = vst [vmem:[%s1292] ss:$4 sm:$0xff] %v780
      %1320 = vst [vmem:[%s1295] ss:$4 sm:$0xff] %v791
      %1321 = vst [vmem:[%s1298] ss:$4 sm:$0xff] %v802
      %1323 = vst [vmem:[%s1300] ss:$4 sm:$0xff] %v814
      %v1324 = vld.sshfl [vmem:[#allocation1] sm:$0xff pattern:$0x73625140]
      %v1325 = vld.sshfl [vmem:[#allocation1 + $0x20] sm:$0xff pattern:$0x73625140]
      %v1326 = vld.sshfl [vmem:[#allocation1 + $0x28] sm:$0xff pattern:$0x73625140]
      %v1327 = vld.sshfl [vmem:[#allocation1 + $0x30] sm:$0xff pattern:$0x73625140]
      %v1328 = vld.sshfl [vmem:[#allocation1 + $0x38] sm:$0xff pattern:$0x73625140]
      %1330 = vst [vmem:[#allocation1] ss:$4 sm:$0xff] %v785
      %1332 = vst [vmem:[%s1285] ss:$4 sm:$0xff] %v796
      %1333 = vst [vmem:[%s1288] ss:$4 sm:$0xff] %v809
      %1335 = vst [vmem:[%s1290] ss:$4 sm:$0xff] %v819
      %1337 = vst [vmem:[%s1292] ss:$4 sm:$0xff] %v786
      %1338 = vst [vmem:[%s1295] ss:$4 sm:$0xff] %v670
      %1340 = vst [vmem:[%s1298] ss:$4 sm:$0xff] %v617
      %1342 = vst [vmem:[%s1300] ss:$4 sm:$0xff] %v820
      %v1343 = vld.sshfl [vmem:[#allocation1] sm:$0xff pattern:$0x73625140]
      %v1344 = vld.sshfl [vmem:[#allocation1 + $0x8] sm:$0xff pattern:$0x73625140]
      %v1345 = vld.sshfl [vmem:[#allocation1 + $0x10] sm:$0xff pattern:$0x73625140]
      %v1346 = vld.sshfl [vmem:[#allocation1 + $0x18] sm:$0xff pattern:$0x73625140]
      %v1347 = vld.sshfl [vmem:[#allocation1 + $0x20] sm:$0xff pattern:$0x73625140]
      %1349 = vst [vmem:[#allocation1] ss:$4 sm:$0xff] %v825
      %1350 = vst [vmem:[%s1285] ss:$4 sm:$0xff] %v836
      %1352 = vst [vmem:[%s1288] ss:$4 sm:$0xff] %v848
      %1354 = vst [vmem:[%s1290] ss:$4 sm:$0xff] %v859
      %1356 = vst [vmem:[%s1292] ss:$4 sm:$0xff] %v830
      %1357 = vst [vmem:[%s1295] ss:$4 sm:$0xff] %v843
      %1359 = vst [vmem:[%s1298] ss:$4 sm:$0xff] %v853
      %1361 = vst [vmem:[%s1300] ss:$4 sm:$0xff] %v864
      %v1362 = vld.sshfl [vmem:[#allocation1] sm:$0xff pattern:$0x73625140]
      %v1363 = vld.sshfl [vmem:[#allocation1 + $0x8] sm:$0xff pattern:$0x73625140]
      %v1364 = vld.sshfl [vmem:[#allocation1 + $0x10] sm:$0xff pattern:$0x73625140]
      %v1365 = vld.sshfl [vmem:[#allocation1 + $0x18] sm:$0xff pattern:$0x73625140]
      %v1366 = vld.sshfl [vmem:[#allocation1 + $0x20] sm:$0xff pattern:$0x73625140]
      %v1367 = vld.sshfl [vmem:[#allocation1 + $0x28] sm:$0xff pattern:$0x73625140]
      %v1368 = vld.sshfl [vmem:[#allocation1 + $0x30] sm:$0xff pattern:$0x73625140]
      %v1369 = vld.sshfl [vmem:[#allocation1 + $0x38] sm:$0xff pattern:$0x73625140]
      %1370 = vst [vmem:[#allocation1] ss:$4 sm:$0xff] %v676
      %1372 = vst [vmem:[%s1285] ss:$4 sm:$0xff] %v618
      %1374 = vst [vmem:[%s1288] ss:$4 sm:$0xff] %v854
      %1375 = vst [vmem:[%s1290] ss:$4 sm:$0xff] %v682
      %1376 = vst [vmem:[%s1292] ss:$4 sm:$0xff] %v870
      %1378 = vst [vmem:[%s1295] ss:$4 sm:$0xff] %v882
      %1380 = vst [vmem:[%s1298] ss:$4 sm:$0xff] %v893
      %1381 = vst [vmem:[%s1300] ss:$4 sm:$0xff] %v904
      %v1382 = vld.sshfl [vmem:[#allocation1] sm:$0xff pattern:$0x73625140]
      %v1383 = vld.sshfl [vmem:[#allocation1 + $0x20] sm:$0xff pattern:$0x73625140]
      %v1384 = vld.sshfl [vmem:[#allocation1 + $0x28] sm:$0xff pattern:$0x73625140]
      %v1385 = vld.sshfl [vmem:[#allocation1 + $0x30] sm:$0xff pattern:$0x73625140]
      %v1386 = vld.sshfl [vmem:[#allocation1 + $0x38] sm:$0xff pattern:$0x73625140]
      %1387 = vst [vmem:[#allocation1] ss:$4 sm:$0xff] %v877
      %1389 = vst [vmem:[%s1285] ss:$4 sm:$0xff] %v887
      %1391 = vst [vmem:[%s1288] ss:$4 sm:$0xff] %v898
      %1392 = vst [vmem:[%s1290] ss:$4 sm:$0xff] %v911
      %1394 = vst [vmem:[%s1292] ss:$4 sm:$0xff] %v619
      %1396 = vst [vmem:[%s1295] ss:$4 sm:$0xff] %v888
      %1397 = vst [vmem:[%s1298] ss:$4 sm:$0xff] %v688
      %1399 = vst [vmem:[%s1300] ss:$4 sm:$0xff] %v620
      %v1400 = vld.sshfl [vmem:[#allocation1] sm:$0xff pattern:$0x73625140]
      %v1401 = vld.sshfl [vmem:[#allocation1 + $0x8] sm:$0xff pattern:$0x73625140]
      %v1402 = vld.sshfl [vmem:[#allocation1 + $0x10] sm:$0xff pattern:$0x73625140]
      %v1403 = vld.sshfl [vmem:[#allocation1 + $0x18] sm:$0xff pattern:$0x73625140]
      %v1404 = vld.sshfl [vmem:[#allocation1 + $0x20] sm:$0xff pattern:$0x73625140]
      %1406 = vst [vmem:[#allocation1] ss:$4 sm:$0xff] %v916
      %1408 = vst [vmem:[%s1285] ss:$4 sm:$0xff] %v927
      %1409 = vst [vmem:[%s1288] ss:$4 sm:$0xff] %v938
      %1411 = vst [vmem:[%s1290] ss:$4 sm:$0xff] %v950
      %1413 = vst [vmem:[%s1292] ss:$4 sm:$0xff] %v921
      %1415 = vst [vmem:[%s1295] ss:$4 sm:$0xff] %v932
      %1416 = vst [vmem:[%s1298] ss:$4 sm:$0xff] %v945
      %1418 = vst [vmem:[%s1300] ss:$4 sm:$0xff] %v955
      %v1419 = vld.sshfl [vmem:[#allocation1] sm:$0xff pattern:$0x73625140]
      %v1420 = vld.sshfl [vmem:[#allocation1 + $0x8] sm:$0xff pattern:$0x73625140]
      %v1421 = vld.sshfl [vmem:[#allocation1 + $0x10] sm:$0xff pattern:$0x73625140]
      %v1422 = vld.sshfl [vmem:[#allocation1 + $0x18] sm:$0xff pattern:$0x73625140]
      %v1423 = vld.sshfl [vmem:[#allocation1 + $0x20] sm:$0xff pattern:$0x73625140]
      %v1424 = vld.sshfl [vmem:[#allocation1 + $0x28] sm:$0xff pattern:$0x73625140]
      %v1425 = vld.sshfl [vmem:[#allocation1 + $0x30] sm:$0xff pattern:$0x73625140]
      %v1426 = vld.sshfl [vmem:[#allocation1 + $0x38] sm:$0xff pattern:$0x73625140]
      %1428 = vst [vmem:[#allocation1] ss:$4 sm:$0xff] %v922
      %1429 = vst [vmem:[%s1285] ss:$4 sm:$0xff] %v694
      %1431 = vst [vmem:[%s1288] ss:$4 sm:$0xff] %v621
      %1433 = vst [vmem:[%s1290] ss:$4 sm:$0xff] %v956
      %1435 = vst [vmem:[%s1292] ss:$4 sm:$0xff] %v961
      %1436 = vst [vmem:[%s1295] ss:$4 sm:$0xff] %v972
      %1438 = vst [vmem:[%s1298] ss:$4 sm:$0xff] %v984
      %1440 = vst [vmem:[%s1300] ss:$4 sm:$0xff] %v995
      %v1441 = vld.sshfl [vmem:[#allocation1] sm:$0xff pattern:$0x73625140]
      %v1442 = vld.sshfl [vmem:[#allocation1 + $0x20] sm:$0xff pattern:$0x73625140]
      %v1443 = vld.sshfl [vmem:[#allocation1 + $0x28] sm:$0xff pattern:$0x73625140]
      %v1444 = vld.sshfl [vmem:[#allocation1 + $0x30] sm:$0xff pattern:$0x73625140]
      %v1445 = vld.sshfl [vmem:[#allocation1 + $0x38] sm:$0xff pattern:$0x73625140]
      %1447 = vst [vmem:[#allocation1] ss:$4 sm:$0xff] %v966
      %1448 = vst [vmem:[%s1285] ss:$4 sm:$0xff] %v979
      %1450 = vst [vmem:[%s1288] ss:$4 sm:$0xff] %v989
      %1452 = vst [vmem:[%s1290] ss:$4 sm:$0xff] %v1000
      %1453 = vst [vmem:[%s1292] ss:$4 sm:$0xff] %v700
      %1455 = vst [vmem:[%s1295] ss:$4 sm:$0xff] %v622
      %1457 = vst [vmem:[%s1298] ss:$4 sm:$0xff] %v990
      %1458 = vst [vmem:[%s1300] ss:$4 sm:$0xff] %v706
      %v1459 = vld.sshfl [vmem:[#allocation1] sm:$0xff pattern:$0x73625140]
      %v1460 = vld.sshfl [vmem:[#allocation1 + $0x8] sm:$0xff pattern:$0x73625140]
      %v1461 = vld.sshfl [vmem:[#allocation1 + $0x10] sm:$0xff pattern:$0x73625140]
      %v1462 = vld.sshfl [vmem:[#allocation1 + $0x18] sm:$0xff pattern:$0x73625140]
      %v1463 = vld.sshfl [vmem:[#allocation1 + $0x20] sm:$0xff pattern:$0x73625140]
      %1464 = vst [vmem:[#allocation1] ss:$4 sm:$0xff] %v1006
      %1466 = vst [vmem:[%s1285] ss:$4 sm:$0xff] %v1018
      %1468 = vst [vmem:[%s1288] ss:$4 sm:$0xff] %v1029
      %1469 = vst [vmem:[%s1290] ss:$4 sm:$0xff] %v1040
      %1470 = vst [vmem:[%s1292] ss:$4 sm:$0xff] %v1013
      %1472 = vst [vmem:[%s1295] ss:$4 sm:$0xff] %v1023
      %1474 = vst [vmem:[%s1298] ss:$4 sm:$0xff] %v1034
      %1475 = vst [vmem:[%s1300] ss:$4 sm:$0xff] %v1047
      %v1476 = vld.sshfl [vmem:[#allocation1] sm:$0xff pattern:$0x73625140]
      %v1477 = vld.sshfl [vmem:[#allocation1 + $0x8] sm:$0xff pattern:$0x73625140]
      %v1478 = vld.sshfl [vmem:[#allocation1 + $0x10] sm:$0xff pattern:$0x73625140]
      %v1479 = vld.sshfl [vmem:[#allocation1 + $0x18] sm:$0xff pattern:$0x73625140]
      %v1480 = vld.sshfl [vmem:[#allocation1 + $0x20] sm:$0xff pattern:$0x73625140]
      %v1481 = vld.sshfl [vmem:[#allocation1 + $0x28] sm:$0xff pattern:$0x73625140]
      %v1482 = vld.sshfl [vmem:[#allocation1 + $0x30] sm:$0xff pattern:$0x73625140]
      %v1483 = vld.sshfl [vmem:[#allocation1 + $0x38] sm:$0xff pattern:$0x73625140]
      %1485 = vst [vmem:[#allocation1] ss:$4 sm:$0xff] %v623
      %1487 = vst [vmem:[%s1285] ss:$4 sm:$0xff] %v1024
      %1488 = vst [vmem:[%s1288] ss:$4 sm:$0xff] %v712
      %1490 = vst [vmem:[%s1290] ss:$4 sm:$0xff] %v624
      %1492 = vst [vmem:[%s1292] ss:$4 sm:$0xff] %v1052
      %1494 = vst [vmem:[%s1295] ss:$4 sm:$0xff] %v1063
      %1495 = vst [vmem:[%s1298] ss:$4 sm:$0xff] %v1074
      %1497 = vst [vmem:[%s1300] ss:$4 sm:$0xff] %v1086
      %v1498 = vld.sshfl [vmem:[#allocation1] sm:$0xff pattern:$0x73625140]
      %v1499 = vld.sshfl [vmem:[#allocation1 + $0x20] sm:$0xff pattern:$0x73625140]
      %v1500 = vld.sshfl [vmem:[#allocation1 + $0x28] sm:$0xff pattern:$0x73625140]
      %v1501 = vld.sshfl [vmem:[#allocation1 + $0x30] sm:$0xff pattern:$0x73625140]
      %v1502 = vld.sshfl [vmem:[#allocation1 + $0x38] sm:$0xff pattern:$0x73625140]
      %1504 = vst [vmem:[#allocation1] ss:$4 sm:$0xff] %v1057
      %1506 = vst [vmem:[%s1285] ss:$4 sm:$0xff] %v1068
      %1507 = vst [vmem:[%s1288] ss:$4 sm:$0xff] %v1081
      %1509 = vst [vmem:[%s1290] ss:$4 sm:$0xff] %v1091
      %1511 = vst [vmem:[%s1292] ss:$4 sm:$0xff] %v1058
      %1512 = vst [vmem:[%s1295] ss:$4 sm:$0xff] %v718
      %1514 = vst [vmem:[%s1298] ss:$4 sm:$0xff] %v637
      %1516 = vst [vmem:[%s1300] ss:$4 sm:$0xff] %v1092
      %v1517 = vld.sshfl [vmem:[#allocation1] sm:$0xff pattern:$0x73625140]
      %v1518 = vld.sshfl [vmem:[#allocation1 + $0x8] sm:$0xff pattern:$0x73625140]
      %v1519 = vld.sshfl [vmem:[#allocation1 + $0x10] sm:$0xff pattern:$0x73625140]
      %v1520 = vld.sshfl [vmem:[#allocation1 + $0x18] sm:$0xff pattern:$0x73625140]
      %v1521 = vld.sshfl [vmem:[#allocation1 + $0x20] sm:$0xff pattern:$0x73625140]
      %1523 = vst [vmem:[#allocation1] ss:$4 sm:$0xff] %v1097
      %1524 = vst [vmem:[%s1285] ss:$4 sm:$0xff] %v1109
      %1526 = vst [vmem:[%s1288] ss:$4 sm:$0xff] %v1121
      %1528 = vst [vmem:[%s1290] ss:$4 sm:$0xff] %v1132
      %1530 = vst [vmem:[%s1292] ss:$4 sm:$0xff] %v1102
      %1531 = vst [vmem:[%s1295] ss:$4 sm:$0xff] %v1116
      %1533 = vst [vmem:[%s1298] ss:$4 sm:$0xff] %v1126
      %1535 = vst [vmem:[%s1300] ss:$4 sm:$0xff] %v1137
      %v1536 = vld.sshfl [vmem:[#allocation1] sm:$0xff pattern:$0x73625140]
      %v1537 = vld.sshfl [vmem:[#allocation1 + $0x8] sm:$0xff pattern:$0x73625140]
      %v1538 = vld.sshfl [vmem:[#allocation1 + $0x10] sm:$0xff pattern:$0x73625140]
      %v1539 = vld.sshfl [vmem:[#allocation1 + $0x18] sm:$0xff pattern:$0x73625140]
      %v1540 = vld.sshfl [vmem:[#allocation1 + $0x20] sm:$0xff pattern:$0x73625140]
      %v1541 = vld.sshfl [vmem:[#allocation1 + $0x28] sm:$0xff pattern:$0x73625140]
      %v1542 = vld.sshfl [vmem:[#allocation1 + $0x30] sm:$0xff pattern:$0x73625140]
      %v1543 = vld.sshfl [vmem:[#allocation1 + $0x38] sm:$0xff pattern:$0x73625140]
      %1545 = vst [vmem:[#allocation1] ss:$4 sm:$0xff] %v1103
      %1547 = vst [vmem:[%s1285] ss:$4 sm:$0xff] %v650
      %1549 = vst [vmem:[%s1288] ss:$4 sm:$0xff] %v1127
      %1551 = vst [vmem:[%s1290] ss:$4 sm:$0xff] %v1138
      %v1552 = vld.sshfl [vmem:[#allocation1] sm:$0xff pattern:$0x73625140]
      %v1778 = vunpack.c.l.b16 %v1139
      %v1779 = vunpack.c.l.b16 %v1140
      %v1780 = vunpack.c.l.b16 %v1141
      %v1781 = vunpack.c.l.b16 %v1142
      %v1782 = vunpack.c.l.b16 %v1143
      %v1783 = vunpack.c.l.b16 %v1144
      %v1784 = vunpack.c.l.b16 %v1145
      %v1785 = vunpack.c.l.b16 %v1146
      %v1786 = vunpack.c.l.b16 %v1147
      %v1787 = vunpack.c.l.b16 %v1148
      %v1788 = vunpack.c.l.b16 %v1149
      %v1789 = vunpack.c.l.b16 %v1150
      %v1790 = vunpack.c.l.b16 %v1151
      %v1791 = vunpack.c.l.b16 %v1152
      %v1792 = vunpack.c.l.b16 %v1153
      %v1793 = vunpack.c.l.b16 %v1154
      %v1794 = vunpack.c.l.b16 %v1155
      %v1795 = vunpack.c.l.b16 %v1156
      %v1796 = vunpack.c.l.b16 %v1157
      %v1797 = vunpack.c.l.b16 %v1158
      %v1798 = vunpack.c.l.b16 %v1159
      %v1799 = vunpack.c.l.b16 %v1160
      %v1800 = vunpack.c.l.b16 %v1161
      %v1801 = vunpack.c.l.b16 %v1162
      %v1802 = vunpack.c.l.b16 %v1163
      %v1803 = vunpack.c.l.b16 %v1164
      %v1804 = vunpack.c.l.b16 %v1165
      %v1805 = vunpack.c.l.b16 %v1166
      %v1806 = vunpack.c.l.b16 %v1167
      %v1807 = vunpack.c.l.b16 %v1168
      %v1808 = vunpack.c.l.b16 %v1169
      %v1809 = vunpack.c.l.b16 %v1170
      %v1810 = vunpack.c.l.b16 %v1171
      %v1811 = vunpack.c.l.b16 %v1172
      %v1812 = vunpack.c.l.b16 %v1173
      %v1813 = vunpack.c.l.b16 %v1174
      %v1814 = vunpack.c.l.b16 %v1175
      %v1815 = vunpack.c.l.b16 %v1176
      %v1816 = vunpack.c.l.b16 %v1177
      %v1817 = vunpack.c.l.b16 %v1178
      %v1818 = vunpack.c.l.b16 %v1179
      %v1819 = vunpack.c.l.b16 %v1180
      %v1820 = vunpack.c.l.b16 %v1181
      %v1821 = vunpack.c.l.b16 %v1182
      %v1822 = vunpack.c.l.b16 %v1183
      %v1823 = vunpack.c.l.b16 %v1184
      %v1824 = vunpack.c.l.b16 %v1185
      %v1825 = vunpack.c.l.b16 %v1186
      %v1826 = vunpack.c.l.b16 %v1187
      %v1827 = vunpack.c.l.b16 %v1188
      %v1828 = vunpack.c.l.b16 %v1189
      %v1829 = vunpack.c.l.b16 %v1190
      %v1830 = vunpack.c.l.b16 %v1191
      %v1831 = vunpack.c.l.b16 %v1192
      %v1832 = vunpack.c.l.b16 %v1193
      %v1833 = vunpack.c.l.b16 %v1194
      %v1834 = vunpack.c.l.b16 %v1195
      %v1835 = vunpack.c.l.b16 %v1196
      %v1836 = vunpack.c.l.b16 %v1197
      %v1837 = vunpack.c.l.b16 %v1198
      %v1838 = vunpack.c.l.b16 %v1199
      %v1839 = vunpack.c.l.b16 %v1200
      %v1840 = vunpack.c.l.b16 %v1201
      %v1841 = vunpack.c.l.b16 %v1202
      %v1842 = vunpack.c.l.b16 %v1203
      %v1843 = vunpack.c.l.b16 %v1204
      %v1844 = vunpack.c.l.b16 %v1205
      %v1845 = vunpack.c.l.b16 %v1206
      %v1846 = vunpack.c.l.b16 %v1207
      %v1847 = vunpack.c.l.b16 %v1208
      %v1848 = vunpack.c.l.b16 %v1209
      %v1849 = vunpack.c.l.b16 %v1210
      %v1850 = vunpack.c.l.b16 %v1211
      %v1851 = vunpack.c.l.b16 %v1212
      %v1852 = vunpack.c.l.b16 %v1213
      %v1853 = vunpack.c.l.b16 %v1214
      %v1854 = vunpack.c.l.b16 %v1215
      %v1855 = vunpack.c.l.b16 %v1216
      %v1856 = vunpack.c.l.b16 %v1217
      %v1857 = vunpack.c.l.b16 %v1218
      %v1858 = vunpack.c.l.b16 %v1219
      %v1859 = vunpack.c.l.b16 %v1220
      %v1860 = vunpack.c.l.b16 %v1221
      %v1861 = vunpack.c.l.b16 %v1222
      %v1862 = vunpack.c.l.b16 %v1223
      %v1863 = vunpack.c.l.b16 %v1224
      %v1864 = vunpack.c.l.b16 %v1225
      %v1865 = vunpack.c.l.b16 %v1226
      %v1866 = vunpack.c.l.b16 %v1227
      %v1867 = vunpack.c.l.b16 %v1228
      %v1868 = vunpack.c.l.b16 %v1229
      %v1869 = vunpack.c.l.b16 %v1230
      %v1870 = vunpack.c.l.b16 %v1231
      %v1871 = vunpack.c.l.b16 %v1232
      %v1872 = vunpack.c.l.b16 %v1233
      %v1873 = vunpack.c.l.b16 %v1234
      %v1874 = vunpack.c.l.b16 %v1235
      %v1875 = vunpack.c.l.b16 %v1236
      %v1876 = vunpack.c.l.b16 %v1237
      %v1877 = vunpack.c.l.b16 %v1238
      %v1878 = vunpack.c.l.b16 %v1239
      %v1879 = vunpack.c.l.b16 %v1240
      %v1880 = vunpack.c.l.b16 %v1241
      %v1881 = vunpack.c.l.b16 %v1242
      %v1882 = vunpack.c.l.b16 %v1243
      %v1883 = vunpack.c.l.b16 %v1244
      %v1884 = vunpack.c.l.b16 %v1245
      %v1885 = vunpack.c.l.b16 %v1246
      %v1886 = vunpack.c.l.b16 %v1247
      %v1887 = vunpack.c.l.b16 %v1248
      %v1888 = vunpack.c.l.b16 %v1249
      %v1889 = vunpack.c.l.b16 %v1250
      %v1890 = vunpack.c.l.b16 %v1251
      %v1891 = vunpack.c.l.b16 %v1252
      %v1892 = vunpack.c.l.b16 %v1253
      %v1893 = vunpack.c.l.b16 %v1254
      %v1894 = vunpack.c.l.b16 %v1255
      %v1895 = vunpack.c.l.b16 %v1256
      %v1896 = vunpack.c.l.b16 %v1257
      %v1897 = vunpack.c.l.b16 %v1258
      %v1898 = vunpack.c.l.b16 %v1259
      %v1899 = vunpack.c.l.b16 %v1260
      %v1900 = vunpack.c.l.b16 %v1261
      %v1901 = vunpack.c.l.b16 %v1262
      %v1902 = vunpack.c.l.b16 %v1263
      %v1903 = vunpack.c.l.b16 %v1264
      %v1904 = vunpack.c.l.b16 %v1265
      %v1905 = vunpack.c.l.b16 %v1266
      %v1906 = vunpack.c.l.b16 %v1267
      %v1907 = vunpack.c.l.b16 %v1268
      %v1908 = vunpack.c.l.b16 %v1269
      %v1909 = vunpack.c.l.b16 %v1270
      %v1910 = vunpack.c.l.b16 %v1271
      %v1911 = vunpack.c.l.b16 %v1272
      %v1912 = vunpack.c.l.b16 %v1273
      %v1913 = vunpack.c.l.b16 %v1274
      %v1914 = vunpack.c.l.b16 %v1275
      %v1915 = vunpack.c.l.b16 %v1276
      %v1916 = vunpack.c.l.b16 %v1277
      %v1917 = vunpack.c.l.b16 %v1278
      %v1918 = vunpack.c.l.b16 %v1279
      %v1919 = vunpack.c.l.b16 %v1280
      %v1920 = vunpack.c.l.b16 %v1281
      %v1921 = vunpack.c.l.b16 %v1282
      %v1922 = vpack.c.b16 %v1779, %v1778
      %v1923 = vpack.c.b16 %v1781, %v1780
      %v1924 = vpack.c.b16 %v1783, %v1782
      %v1925 = vpack.c.b16 %v1785, %v1784
      %v1926 = vpack.c.b16 %v1787, %v1786
      %v1927 = vpack.c.b16 %v1789, %v1788
      %v1928 = vpack.c.b16 %v1791, %v1790
      %v1929 = vpack.c.b16 %v1793, %v1792
      %v1930 = vpack.c.b16 %v1795, %v1794
      %v1931 = vpack.c.b16 %v1797, %v1796
      %v1932 = vpack.c.b16 %v1799, %v1798
      %v1933 = vpack.c.b16 %v1801, %v1800
      %v1934 = vpack.c.b16 %v1803, %v1802
      %v1935 = vpack.c.b16 %v1805, %v1804
      %v1936 = vpack.c.b16 %v1807, %v1806
      %v1937 = vpack.c.b16 %v1809, %v1808
      %v1938 = vpack.c.b16 %v1811, %v1810
      %v1939 = vpack.c.b16 %v1813, %v1812
      %v1940 = vpack.c.b16 %v1815, %v1814
      %v1941 = vpack.c.b16 %v1817, %v1816
      %v1942 = vpack.c.b16 %v1819, %v1818
      %v1943 = vpack.c.b16 %v1821, %v1820
      %v1944 = vpack.c.b16 %v1823, %v1822
      %v1945 = vpack.c.b16 %v1825, %v1824
      %v1946 = vpack.c.b16 %v1827, %v1826
      %v1947 = vpack.c.b16 %v1829, %v1828
      %v1948 = vpack.c.b16 %v1831, %v1830
      %v1949 = vpack.c.b16 %v1833, %v1832
      %v1950 = vpack.c.b16 %v1835, %v1834
      %v1951 = vpack.c.b16 %v1837, %v1836
      %v1952 = vpack.c.b16 %v1839, %v1838
      %v1953 = vpack.c.b16 %v1841, %v1840
      %v1954 = vpack.c.b16 %v1843, %v1842
      %v1955 = vpack.c.b16 %v1845, %v1844
      %v1956 = vpack.c.b16 %v1847, %v1846
      %v1957 = vpack.c.b16 %v1849, %v1848
      %v1958 = vpack.c.b16 %v1851, %v1850
      %v1959 = vpack.c.b16 %v1853, %v1852
      %v1960 = vpack.c.b16 %v1855, %v1854
      %v1961 = vpack.c.b16 %v1857, %v1856
      %v1962 = vpack.c.b16 %v1859, %v1858
      %v1963 = vpack.c.b16 %v1861, %v1860
      %v1964 = vpack.c.b16 %v1863, %v1862
      %v1965 = vpack.c.b16 %v1865, %v1864
      %v1966 = vpack.c.b16 %v1867, %v1866
      %v1967 = vpack.c.b16 %v1869, %v1868
      %v1968 = vpack.c.b16 %v1871, %v1870
      %v1969 = vpack.c.b16 %v1873, %v1872
      %v1970 = vpack.c.b16 %v1875, %v1874
      %v1971 = vpack.c.b16 %v1877, %v1876
      %v1972 = vpack.c.b16 %v1879, %v1878
      %v1973 = vpack.c.b16 %v1881, %v1880
      %v1974 = vpack.c.b16 %v1883, %v1882
      %v1975 = vpack.c.b16 %v1885, %v1884
      %v1976 = vpack.c.b16 %v1887, %v1886
      %v1977 = vpack.c.b16 %v1889, %v1888
      %v1978 = vpack.c.b16 %v1891, %v1890
      %v1979 = vpack.c.b16 %v1893, %v1892
      %v1980 = vpack.c.b16 %v1895, %v1894
      %v1981 = vpack.c.b16 %v1897, %v1896
      %v1982 = vpack.c.b16 %v1899, %v1898
      %v1983 = vpack.c.b16 %v1901, %v1900
      %v1984 = vpack.c.b16 %v1903, %v1902
      %v1985 = vpack.c.b16 %v1905, %v1904
      %v1986 = vpack.c.b16 %v1907, %v1906
      %v1987 = vpack.c.b16 %v1909, %v1908
      %v1988 = vpack.c.b16 %v1911, %v1910
      %v1989 = vpack.c.b16 %v1913, %v1912
      %v1990 = vpack.c.b16 %v1915, %v1914
      %v1991 = vpack.c.b16 %v1917, %v1916
      %v1992 = vpack.c.b16 %v1919, %v1918
      %v1993 = vpack.c.b16 %v1921, %v1920
      %2066 = vmatpush.bf16.msra.mxu0 %v1929
      %2067 = vmatpush.bf16.msra.mxu0 %v1928
      %2068 = vmatpush.bf16.msra.mxu0 %v1927
      %2069 = vmatpush.bf16.msra.mxu0 %v1926
      %2070 = vmatpush.bf16.msra.mxu0 %v1925
      %2071 = vmatpush.bf16.msra.mxu0 %v1924
      %2072 = vmatpush.bf16.msra.mxu0 %v1923
      %2073 = vmatpush.bf16.msra.mxu0 %v1922
      %2074 = vmatmul.bf16.gmra.mxu0 %v1302
      %v2075 = vpop.f32.mrf.mxu0
      %v2076 = vadd.f32 0.0, %v2075
      %v2077 = vpop.f32.mrf.mxu0
      %v2078 = vadd.f32 0.0, %v2077
      %2079 = vmatmul.bf16.gmra.mxu0 %v1325
      %v2080 = vpop.f32.mrf.mxu0
      %v2081 = vadd.f32 0.0, %v2080
      %v2082 = vpop.f32.mrf.mxu0
      %v2083 = vadd.f32 0.0, %v2082
      %2084 = vmatmul.bf16.gmra.mxu0 %v1362
      %v2085 = vpop.f32.mrf.mxu0
      %v2086 = vadd.f32 0.0, %v2085
      %v2087 = vpop.f32.mrf.mxu0
      %v2088 = vadd.f32 0.0, %v2087
      %2089 = vmatmul.bf16.gmra.mxu0 %v1383
      %v2090 = vpop.f32.mrf.mxu0
      %v2091 = vadd.f32 0.0, %v2090
      %v2092 = vpop.f32.mrf.mxu0
      %v2093 = vadd.f32 0.0, %v2092
      %2094 = vmatmul.bf16.gmra.mxu0 %v1419
      %v2095 = vpop.f32.mrf.mxu0
      %v2096 = vadd.f32 0.0, %v2095
      %v2097 = vpop.f32.mrf.mxu0
      %v2098 = vadd.f32 0.0, %v2097
      %2099 = vmatmul.bf16.gmra.mxu0 %v1442
      %v2100 = vpop.f32.mrf.mxu0
      %v2101 = vadd.f32 0.0, %v2100
      %v2102 = vpop.f32.mrf.mxu0
      %v2103 = vadd.f32 0.0, %v2102
      %2104 = vmatmul.bf16.gmra.mxu0 %v1476
      %v2105 = vpop.f32.mrf.mxu0
      %v2106 = vadd.f32 0.0, %v2105
      %v2107 = vpop.f32.mrf.mxu0
      %v2108 = vadd.f32 0.0, %v2107
      %2109 = vmatmul.bf16.gmra.mxu0 %v1499
      %v2110 = vpop.f32.mrf.mxu0
      %v2111 = vadd.f32 0.0, %v2110
      %v2112 = vpop.f32.mrf.mxu0
      %v2113 = vadd.f32 0.0, %v2112
      %2114 = vmatmul.bf16.gmra.mxu0 %v1536
      %v2115 = vpop.f32.mrf.mxu0
      %v2116 = vadd.f32 0.0, %v2115
      %v2117 = vpop.f32.mrf.mxu0
      %v2118 = vadd.f32 0.0, %v2117
      %2119 = vdwg.mxu0
      %2120 = vmatpush.bf16.msra.mxu0 %v1937
      %2121 = vmatpush.bf16.msra.mxu0 %v1936
      %2122 = vmatpush.bf16.msra.mxu0 %v1935
      %2123 = vmatpush.bf16.msra.mxu0 %v1934
      %2124 = vmatpush.bf16.msra.mxu0 %v1933
      %2125 = vmatpush.bf16.msra.mxu0 %v1932
      %2126 = vmatpush.bf16.msra.mxu0 %v1931
      %2127 = vmatpush.bf16.msra.mxu0 %v1930
      %2128 = vmatmul.bf16.gmra.mxu0 %v1303
      %v2129 = vpop.f32.mrf.mxu0
      %v2130 = vadd.f32 %v2076, %v2129
      %v2131 = vpop.f32.mrf.mxu0
      %v2132 = vadd.f32 %v2078, %v2131
      %2133 = vmatmul.bf16.gmra.mxu0 %v1326
      %v2134 = vpop.f32.mrf.mxu0
      %v2135 = vadd.f32 %v2081, %v2134
      %v2136 = vpop.f32.mrf.mxu0
      %v2137 = vadd.f32 %v2083, %v2136
      %2138 = vmatmul.bf16.gmra.mxu0 %v1363
      %v2139 = vpop.f32.mrf.mxu0
      %v2140 = vadd.f32 %v2086, %v2139
      %v2141 = vpop.f32.mrf.mxu0
      %v2142 = vadd.f32 %v2088, %v2141
      %2143 = vmatmul.bf16.gmra.mxu0 %v1384
      %v2144 = vpop.f32.mrf.mxu0
      %v2145 = vadd.f32 %v2091, %v2144
      %v2146 = vpop.f32.mrf.mxu0
      %v2147 = vadd.f32 %v2093, %v2146
      %2148 = vmatmul.bf16.gmra.mxu0 %v1420
      %v2149 = vpop.f32.mrf.mxu0
      %v2150 = vadd.f32 %v2096, %v2149
      %v2151 = vpop.f32.mrf.mxu0
      %v2152 = vadd.f32 %v2098, %v2151
      %2153 = vmatmul.bf16.gmra.mxu0 %v1443
      %v2154 = vpop.f32.mrf.mxu0
      %v2155 = vadd.f32 %v2101, %v2154
      %v2156 = vpop.f32.mrf.mxu0
      %v2157 = vadd.f32 %v2103, %v2156
      %2158 = vmatmul.bf16.gmra.mxu0 %v1477
      %v2159 = vpop.f32.mrf.mxu0
      %v2160 = vadd.f32 %v2106, %v2159
      %v2161 = vpop.f32.mrf.mxu0
      %v2162 = vadd.f32 %v2108, %v2161
      %2163 = vmatmul.bf16.gmra.mxu0 %v1500
      %v2164 = vpop.f32.mrf.mxu0
      %v2165 = vadd.f32 %v2111, %v2164
      %v2166 = vpop.f32.mrf.mxu0
      %v2167 = vadd.f32 %v2113, %v2166
      %2168 = vmatmul.bf16.gmra.mxu0 %v1537
      %v2169 = vpop.f32.mrf.mxu0
      %v2170 = vadd.f32 %v2116, %v2169
      %v2171 = vpop.f32.mrf.mxu0
      %v2172 = vadd.f32 %v2118, %v2171
      %2173 = vdwg.mxu0
      %2174 = vmatpush.bf16.msra.mxu0 %v1945
      %2175 = vmatpush.bf16.msra.mxu0 %v1944
      %2176 = vmatpush.bf16.msra.mxu0 %v1943
      %2177 = vmatpush.bf16.msra.mxu0 %v1942
      %2178 = vmatpush.bf16.msra.mxu0 %v1941
      %2179 = vmatpush.bf16.msra.mxu0 %v1940
      %2180 = vmatpush.bf16.msra.mxu0 %v1939
      %2181 = vmatpush.bf16.msra.mxu0 %v1938
      %2182 = vmatmul.bf16.gmra.mxu0 %v1304
      %v2183 = vpop.f32.mrf.mxu0
      %v2184 = vadd.f32 %v2130, %v2183
      %v2185 = vpop.f32.mrf.mxu0
      %v2186 = vadd.f32 %v2132, %v2185
      %2187 = vmatmul.bf16.gmra.mxu0 %v1327
      %v2188 = vpop.f32.mrf.mxu0
      %v2189 = vadd.f32 %v2135, %v2188
      %v2190 = vpop.f32.mrf.mxu0
      %v2191 = vadd.f32 %v2137, %v2190
      %2192 = vmatmul.bf16.gmra.mxu0 %v1364
      %v2193 = vpop.f32.mrf.mxu0
      %v2194 = vadd.f32 %v2140, %v2193
      %v2195 = vpop.f32.mrf.mxu0
      %v2196 = vadd.f32 %v2142, %v2195
      %2197 = vmatmul.bf16.gmra.mxu0 %v1385
      %v2198 = vpop.f32.mrf.mxu0
      %v2199 = vadd.f32 %v2145, %v2198
      %v2200 = vpop.f32.mrf.mxu0
      %v2201 = vadd.f32 %v2147, %v2200
      %2202 = vmatmul.bf16.gmra.mxu0 %v1421
      %v2203 = vpop.f32.mrf.mxu0
      %v2204 = vadd.f32 %v2150, %v2203
      %v2205 = vpop.f32.mrf.mxu0
      %v2206 = vadd.f32 %v2152, %v2205
      %2207 = vmatmul.bf16.gmra.mxu0 %v1444
      %v2208 = vpop.f32.mrf.mxu0
      %v2209 = vadd.f32 %v2155, %v2208
      %v2210 = vpop.f32.mrf.mxu0
      %v2211 = vadd.f32 %v2157, %v2210
      %2212 = vmatmul.bf16.gmra.mxu0 %v1478
      %v2213 = vpop.f32.mrf.mxu0
      %v2214 = vadd.f32 %v2160, %v2213
      %v2215 = vpop.f32.mrf.mxu0
      %v2216 = vadd.f32 %v2162, %v2215
      %2217 = vmatmul.bf16.gmra.mxu0 %v1501
      %v2218 = vpop.f32.mrf.mxu0
      %v2219 = vadd.f32 %v2165, %v2218
      %v2220 = vpop.f32.mrf.mxu0
      %v2221 = vadd.f32 %v2167, %v2220
      %2222 = vmatmul.bf16.gmra.mxu0 %v1538
      %v2223 = vpop.f32.mrf.mxu0
      %v2224 = vadd.f32 %v2170, %v2223
      %v2225 = vpop.f32.mrf.mxu0
      %v2226 = vadd.f32 %v2172, %v2225
      %2227 = vdwg.mxu0
      %2228 = vmatpush.bf16.msra.mxu0 %v1953
      %2229 = vmatpush.bf16.msra.mxu0 %v1952
      %2230 = vmatpush.bf16.msra.mxu0 %v1951
      %2231 = vmatpush.bf16.msra.mxu0 %v1950
      %2232 = vmatpush.bf16.msra.mxu0 %v1949
      %2233 = vmatpush.bf16.msra.mxu0 %v1948
      %2234 = vmatpush.bf16.msra.mxu0 %v1947
      %2235 = vmatpush.bf16.msra.mxu0 %v1946
      %2236 = vmatmul.bf16.gmra.mxu0 %v1305
      %v2237 = vpop.f32.mrf.mxu0
      %v2238 = vadd.f32 %v2184, %v2237
      %v2239 = vpop.f32.mrf.mxu0
      %v2240 = vadd.f32 %v2186, %v2239
      %2241 = vmatmul.bf16.gmra.mxu0 %v1328
      %v2242 = vpop.f32.mrf.mxu0
      %v2243 = vadd.f32 %v2189, %v2242
      %v2244 = vpop.f32.mrf.mxu0
      %v2245 = vadd.f32 %v2191, %v2244
      %2246 = vmatmul.bf16.gmra.mxu0 %v1365
      %v2247 = vpop.f32.mrf.mxu0
      %v2248 = vadd.f32 %v2194, %v2247
      %v2249 = vpop.f32.mrf.mxu0
      %v2250 = vadd.f32 %v2196, %v2249
      %2251 = vmatmul.bf16.gmra.mxu0 %v1386
      %v2252 = vpop.f32.mrf.mxu0
      %v2253 = vadd.f32 %v2199, %v2252
      %v2254 = vpop.f32.mrf.mxu0
      %v2255 = vadd.f32 %v2201, %v2254
      %2256 = vmatmul.bf16.gmra.mxu0 %v1422
      %v2257 = vpop.f32.mrf.mxu0
      %v2258 = vadd.f32 %v2204, %v2257
      %v2259 = vpop.f32.mrf.mxu0
      %v2260 = vadd.f32 %v2206, %v2259
      %2261 = vmatmul.bf16.gmra.mxu0 %v1445
      %v2262 = vpop.f32.mrf.mxu0
      %v2263 = vadd.f32 %v2209, %v2262
      %v2264 = vpop.f32.mrf.mxu0
      %v2265 = vadd.f32 %v2211, %v2264
      %2266 = vmatmul.bf16.gmra.mxu0 %v1479
      %v2267 = vpop.f32.mrf.mxu0
      %v2268 = vadd.f32 %v2214, %v2267
      %v2269 = vpop.f32.mrf.mxu0
      %v2270 = vadd.f32 %v2216, %v2269
      %2271 = vmatmul.bf16.gmra.mxu0 %v1502
      %v2272 = vpop.f32.mrf.mxu0
      %v2273 = vadd.f32 %v2219, %v2272
      %v2274 = vpop.f32.mrf.mxu0
      %v2275 = vadd.f32 %v2221, %v2274
      %2276 = vmatmul.bf16.gmra.mxu0 %v1539
      %v2277 = vpop.f32.mrf.mxu0
      %v2278 = vadd.f32 %v2224, %v2277
      %v2279 = vpop.f32.mrf.mxu0
      %v2280 = vadd.f32 %v2226, %v2279
      %2281 = vdwg.mxu0
      %2282 = vmatpush.bf16.msra.mxu0 %v1961
      %2283 = vmatpush.bf16.msra.mxu0 %v1960
      %2284 = vmatpush.bf16.msra.mxu0 %v1959
      %2285 = vmatpush.bf16.msra.mxu0 %v1958
      %2286 = vmatpush.bf16.msra.mxu0 %v1957
      %2287 = vmatpush.bf16.msra.mxu0 %v1956
      %2288 = vmatpush.bf16.msra.mxu0 %v1955
      %2289 = vmatpush.bf16.msra.mxu0 %v1954
      %2290 = vmatmul.bf16.gmra.mxu0 %v1306
      %v2291 = vpop.f32.mrf.mxu0
      %v2292 = vadd.f32 %v2238, %v2291
      %v2293 = vpop.f32.mrf.mxu0
      %v2294 = vadd.f32 %v2240, %v2293
      %2295 = vmatmul.bf16.gmra.mxu0 %v1343
      %v2296 = vpop.f32.mrf.mxu0
      %v2297 = vadd.f32 %v2243, %v2296
      %v2298 = vpop.f32.mrf.mxu0
      %v2299 = vadd.f32 %v2245, %v2298
      %2300 = vmatmul.bf16.gmra.mxu0 %v1366
      %v2301 = vpop.f32.mrf.mxu0
      %v2302 = vadd.f32 %v2248, %v2301
      %v2303 = vpop.f32.mrf.mxu0
      %v2304 = vadd.f32 %v2250, %v2303
      %2305 = vmatmul.bf16.gmra.mxu0 %v1400
      %v2306 = vpop.f32.mrf.mxu0
      %v2307 = vadd.f32 %v2253, %v2306
      %v2308 = vpop.f32.mrf.mxu0
      %v2309 = vadd.f32 %v2255, %v2308
      %2310 = vmatmul.bf16.gmra.mxu0 %v1423
      %v2311 = vpop.f32.mrf.mxu0
      %v2312 = vadd.f32 %v2258, %v2311
      %v2313 = vpop.f32.mrf.mxu0
      %v2314 = vadd.f32 %v2260, %v2313
      %2315 = vmatmul.bf16.gmra.mxu0 %v1459
      %v2316 = vpop.f32.mrf.mxu0
      %v2317 = vadd.f32 %v2263, %v2316
      %v2318 = vpop.f32.mrf.mxu0
      %v2319 = vadd.f32 %v2265, %v2318
      %2320 = vmatmul.bf16.gmra.mxu0 %v1480
      %v2321 = vpop.f32.mrf.mxu0
      %v2322 = vadd.f32 %v2268, %v2321
      %v2323 = vpop.f32.mrf.mxu0
      %v2324 = vadd.f32 %v2270, %v2323
      %2325 = vmatmul.bf16.gmra.mxu0 %v1517
      %v2326 = vpop.f32.mrf.mxu0
      %v2327 = vadd.f32 %v2273, %v2326
      %v2328 = vpop.f32.mrf.mxu0
      %v2329 = vadd.f32 %v2275, %v2328
      %2330 = vmatmul.bf16.gmra.mxu0 %v1540
      %v2331 = vpop.f32.mrf.mxu0
      %v2332 = vadd.f32 %v2278, %v2331
      %v2333 = vpop.f32.mrf.mxu0
      %v2334 = vadd.f32 %v2280, %v2333
      %2335 = vdwg.mxu0
      %2336 = vmatpush.bf16.msra.mxu0 %v1969
      %2337 = vmatpush.bf16.msra.mxu0 %v1968
      %2338 = vmatpush.bf16.msra.mxu0 %v1967
      %2339 = vmatpush.bf16.msra.mxu0 %v1966
      %2340 = vmatpush.bf16.msra.mxu0 %v1965
      %2341 = vmatpush.bf16.msra.mxu0 %v1964
      %2342 = vmatpush.bf16.msra.mxu0 %v1963
      %2343 = vmatpush.bf16.msra.mxu0 %v1962
      %2344 = vmatmul.bf16.gmra.mxu0 %v1307
      %v2345 = vpop.f32.mrf.mxu0
      %v2346 = vadd.f32 %v2292, %v2345
      %v2347 = vpop.f32.mrf.mxu0
      %v2348 = vadd.f32 %v2294, %v2347
      %2349 = vmatmul.bf16.gmra.mxu0 %v1344
      %v2350 = vpop.f32.mrf.mxu0
      %v2351 = vadd.f32 %v2297, %v2350
      %v2352 = vpop.f32.mrf.mxu0
      %v2353 = vadd.f32 %v2299, %v2352
      %2354 = vmatmul.bf16.gmra.mxu0 %v1367
      %v2355 = vpop.f32.mrf.mxu0
      %v2356 = vadd.f32 %v2302, %v2355
      %v2357 = vpop.f32.mrf.mxu0
      %v2358 = vadd.f32 %v2304, %v2357
      %2359 = vmatmul.bf16.gmra.mxu0 %v1401
      %v2360 = vpop.f32.mrf.mxu0
      %v2361 = vadd.f32 %v2307, %v2360
      %v2362 = vpop.f32.mrf.mxu0
      %v2363 = vadd.f32 %v2309, %v2362
      %2364 = vmatmul.bf16.gmra.mxu0 %v1424
      %v2365 = vpop.f32.mrf.mxu0
      %v2366 = vadd.f32 %v2312, %v2365
      %v2367 = vpop.f32.mrf.mxu0
      %v2368 = vadd.f32 %v2314, %v2367
      %2369 = vmatmul.bf16.gmra.mxu0 %v1460
      %v2370 = vpop.f32.mrf.mxu0
      %v2371 = vadd.f32 %v2317, %v2370
      %v2372 = vpop.f32.mrf.mxu0
      %v2373 = vadd.f32 %v2319, %v2372
      %2374 = vmatmul.bf16.gmra.mxu0 %v1481
      %v2375 = vpop.f32.mrf.mxu0
      %v2376 = vadd.f32 %v2322, %v2375
      %v2377 = vpop.f32.mrf.mxu0
      %v2378 = vadd.f32 %v2324, %v2377
      %2379 = vmatmul.bf16.gmra.mxu0 %v1518
      %v2380 = vpop.f32.mrf.mxu0
      %v2381 = vadd.f32 %v2327, %v2380
      %v2382 = vpop.f32.mrf.mxu0
      %v2383 = vadd.f32 %v2329, %v2382
      %2384 = vmatmul.bf16.gmra.mxu0 %v1541
      %v2385 = vpop.f32.mrf.mxu0
      %v2386 = vadd.f32 %v2332, %v2385
      %v2387 = vpop.f32.mrf.mxu0
      %v2388 = vadd.f32 %v2334, %v2387
      %2389 = vdwg.mxu0
      %2390 = vmatpush.bf16.msra.mxu0 %v1977
      %2391 = vmatpush.bf16.msra.mxu0 %v1976
      %2392 = vmatpush.bf16.msra.mxu0 %v1975
      %2393 = vmatpush.bf16.msra.mxu0 %v1974
      %2394 = vmatpush.bf16.msra.mxu0 %v1973
      %2395 = vmatpush.bf16.msra.mxu0 %v1972
      %2396 = vmatpush.bf16.msra.mxu0 %v1971
      %2397 = vmatpush.bf16.msra.mxu0 %v1970
      %2398 = vmatmul.bf16.gmra.mxu0 %v1308
      %v2399 = vpop.f32.mrf.mxu0
      %v2400 = vadd.f32 %v2346, %v2399
      %v2401 = vpop.f32.mrf.mxu0
      %v2402 = vadd.f32 %v2348, %v2401
      %2403 = vmatmul.bf16.gmra.mxu0 %v1345
      %v2404 = vpop.f32.mrf.mxu0
      %v2405 = vadd.f32 %v2351, %v2404
      %v2406 = vpop.f32.mrf.mxu0
      %v2407 = vadd.f32 %v2353, %v2406
      %2408 = vmatmul.bf16.gmra.mxu0 %v1368
      %v2409 = vpop.f32.mrf.mxu0
      %v2410 = vadd.f32 %v2356, %v2409
      %v2411 = vpop.f32.mrf.mxu0
      %v2412 = vadd.f32 %v2358, %v2411
      %2413 = vmatmul.bf16.gmra.mxu0 %v1402
      %v2414 = vpop.f32.mrf.mxu0
      %v2415 = vadd.f32 %v2361, %v2414
      %v2416 = vpop.f32.mrf.mxu0
      %v2417 = vadd.f32 %v2363, %v2416
      %2418 = vmatmul.bf16.gmra.mxu0 %v1425
      %v2419 = vpop.f32.mrf.mxu0
      %v2420 = vadd.f32 %v2366, %v2419
      %v2421 = vpop.f32.mrf.mxu0
      %v2422 = vadd.f32 %v2368, %v2421
      %2423 = vmatmul.bf16.gmra.mxu0 %v1461
      %v2424 = vpop.f32.mrf.mxu0
      %v2425 = vadd.f32 %v2371, %v2424
      %v2426 = vpop.f32.mrf.mxu0
      %v2427 = vadd.f32 %v2373, %v2426
      %2428 = vmatmul.bf16.gmra.mxu0 %v1482
      %v2429 = vpop.f32.mrf.mxu0
      %v2430 = vadd.f32 %v2376, %v2429
      %v2431 = vpop.f32.mrf.mxu0
      %v2432 = vadd.f32 %v2378, %v2431
      %2433 = vmatmul.bf16.gmra.mxu0 %v1519
      %v2434 = vpop.f32.mrf.mxu0
      %v2435 = vadd.f32 %v2381, %v2434
      %v2436 = vpop.f32.mrf.mxu0
      %v2437 = vadd.f32 %v2383, %v2436
      %2438 = vmatmul.bf16.gmra.mxu0 %v1542
      %v2439 = vpop.f32.mrf.mxu0
      %v2440 = vadd.f32 %v2386, %v2439
      %v2441 = vpop.f32.mrf.mxu0
      %v2442 = vadd.f32 %v2388, %v2441
      %2443 = vdwg.mxu0
      %2444 = vmatpush.bf16.msra.mxu0 %v1985
      %2445 = vmatpush.bf16.msra.mxu0 %v1984
      %2446 = vmatpush.bf16.msra.mxu0 %v1983
      %2447 = vmatpush.bf16.msra.mxu0 %v1982
      %2448 = vmatpush.bf16.msra.mxu0 %v1981
      %2449 = vmatpush.bf16.msra.mxu0 %v1980
      %2450 = vmatpush.bf16.msra.mxu0 %v1979
      %2451 = vmatpush.bf16.msra.mxu0 %v1978
      %2452 = vmatmul.bf16.gmra.mxu0 %v1309
      %v2453 = vpop.f32.mrf.mxu0
      %v2454 = vadd.f32 %v2400, %v2453
      %v2455 = vpop.f32.mrf.mxu0
      %v2456 = vadd.f32 %v2402, %v2455
      %2457 = vmatmul.bf16.gmra.mxu0 %v1346
      %v2458 = vpop.f32.mrf.mxu0
      %v2459 = vadd.f32 %v2405, %v2458
      %v2460 = vpop.f32.mrf.mxu0
      %v2461 = vadd.f32 %v2407, %v2460
      %2462 = vmatmul.bf16.gmra.mxu0 %v1369
      %v2463 = vpop.f32.mrf.mxu0
      %v2464 = vadd.f32 %v2410, %v2463
      %v2465 = vpop.f32.mrf.mxu0
      %v2466 = vadd.f32 %v2412, %v2465
      %2467 = vmatmul.bf16.gmra.mxu0 %v1403
      %v2468 = vpop.f32.mrf.mxu0
      %v2469 = vadd.f32 %v2415, %v2468
      %v2470 = vpop.f32.mrf.mxu0
      %v2471 = vadd.f32 %v2417, %v2470
      %2472 = vmatmul.bf16.gmra.mxu0 %v1426
      %v2473 = vpop.f32.mrf.mxu0
      %v2474 = vadd.f32 %v2420, %v2473
      %v2475 = vpop.f32.mrf.mxu0
      %v2476 = vadd.f32 %v2422, %v2475
      %2477 = vmatmul.bf16.gmra.mxu0 %v1462
      %v2478 = vpop.f32.mrf.mxu0
      %v2479 = vadd.f32 %v2425, %v2478
      %v2480 = vpop.f32.mrf.mxu0
      %v2481 = vadd.f32 %v2427, %v2480
      %2482 = vmatmul.bf16.gmra.mxu0 %v1483
      %v2483 = vpop.f32.mrf.mxu0
      %v2484 = vadd.f32 %v2430, %v2483
      %v2485 = vpop.f32.mrf.mxu0
      %v2486 = vadd.f32 %v2432, %v2485
      %2487 = vmatmul.bf16.gmra.mxu0 %v1520
      %v2488 = vpop.f32.mrf.mxu0
      %v2489 = vadd.f32 %v2435, %v2488
      %v2490 = vpop.f32.mrf.mxu0
      %v2491 = vadd.f32 %v2437, %v2490
      %2492 = vmatmul.bf16.gmra.mxu0 %v1543
      %v2493 = vpop.f32.mrf.mxu0
      %v2494 = vadd.f32 %v2440, %v2493
      %v2495 = vpop.f32.mrf.mxu0
      %v2496 = vadd.f32 %v2442, %v2495
      %2497 = vdwg.mxu0
      %2498 = vmatpush.bf16.msra.mxu0 %v1993
      %2499 = vmatpush.bf16.msra.mxu0 %v1992
      %2500 = vmatpush.bf16.msra.mxu0 %v1991
      %2501 = vmatpush.bf16.msra.mxu0 %v1990
      %2502 = vmatpush.bf16.msra.mxu0 %v1989
      %2503 = vmatpush.bf16.msra.mxu0 %v1988
      %2504 = vmatpush.bf16.msra.mxu0 %v1987
      %2505 = vmatpush.bf16.msra.mxu0 %v1986
      %2506 = vmatmul.bf16.gmra.mxu0 %v1324
      %v2507 = vpop.f32.mrf.mxu0
      %v2508 = vadd.f32 %v2454, %v2507
      %v2509 = vpop.f32.mrf.mxu0
      %v2510 = vadd.f32 %v2456, %v2509
      %2511 = vmatmul.bf16.gmra.mxu0 %v1347
      %v2512 = vpop.f32.mrf.mxu0
      %v2513 = vadd.f32 %v2459, %v2512
      %v2514 = vpop.f32.mrf.mxu0
      %v2515 = vadd.f32 %v2461, %v2514
      %2516 = vmatmul.bf16.gmra.mxu0 %v1382
      %v2517 = vpop.f32.mrf.mxu0
      %v2518 = vadd.f32 %v2464, %v2517
      %v2519 = vpop.f32.mrf.mxu0
      %v2520 = vadd.f32 %v2466, %v2519
      %2521 = vmatmul.bf16.gmra.mxu0 %v1404
      %v2522 = vpop.f32.mrf.mxu0
      %v2523 = vadd.f32 %v2469, %v2522
      %v2524 = vpop.f32.mrf.mxu0
      %v2525 = vadd.f32 %v2471, %v2524
      %2526 = vmatmul.bf16.gmra.mxu0 %v1441
      %v2527 = vpop.f32.mrf.mxu0
      %v2528 = vadd.f32 %v2474, %v2527
      %v2529 = vpop.f32.mrf.mxu0
      %v2530 = vadd.f32 %v2476, %v2529
      %2531 = vmatmul.bf16.gmra.mxu0 %v1463
      %v2532 = vpop.f32.mrf.mxu0
      %v2533 = vadd.f32 %v2479, %v2532
      %v2534 = vpop.f32.mrf.mxu0
      %v2535 = vadd.f32 %v2481, %v2534
      %2536 = vmatmul.bf16.gmra.mxu0 %v1498
      %v2537 = vpop.f32.mrf.mxu0
      %v2538 = vadd.f32 %v2484, %v2537
      %v2539 = vpop.f32.mrf.mxu0
      %v2540 = vadd.f32 %v2486, %v2539
      %2541 = vmatmul.bf16.gmra.mxu0 %v1521
      %v2542 = vpop.f32.mrf.mxu0
      %v2543 = vadd.f32 %v2489, %v2542
      %v2544 = vpop.f32.mrf.mxu0
      %v2545 = vadd.f32 %v2491, %v2544
      %2546 = vmatmul.bf16.gmra.mxu0 %v1552
      %v2547 = vpop.f32.mrf.mxu0
      %v2548 = vadd.f32 %v2494, %v2547
      %v2549 = vpop.f32.mrf.mxu0
      %v2550 = vadd.f32 %v2496, %v2549
      %2551 = vdwg.mxu0
      %v2552 = vpack.c.bf16 %v2508, %v2508
      %v2553 = vpack.c.bf16 %v2510, %v2510
      %v2554 = vpack.c.bf16 %v2513, %v2513
      %v2555 = vpack.c.bf16 %v2515, %v2515
      %v2556 = vpack.c.bf16 %v2518, %v2518
      %v2557 = vpack.c.bf16 %v2520, %v2520
      %v2558 = vpack.c.bf16 %v2523, %v2523
      %v2559 = vpack.c.bf16 %v2525, %v2525
      %v2560 = vpack.c.bf16 %v2528, %v2528
      %v2561 = vpack.c.bf16 %v2530, %v2530
      %v2562 = vpack.c.bf16 %v2533, %v2533
      %v2563 = vpack.c.bf16 %v2535, %v2535
      %v2564 = vpack.c.bf16 %v2538, %v2538
      %v2565 = vpack.c.bf16 %v2540, %v2540
      %v2566 = vpack.c.bf16 %v2543, %v2543
      %v2567 = vpack.c.bf16 %v2545, %v2545
      %v2568 = vpack.c.bf16 %v2548, %v2548
      %v2569 = vpack.c.bf16 %v2550, %v2550
      %2570 = vst [vmem:[%s285] sm:$0xf] %v2552
      %2571 = vst [vmem:[%s285 + $0x4] sm:$0xf] %v2553
      %2572 = vst [vmem:[%s285 + $0x8] sm:$0xf] %v2554
      %2573 = vst [vmem:[%s285 + $0xc] sm:$0xf] %v2555
      %2574 = vst [vmem:[%s285 + $0x10] sm:$0xf] %v2556
      %2575 = vst [vmem:[%s285 + $0x14] sm:$0xf] %v2557
      %2576 = vst [vmem:[%s285 + $0x18] sm:$0xf] %v2558
      %2577 = vst [vmem:[%s285 + $0x1c] sm:$0xf] %v2559
      %2578 = vst [vmem:[%s285 + $0x20] sm:$0xf] %v2560
      %2579 = vst [vmem:[%s285 + $0x24] sm:$0xf] %v2561
      %2580 = vst [vmem:[%s285 + $0x28] sm:$0xf] %v2562
      %2581 = vst [vmem:[%s285 + $0x2c] sm:$0xf] %v2563
      %2582 = vst [vmem:[%s285 + $0x30] sm:$0xf] %v2564
      %2583 = vst [vmem:[%s285 + $0x34] sm:$0xf] %v2565
      %2584 = vst [vmem:[%s285 + $0x38] sm:$0xf] %v2566
      %2585 = vst [vmem:[%s285 + $0x3c] sm:$0xf] %v2567
      %2586 = vst [vmem:[%s285 + $0x40] sm:$0xf] %v2568
      %2587 = vst [vmem:[%s285 + $0x44] sm:$0xf] %v2569
      %p2588 = scmp.eq.s32.totalorder %s23, 0
      // Predicated region
      $region37: #{double_conv_forward.4} parent=35 // pred_check
        %p2589 = pneg %p2588
      $region38: #{double_conv_forward.4} parent=35 // pred_check_branch
        %2591 = sbr.rel (%p2589) target = $region40
      $region39: #{double_conv_forward.4} parent=35 // pred_region
        %2592 = vst [vmem:[%s289] sm:$0x1] 0.0
        %2593 = vst [vmem:[%s292] sm:$0x1] 0.0
      $region40: #{double_conv_forward.4} parent=35 // pred_fallthru
        _
      %v2594 = vld [vmem:[%s289] sm:$0x1]
      %v2595 = vadd.f32 %v2508, %v2510
      %v2596 = vadd.f32 %v2595, %v2513
      %v2597 = vadd.f32 %v2596, %v2515
      %v2598 = vadd.f32 %v2597, %v2518
      %v2599 = vadd.f32 %v2598, %v2520
      %v2600 = vadd.f32 %v2599, %v2523
      %v2601 = vadd.f32 %v2600, %v2525
      %v2602 = vadd.f32 %v2601, %v2528
      %v2603 = vadd.f32 %v2602, %v2530
      %v2604 = vadd.f32 %v2603, %v2533
      %v2605 = vadd.f32 %v2604, %v2535
      %v2606 = vadd.f32 %v2605, %v2538
      %v2607 = vadd.f32 %v2606, %v2540
      %v2608 = vadd.f32 %v2607, %v2543
      %v2609 = vadd.f32 %v2608, %v2545
      %v2610 = vadd.f32 %v2609, %v2548
      %v2611 = vadd.f32 %v2610, %v2550
      %v2612 = vrot.slane %v2611, 4
      %v2613 = vadd.f32 %v2611, %v2612
      %v2614 = vrot.slane %v2613, 2
      %v2615 = vadd.f32 %v2613, %v2614
      %v2616 = vrot.slane %v2615, 1
      %v2617 = vadd.f32 %v2615, %v2616
      %v2618 = vadd.f32 %v2594, %v2617
      %2619 = vst [vmem:[%s289] sm:$0x1] %v2618
      %v2620 = vld [vmem:[%s292] sm:$0x1]
      %v2621 = vmul.f32 %v2508, %v2508
      %v2622 = vmul.f32 %v2510, %v2510
      %v2623 = vmul.f32 %v2513, %v2513
      %v2624 = vmul.f32 %v2515, %v2515
      %v2625 = vmul.f32 %v2518, %v2518
      %v2626 = vmul.f32 %v2520, %v2520
      %v2627 = vmul.f32 %v2523, %v2523
      %v2628 = vmul.f32 %v2525, %v2525
      %v2629 = vmul.f32 %v2528, %v2528
      %v2630 = vmul.f32 %v2530, %v2530
      %v2631 = vmul.f32 %v2533, %v2533
      %v2632 = vmul.f32 %v2535, %v2535
      %v2633 = vmul.f32 %v2538, %v2538
      %v2634 = vmul.f32 %v2540, %v2540
      %v2635 = vmul.f32 %v2543, %v2543
      %v2636 = vmul.f32 %v2545, %v2545
      %v2637 = vmul.f32 %v2548, %v2548
      %v2638 = vmul.f32 %v2550, %v2550
      %v2639 = vadd.f32 %v2621, %v2622
      %v2640 = vadd.f32 %v2639, %v2623
      %v2641 = vadd.f32 %v2640, %v2624
      %v2642 = vadd.f32 %v2641, %v2625
      %v2643 = vadd.f32 %v2642, %v2626
      %v2644 = vadd.f32 %v2643, %v2627
      %v2645 = vadd.f32 %v2644, %v2628
      %v2646 = vadd.f32 %v2645, %v2629
      %v2647 = vadd.f32 %v2646, %v2630
      %v2648 = vadd.f32 %v2647, %v2631
      %v2649 = vadd.f32 %v2648, %v2632
      %v2650 = vadd.f32 %v2649, %v2633
      %v2651 = vadd.f32 %v2650, %v2634
      %v2652 = vadd.f32 %v2651, %v2635
      %v2653 = vadd.f32 %v2652, %v2636
      %v2654 = vadd.f32 %v2653, %v2637
      %v2655 = vadd.f32 %v2654, %v2638
      %v2656 = vrot.slane %v2655, 4
      %v2657 = vadd.f32 %v2655, %v2656
      %v2658 = vrot.slane %v2657, 2
      %v2659 = vadd.f32 %v2657, %v2658
      %v2660 = vrot.slane %v2659, 1
      %v2661 = vadd.f32 %v2659, %v2660
      %v2662 = vadd.f32 %v2620, %v2661
      %2663 = vst [vmem:[%s292] sm:$0x1] %v2662
      %s2664 = sadd.s32 %s22, %s23
      %p2665 = scmp.lt.s32.totalorder %s2664, 1
      %s2666 = scalar_select %p2665, %s2664, 1
      %s2667 = smul.addr %s2666, 18
      %s2668 = smul.addr %s2667, 4
      %s2669 = scalar_lea.vmem %s4, %s2668
      %p2670 = scmp.lt.s32.totalorder %s22, 1
      %s2671 = scalar_select %p2670, %s22, 1
      %s2672 = scalar_lea.vmem %s5, %s2671
      %p2673 = scmp.lt.s32.totalorder %s22, 1
      %s2674 = scalar_select %p2673, %s22, 1
      %s2675 = scalar_lea.vmem %s6, %s2674
      // Predicated region
      $region41: #{double_conv_forward.4} parent=35 // pred_check
        %p2676 = pneg %p141
      $region42: #{double_conv_forward.4} parent=35 // pred_check_branch
        %2678 = sbr.rel (%p2676) target = $region44
      $region43: #{double_conv_forward.4} parent=35 // pred_region
        %s2679 = sadd.s32 %s22, %s23
      $region44: #{double_conv_forward.4} parent=35 // pred_fallthru
        _
      // Predicated region
      $region45: #{double_conv_forward.4} parent=35 // pred_check
        %p2680 = pneg %p167
      $region46: #{double_conv_forward.4} parent=35 // pred_check_branch
        %2682 = sbr.rel (%p2680) target = $region48
      $region47: #{double_conv_forward.4} parent=35 // pred_region
        _
      $region48: #{double_conv_forward.4} parent=35 // pred_fallthru
        _
      // Predicated region
      $region49: #{double_conv_forward.4} parent=35 // pred_check
        %p2683 = pneg %p193
      $region50: #{double_conv_forward.4} parent=35 // pred_check_branch
        %2685 = sbr.rel (%p2683) target = $region52
      $region51: #{double_conv_forward.4} parent=35 // pred_region
        _
      $region52: #{double_conv_forward.4} parent=35 // pred_fallthru
        _
    $region36: #{double_conv_forward.4} parent=5 // pred_fallthru
      _
    %p2686 = scmp.le.s32.totalorder 2, %s13
    // Predicated region
    $region53: #{double_conv_forward.4} parent=5 // pred_check
      %p2687 = pneg %p2686
    $region54: #{double_conv_forward.4} parent=5 // pred_check_branch
      %2689 = sbr.rel (%p2687) target = $region56
    $region55: #{double_conv_forward.4} parent=5 // pred_region
      %s2690 = ssub.s32 %s13, 2
      // Predicated region
      $region57: #{double_conv_forward.4} parent=55 // pred_check
        %p2691 = pneg %p147
      $region58: #{double_conv_forward.4} parent=55 // pred_check_branch
        %2693 = sbr.rel (%p2691) target = $region60
      $region59: #{double_conv_forward.4} parent=55 // pred_region
        %s2694 = sadd.s32 %s24, %s25
        %p2695 = scmp.lt.s32.totalorder %s2694, 1
        %s2696 = scalar_select %p2695, %s2694, 1
        %s2697 = smul.addr %s2696, 18
        %s2698 = smul.addr %s2697, 4
        %s2699 = scalar_lea.vmem %s4, %s2698
      $region60: #{double_conv_forward.4} parent=55 // pred_fallthru
        _
      // Predicated region
      $region61: #{double_conv_forward.4} parent=55 // pred_check
        %p2700 = pneg %p173
      $region62: #{double_conv_forward.4} parent=55 // pred_check_branch
        %2702 = sbr.rel (%p2700) target = $region64
      $region63: #{double_conv_forward.4} parent=55 // pred_region
        %p2703 = scmp.lt.s32.totalorder %s24, 1
        %s2704 = scalar_select %p2703, %s24, 1
        %s2705 = scalar_lea.vmem %s5, %s2704
      $region64: #{double_conv_forward.4} parent=55 // pred_fallthru
        _
      // Predicated region
      $region65: #{double_conv_forward.4} parent=55 // pred_check
        %p2706 = pneg %p199
      $region66: #{double_conv_forward.4} parent=55 // pred_check_branch
        %2708 = sbr.rel (%p2706) target = $region68
      $region67: #{double_conv_forward.4} parent=55 // pred_region
        %p2709 = scmp.lt.s32.totalorder %s24, 1
        %s2710 = scalar_select %p2709, %s24, 1
        %s2711 = scalar_lea.vmem %s6, %s2710
      $region68: #{double_conv_forward.4} parent=55 // pred_fallthru
        _
    $region56: #{double_conv_forward.4} parent=5 // pred_fallthru
      _
  $region6: #{double_conv_forward.4} parent=0 // loop_footer
    %s17 = sadd.s32 1, %s13
  $region7: #{double_conv_forward.4} parent=0 // loop_footer_branch
    %12 = sbr.rel target = $region3
  $region8: #{double_conv_forward.4} parent=0 // loop_exit
    _

</llo_original>
